<compile_context>
chip_gen: v7x
topology: tpu7x:2x2x1
jax: 0.10.0
libtpu: 0.0.40
codegen_flags: <defaults>
</compile_context>

<pallas_src>
import jax
import jax.numpy as jnp
from jax.experimental import pallas as pl
from jax.experimental.pallas import tpu as pltpu


CHANS = (80, 112, 192, 192, 192, 192, 320)   # projector out-channels; sum == 1280
G_DIM = 1280
N_CLASSES = 5


# ----------------------------------------------------------------------------
# Fused kernel: per-sample 7x(folded projector + linear attention) + FC + swish
# ----------------------------------------------------------------------------
def _make_fused_head_kernel(chans):
    n_b = len(chans)
    offs = []
    o = 0
    for c in chans:
        offs.append(o)
        o += c

    def kernel(*refs):
        # refs: g_pool, l_1..l_7, V, wa_all, fc_w, fc_b, out   (one sample per step)
        gpool_ref = refs[0]
        l_refs = refs[1:1 + n_b]
        v_ref = refs[1 + n_b]
        wa_ref = refs[2 + n_b]
        fcw_ref = refs[3 + n_b]
        fcb_ref = refs[4 + n_b]
        out_ref = refs[5 + n_b]

        gp = gpool_ref[0]                                              # (1, 1280) f32

        # Folded projector: bias[0, k] = g_pool @ (Wp_k @ wa_k).
        # (Spatially constant per sample, so it cancels in the softmax; kept for
        #  exact fidelity to the module's logits — it is a tiny (1,1280)@(1280,7).)
        bias = jnp.dot(gp, v_ref[...], preferred_element_type=jnp.float32)   # (1, 7)

        z = fcb_ref[...]                                               # (1, 5)
        for k in range(n_b):
            ck = chans[k]
            off = offs[k]
            l = l_refs[k][0].astype(jnp.float32)                       # (HW_k, C_k)
            wa = wa_ref[:, off:off + ck]                               # (1, C_k)

            # attention logits: 1x1 conv C_k -> 1 (weighted lane reduce) + bias
            logits = jnp.sum(l * wa, axis=1, keepdims=True) + bias[:, k:k + 1]  # (HW_k, 1)

            # softmax over flattened spatial positions, normalized after pooling
            m = jnp.max(logits, axis=0, keepdims=True)                 # (1, 1)
            e = jnp.exp(logits - m)                                    # (HW_k, 1)
            denom = jnp.sum(e, axis=0, keepdims=True)                  # (1, 1)
            g_un = jnp.sum(e * l, axis=0, keepdims=True)               # (1, C_k)
            g_k = g_un * pl.reciprocal(denom, approx=True)             # (1, C_k)

            # branch-k slice of the final Linear(1280 -> 5): equivalent to
            # concat(g_1..g_7) @ W_fc, without any lane-axis concatenation.
            z = z + jnp.dot(g_k, fcw_ref[off:off + ck, :],
                            preferred_element_type=jnp.float32)        # (1, 5)

        s = z * jax.nn.sigmoid(z)                                      # swish
        out_ref[...] = s[None]                                         # (1, 1, 5)

    return kernel


# ----------------------------------------------------------------------------
# Pallas wrapper
# ----------------------------------------------------------------------------
def efficientnet_b0_att_head(g_pool, ls_flat, packed):
    """g_pool: (N, 1, 1280) f32; ls_flat: list of (N, H_k*W_k, C_k) bf16."""
    N = g_pool.shape[0]
    chans = tuple(int(l.shape[-1]) for l in ls_flat)
    n_classes = packed["fc_w"].shape[1]

    inputs = [g_pool, *ls_flat,
              packed["v"], packed["wa_all"], packed["fc_w"], packed["fc_b"]]

    def batch_spec(shape):
        trailing = tuple(shape[1:])
        return pl.BlockSpec((1,) + trailing,
                            lambda n: (n,) + (0,) * len(trailing))

    def const_spec(shape):
        nd = len(shape)
        return pl.BlockSpec(tuple(shape), lambda n: (0,) * nd)

    in_specs = ([batch_spec(g_pool.shape)]
                + [batch_spec(l.shape) for l in ls_flat]
                + [const_spec(packed["v"].shape),
                   const_spec(packed["wa_all"].shape),
                   const_spec(packed["fc_w"].shape),
                   const_spec(packed["fc_b"].shape)])

    out = pl.pallas_call(
        _make_fused_head_kernel(chans),
        out_shape=jax.ShapeDtypeStruct((N, 1, n_classes), jnp.float32),
        grid=(N,),
        in_specs=in_specs,
        out_specs=pl.BlockSpec((1, 1, n_classes), lambda n: (n, 0, 0)),
        compiler_params=pltpu.CompilerParams(
            dimension_semantics=("parallel",),   # per-sample work is independent
        ),
    )(*inputs)
    return out


@jax.jit
def efficientnet_b0_att_forward(head_nchw, ls_nchw, packed):
    """NCHW adapter around the fused Pallas head (single jit => single dispatch)."""
    N = head_nchw.shape[0]
    # AdaptiveAvgPool2d(1) of the conv_head/bn1 output: only the spatial mean is
    # needed downstream, so compute it here from NCHW (no transpose, no big DMA).
    g_pool = jnp.mean(head_nchw, axis=(2, 3)).reshape(N, 1, -1)        # (N, 1, 1280)
    # attention-branch activations: channels-last, bf16 storage (halved HBM traffic)
    ls_flat = [jnp.transpose(l, (0, 2, 3, 1)).reshape(N, -1, l.shape[1])
               .astype(jnp.bfloat16) for l in ls_nchw]
    out = efficientnet_b0_att_head(g_pool, ls_flat, packed)            # (N, 1, 5)
    return out.reshape(N, -1)


# ----------------------------------------------------------------------------
# Deterministic parameter init (shapes from the module __init__) + packing
# ----------------------------------------------------------------------------
def init_params(key, chans, g_dim=G_DIM, n_classes=N_CLASSES):
    keys = jax.random.split(key, 2 * len(chans) + 2)
    wp = [jax.random.normal(keys[i], (g_dim, c), jnp.float32) / jnp.sqrt(float(g_dim))
          for i, c in enumerate(chans)]
    wa = [jax.random.normal(keys[len(chans) + i], (c,), jnp.float32) / jnp.sqrt(float(c))
          for i, c in enumerate(chans)]
    fc_w = jax.random.normal(keys[-2], (g_dim, n_classes), jnp.float32) / jnp.sqrt(float(g_dim))
    fc_b = 0.01 * jax.random.normal(keys[-1], (n_classes,), jnp.float32)
    return {"wp": wp, "wa": wa, "fc_w": fc_w, "fc_b": fc_b}


def pack_params(params):
    """Pack per-branch weights into the fused-kernel layout.

    Exact algebraic fold of each ProjectorBlock into its attention 1x1 conv
    (both convs are bias-free):  wa_k.(l + g@Wp_k) = wa_k.l + g@(Wp_k@wa_k).
    """
    v_cols = [jnp.dot(wp, wa, precision=jax.lax.Precision.HIGHEST)     # (1280,)
              for wp, wa in zip(params["wp"], params["wa"])]
    return {
        "v": jnp.stack(v_cols, axis=1),                                # (1280, 7)
        "wa_all": jnp.concatenate(params["wa"], axis=0).reshape(1, -1),  # (1, 1280)
        "fc_w": params["fc_w"],                                        # (1280, 5)
        "fc_b": params["fc_b"].reshape(1, -1),                         # (1, 5)
    }


# ----------------------------------------------------------------------------
# Pure-JAX reference of the same head (for correctness check)
# ----------------------------------------------------------------------------
def reference_head(head_nchw, ls_nchw, params):
    N = head_nchw.shape[0]
    g_pool = jnp.mean(head_nchw, axis=(2, 3))                          # (N, 1280)
    gs = []
    for l_nchw, wp, wa in zip(ls_nchw, params["wp"], params["wa"]):
        _, C, H, W = l_nchw.shape
        gproj = g_pool @ wp                                            # bilinear up of 1x1 == broadcast
        lflat = l_nchw.reshape(N, C, H * W)
        c = jnp.einsum("c,nch->nh", wa, lflat + gproj[:, :, None])
        a = jax.nn.softmax(c, axis=1)
        gs.append(jnp.sum(a[:, None, :] * lflat, axis=2))
    g_cat = jnp.concatenate(gs, axis=1)
    z = g_cat @ params["fc_w"] + params["fc_b"]
    return z * jax.nn.sigmoid(z)


# ----------------------------------------------------------------------------
if __name__ == "__main__":
    key = jax.random.PRNGKey(0)
    kdata, kparam = jax.random.split(key)

    N = 2
    S1, S2 = 8, 4   # scaled-down stride-16 / stride-32 spatial sizes
    chans = CHANS
    spatials = (S1, S1, S2, S2, S2, S2, S2)

    # TODO(synk): these stand in for the pretrained EfficientNet-B0 backbone's
    # intermediate block outputs (blocks 7,10,11,12,13,14,15) and conv_head/bn1.
    dkeys = jax.random.split(kdata, len(chans) + 1)
    ls = [jax.random.normal(dkeys[i], (N, c, s, s), jnp.float32)
          for i, (c, s) in enumerate(zip(chans, spatials))]
    head = jax.random.normal(dkeys[-1], (N, G_DIM, S2, S2), jnp.float32)

    params = init_params(kparam, chans)
    packed = pack_params(params)

    out = efficientnet_b0_att_forward(head, ls, packed)
    out = jax.block_until_ready(out)

    # Reference fed the same bf16-rounded activations the kernel path stores, so
    # the check isolates the kernel math from the deliberate bf16 quantization.
    ls_q = [l.astype(jnp.bfloat16).astype(jnp.float32) for l in ls]
    ref = reference_head(head, ls_q, params)

    assert out.shape == (N, N_CLASSES), out.shape
    assert jnp.allclose(out, ref, rtol=2e-2, atol=2e-2), (out, ref)

    print("KERNEL_OK")
</pallas_src>

<mosaic_0001>
module attributes {stable_mosaic.version = 11 : i64} {
  func.func @kernel(%arg0: i32, %arg1: memref<1x1x1280xf32, #tpu.memory_space<vmem>>, %arg2: memref<1x64x80xbf16, #tpu.memory_space<vmem>>, %arg3: memref<1x64x112xbf16, #tpu.memory_space<vmem>>, %arg4: memref<1x16x192xbf16, #tpu.memory_space<vmem>>, %arg5: memref<1x16x192xbf16, #tpu.memory_space<vmem>>, %arg6: memref<1x16x192xbf16, #tpu.memory_space<vmem>>, %arg7: memref<1x16x192xbf16, #tpu.memory_space<vmem>>, %arg8: memref<1x16x320xbf16, #tpu.memory_space<vmem>>, %arg9: memref<1280x7xf32, #tpu.memory_space<vmem>>, %arg10: memref<1x1280xf32, #tpu.memory_space<vmem>>, %arg11: memref<1280x5xf32, #tpu.memory_space<vmem>>, %arg12: memref<1x5xf32, #tpu.memory_space<vmem>>, %arg13: memref<1x1x5xf32, #tpu.memory_space<vmem>>) attributes {dimension_semantics = [#tpu.dimension_semantics<parallel>], iteration_bounds = array<i64: 2>, scalar_prefetch = 0 : i64, scratch_operands = 0 : i64, tpu.core_type = #tpu.core_type<tc>, window_params = [{transform_indices = @transform_0, window_bounds = array<i64: 1, 1, 1280>}, {transform_indices = @transform_1, window_bounds = array<i64: 1, 64, 80>}, {transform_indices = @transform_2, window_bounds = array<i64: 1, 64, 112>}, {transform_indices = @transform_3, window_bounds = array<i64: 1, 16, 192>}, {transform_indices = @transform_4, window_bounds = array<i64: 1, 16, 192>}, {transform_indices = @transform_5, window_bounds = array<i64: 1, 16, 192>}, {transform_indices = @transform_6, window_bounds = array<i64: 1, 16, 192>}, {transform_indices = @transform_7, window_bounds = array<i64: 1, 16, 320>}, {pipeline_mode = #tpu.pipeline_mode<synchronous>, transform_indices = @transform_8, window_bounds = array<i64: 1280, 7>}, {pipeline_mode = #tpu.pipeline_mode<synchronous>, transform_indices = @transform_9, window_bounds = array<i64: 1, 1280>}, {pipeline_mode = #tpu.pipeline_mode<synchronous>, transform_indices = @transform_10, window_bounds = array<i64: 1280, 5>}, {pipeline_mode = #tpu.pipeline_mode<synchronous>, transform_indices = @transform_11, window_bounds = array<i64: 1, 5>}, {transform_indices = @transform_12, window_bounds = array<i64: 1, 1, 5>}]} {
    %c0 = arith.constant 0 : index
    %c0_0 = arith.constant 0 : index
    %c0_1 = arith.constant 0 : index
    %0 = vector.load %arg1[%c0, %c0_0, %c0_1] : memref<1x1x1280xf32, #tpu.memory_space<vmem>>, vector<1x1x1280xf32>
    %1 = vector.shape_cast %0 : vector<1x1x1280xf32> to vector<1x1280xf32>
    %c0_2 = arith.constant 0 : index
    %c0_3 = arith.constant 0 : index
    %2 = vector.load %arg9[%c0_2, %c0_3] : memref<1280x7xf32, #tpu.memory_space<vmem>>, vector<1280x7xf32>
    %cst = arith.constant dense<0.000000e+00> : vector<1x7xf32>
    %3 = tpu.matmul %1, %2, %cst {dimension_numbers = #tpu.dot_dimension_numbers<[1], [0], [0], [1], [0, 0, 1, 1], [], []>} : vector<1x1280xf32>, vector<1280x7xf32>, vector<1x7xf32> -> vector<1x7xf32>
    %c0_4 = arith.constant 0 : index
    %c0_5 = arith.constant 0 : index
    %4 = vector.load %arg12[%c0_4, %c0_5] : memref<1x5xf32, #tpu.memory_space<vmem>>, vector<1x5xf32>
    %c0_6 = arith.constant 0 : index
    %c0_7 = arith.constant 0 : index
    %c0_8 = arith.constant 0 : index
    %5 = vector.load %arg2[%c0_6, %c0_7, %c0_8] : memref<1x64x80xbf16, #tpu.memory_space<vmem>>, vector<1x64x80xbf16>
    %6 = vector.shape_cast %5 : vector<1x64x80xbf16> to vector<64x80xbf16>
    %7 = arith.extf %6 : vector<64x80xbf16> to vector<64x80xf32>
    %c0_9 = arith.constant 0 : index
    %c0_10 = arith.constant 0 : index
    %8 = vector.load %arg10[%c0_9, %c0_10] : memref<1x1280xf32, #tpu.memory_space<vmem>>, vector<1x80xf32>
    %9 = vector.broadcast %8 : vector<1x80xf32> to vector<64x80xf32>
    %10 = arith.mulf %7, %9 : vector<64x80xf32>
    %cst_11 = arith.constant dense<0.000000e+00> : vector<64xf32>
    %11 = vector.multi_reduction <add>, %10, %cst_11 [1] : vector<64x80xf32> to vector<64xf32>
    %12 = vector.shape_cast %11 : vector<64xf32> to vector<64x1xf32>
    %13 = vector.extract_strided_slice %3 {offsets = [0, 0], sizes = [1, 1], strides = [1, 1]} : vector<1x7xf32> to vector<1x1xf32>
    %14 = vector.broadcast %13 : vector<1x1xf32> to vector<64x1xf32>
    %15 = arith.addf %12, %14 : vector<64x1xf32>
    %cst_12 = arith.constant dense<0xFF800000> : vector<1xf32>
    %16 = vector.multi_reduction <maximumf>, %15, %cst_12 [0] : vector<64x1xf32> to vector<1xf32>
    %17 = vector.shape_cast %16 : vector<1xf32> to vector<1x1xf32>
    %18 = vector.broadcast %17 : vector<1x1xf32> to vector<64x1xf32>
    %19 = arith.subf %15, %18 : vector<64x1xf32>
    %20 = math.exp %19 : vector<64x1xf32>
    %cst_13 = arith.constant dense<0.000000e+00> : vector<1xf32>
    %21 = vector.multi_reduction <add>, %20, %cst_13 [0] : vector<64x1xf32> to vector<1xf32>
    %22 = vector.shape_cast %21 : vector<1xf32> to vector<1x1xf32>
    %23 = vector.broadcast %20 : vector<64x1xf32> to vector<64x80xf32>
    %24 = arith.mulf %23, %7 : vector<64x80xf32>
    %cst_14 = arith.constant dense<0.000000e+00> : vector<80xf32>
    %25 = vector.multi_reduction <add>, %24, %cst_14 [0] : vector<64x80xf32> to vector<80xf32>
    %26 = vector.shape_cast %25 : vector<80xf32> to vector<1x80xf32>
    %27 = tpu.reciprocal %22 {approx = true} : vector<1x1xf32> -> vector<1x1xf32>
    %28 = vector.broadcast %27 : vector<1x1xf32> to vector<1x80xf32>
    %29 = arith.mulf %26, %28 : vector<1x80xf32>
    %c0_15 = arith.constant 0 : index
    %c0_16 = arith.constant 0 : index
    %30 = vector.load %arg11[%c0_15, %c0_16] : memref<1280x5xf32, #tpu.memory_space<vmem>>, vector<80x5xf32>
    %cst_17 = arith.constant dense<0.000000e+00> : vector<1x5xf32>
    %31 = tpu.matmul %29, %30, %cst_17 {dimension_numbers = #tpu.dot_dimension_numbers<[1], [0], [0], [1], [0, 0, 1, 1], [], []>} : vector<1x80xf32>, vector<80x5xf32>, vector<1x5xf32> -> vector<1x5xf32>
    %32 = arith.addf %4, %31 : vector<1x5xf32>
    %c0_18 = arith.constant 0 : index
    %c0_19 = arith.constant 0 : index
    %c0_20 = arith.constant 0 : index
    %33 = vector.load %arg3[%c0_18, %c0_19, %c0_20] : memref<1x64x112xbf16, #tpu.memory_space<vmem>>, vector<1x64x112xbf16>
    %34 = vector.shape_cast %33 : vector<1x64x112xbf16> to vector<64x112xbf16>
    %35 = arith.extf %34 : vector<64x112xbf16> to vector<64x112xf32>
    %c0_21 = arith.constant 0 : index
    %c80 = arith.constant 80 : index
    %36 = vector.load %arg10[%c0_21, %c80] : memref<1x1280xf32, #tpu.memory_space<vmem>>, vector<1x112xf32>
    %37 = vector.broadcast %36 : vector<1x112xf32> to vector<64x112xf32>
    %38 = arith.mulf %35, %37 : vector<64x112xf32>
    %cst_22 = arith.constant dense<0.000000e+00> : vector<64xf32>
    %39 = vector.multi_reduction <add>, %38, %cst_22 [1] : vector<64x112xf32> to vector<64xf32>
    %40 = vector.shape_cast %39 : vector<64xf32> to vector<64x1xf32>
    %41 = vector.extract_strided_slice %3 {offsets = [0, 1], sizes = [1, 1], strides = [1, 1]} : vector<1x7xf32> to vector<1x1xf32>
    %42 = vector.broadcast %41 : vector<1x1xf32> to vector<64x1xf32>
    %43 = arith.addf %40, %42 : vector<64x1xf32>
    %cst_23 = arith.constant dense<0xFF800000> : vector<1xf32>
    %44 = vector.multi_reduction <maximumf>, %43, %cst_23 [0] : vector<64x1xf32> to vector<1xf32>
    %45 = vector.shape_cast %44 : vector<1xf32> to vector<1x1xf32>
    %46 = vector.broadcast %45 : vector<1x1xf32> to vector<64x1xf32>
    %47 = arith.subf %43, %46 : vector<64x1xf32>
    %48 = math.exp %47 : vector<64x1xf32>
    %cst_24 = arith.constant dense<0.000000e+00> : vector<1xf32>
    %49 = vector.multi_reduction <add>, %48, %cst_24 [0] : vector<64x1xf32> to vector<1xf32>
    %50 = vector.shape_cast %49 : vector<1xf32> to vector<1x1xf32>
    %51 = vector.broadcast %48 : vector<64x1xf32> to vector<64x112xf32>
    %52 = arith.mulf %51, %35 : vector<64x112xf32>
    %cst_25 = arith.constant dense<0.000000e+00> : vector<112xf32>
    %53 = vector.multi_reduction <add>, %52, %cst_25 [0] : vector<64x112xf32> to vector<112xf32>
    %54 = vector.shape_cast %53 : vector<112xf32> to vector<1x112xf32>
    %55 = tpu.reciprocal %50 {approx = true} : vector<1x1xf32> -> vector<1x1xf32>
    %56 = vector.broadcast %55 : vector<1x1xf32> to vector<1x112xf32>
    %57 = arith.mulf %54, %56 : vector<1x112xf32>
    %c80_26 = arith.constant 80 : index
    %c0_27 = arith.constant 0 : index
    %58 = vector.load %arg11[%c80_26, %c0_27] : memref<1280x5xf32, #tpu.memory_space<vmem>>, vector<112x5xf32>
    %cst_28 = arith.constant dense<0.000000e+00> : vector<1x5xf32>
    %59 = tpu.matmul %57, %58, %cst_28 {dimension_numbers = #tpu.dot_dimension_numbers<[1], [0], [0], [1], [0, 0, 1, 1], [], []>} : vector<1x112xf32>, vector<112x5xf32>, vector<1x5xf32> -> vector<1x5xf32>
    %60 = arith.addf %32, %59 : vector<1x5xf32>
    %c0_29 = arith.constant 0 : index
    %c0_30 = arith.constant 0 : index
    %c0_31 = arith.constant 0 : index
    %61 = vector.load %arg4[%c0_29, %c0_30, %c0_31] : memref<1x16x192xbf16, #tpu.memory_space<vmem>>, vector<1x16x192xbf16>
    %62 = vector.shape_cast %61 : vector<1x16x192xbf16> to vector<16x192xbf16>
    %63 = arith.extf %62 : vector<16x192xbf16> to vector<16x192xf32>
    %c0_32 = arith.constant 0 : index
    %c192 = arith.constant 192 : index
    %64 = vector.load %arg10[%c0_32, %c192] : memref<1x1280xf32, #tpu.memory_space<vmem>>, vector<1x192xf32>
    %65 = vector.broadcast %64 : vector<1x192xf32> to vector<16x192xf32>
    %66 = arith.mulf %63, %65 : vector<16x192xf32>
    %cst_33 = arith.constant dense<0.000000e+00> : vector<16xf32>
    %67 = vector.multi_reduction <add>, %66, %cst_33 [1] : vector<16x192xf32> to vector<16xf32>
    %68 = vector.shape_cast %67 : vector<16xf32> to vector<16x1xf32>
    %69 = vector.extract_strided_slice %3 {offsets = [0, 2], sizes = [1, 1], strides = [1, 1]} : vector<1x7xf32> to vector<1x1xf32>
    %70 = vector.broadcast %69 : vector<1x1xf32> to vector<16x1xf32>
    %71 = arith.addf %68, %70 : vector<16x1xf32>
    %cst_34 = arith.constant dense<0xFF800000> : vector<1xf32>
    %72 = vector.multi_reduction <maximumf>, %71, %cst_34 [0] : vector<16x1xf32> to vector<1xf32>
    %73 = vector.shape_cast %72 : vector<1xf32> to vector<1x1xf32>
    %74 = vector.broadcast %73 : vector<1x1xf32> to vector<16x1xf32>
    %75 = arith.subf %71, %74 : vector<16x1xf32>
    %76 = math.exp %75 : vector<16x1xf32>
    %cst_35 = arith.constant dense<0.000000e+00> : vector<1xf32>
    %77 = vector.multi_reduction <add>, %76, %cst_35 [0] : vector<16x1xf32> to vector<1xf32>
    %78 = vector.shape_cast %77 : vector<1xf32> to vector<1x1xf32>
    %79 = vector.broadcast %76 : vector<16x1xf32> to vector<16x192xf32>
    %80 = arith.mulf %79, %63 : vector<16x192xf32>
    %cst_36 = arith.constant dense<0.000000e+00> : vector<192xf32>
    %81 = vector.multi_reduction <add>, %80, %cst_36 [0] : vector<16x192xf32> to vector<192xf32>
    %82 = vector.shape_cast %81 : vector<192xf32> to vector<1x192xf32>
    %83 = tpu.reciprocal %78 {approx = true} : vector<1x1xf32> -> vector<1x1xf32>
    %84 = vector.broadcast %83 : vector<1x1xf32> to vector<1x192xf32>
    %85 = arith.mulf %82, %84 : vector<1x192xf32>
    %c192_37 = arith.constant 192 : index
    %c0_38 = arith.constant 0 : index
    %86 = vector.load %arg11[%c192_37, %c0_38] : memref<1280x5xf32, #tpu.memory_space<vmem>>, vector<192x5xf32>
    %cst_39 = arith.constant dense<0.000000e+00> : vector<1x5xf32>
    %87 = tpu.matmul %85, %86, %cst_39 {dimension_numbers = #tpu.dot_dimension_numbers<[1], [0], [0], [1], [0, 0, 1, 1], [], []>} : vector<1x192xf32>, vector<192x5xf32>, vector<1x5xf32> -> vector<1x5xf32>
    %88 = arith.addf %60, %87 : vector<1x5xf32>
    %c0_40 = arith.constant 0 : index
    %c0_41 = arith.constant 0 : index
    %c0_42 = arith.constant 0 : index
    %89 = vector.load %arg5[%c0_40, %c0_41, %c0_42] : memref<1x16x192xbf16, #tpu.memory_space<vmem>>, vector<1x16x192xbf16>
    %90 = vector.shape_cast %89 : vector<1x16x192xbf16> to vector<16x192xbf16>
    %91 = arith.extf %90 : vector<16x192xbf16> to vector<16x192xf32>
    %c0_43 = arith.constant 0 : index
    %c384 = arith.constant 384 : index
    %92 = vector.load %arg10[%c0_43, %c384] : memref<1x1280xf32, #tpu.memory_space<vmem>>, vector<1x192xf32>
    %93 = vector.broadcast %92 : vector<1x192xf32> to vector<16x192xf32>
    %94 = arith.mulf %91, %93 : vector<16x192xf32>
    %cst_44 = arith.constant dense<0.000000e+00> : vector<16xf32>
    %95 = vector.multi_reduction <add>, %94, %cst_44 [1] : vector<16x192xf32> to vector<16xf32>
    %96 = vector.shape_cast %95 : vector<16xf32> to vector<16x1xf32>
    %97 = vector.extract_strided_slice %3 {offsets = [0, 3], sizes = [1, 1], strides = [1, 1]} : vector<1x7xf32> to vector<1x1xf32>
    %98 = vector.broadcast %97 : vector<1x1xf32> to vector<16x1xf32>
    %99 = arith.addf %96, %98 : vector<16x1xf32>
    %cst_45 = arith.constant dense<0xFF800000> : vector<1xf32>
    %100 = vector.multi_reduction <maximumf>, %99, %cst_45 [0] : vector<16x1xf32> to vector<1xf32>
    %101 = vector.shape_cast %100 : vector<1xf32> to vector<1x1xf32>
    %102 = vector.broadcast %101 : vector<1x1xf32> to vector<16x1xf32>
    %103 = arith.subf %99, %102 : vector<16x1xf32>
    %104 = math.exp %103 : vector<16x1xf32>
    %cst_46 = arith.constant dense<0.000000e+00> : vector<1xf32>
    %105 = vector.multi_reduction <add>, %104, %cst_46 [0] : vector<16x1xf32> to vector<1xf32>
    %106 = vector.shape_cast %105 : vector<1xf32> to vector<1x1xf32>
    %107 = vector.broadcast %104 : vector<16x1xf32> to vector<16x192xf32>
    %108 = arith.mulf %107, %91 : vector<16x192xf32>
    %cst_47 = arith.constant dense<0.000000e+00> : vector<192xf32>
    %109 = vector.multi_reduction <add>, %108, %cst_47 [0] : vector<16x192xf32> to vector<192xf32>
    %110 = vector.shape_cast %109 : vector<192xf32> to vector<1x192xf32>
    %111 = tpu.reciprocal %106 {approx = true} : vector<1x1xf32> -> vector<1x1xf32>
    %112 = vector.broadcast %111 : vector<1x1xf32> to vector<1x192xf32>
    %113 = arith.mulf %110, %112 : vector<1x192xf32>
    %c384_48 = arith.constant 384 : index
    %c0_49 = arith.constant 0 : index
    %114 = vector.load %arg11[%c384_48, %c0_49] : memref<1280x5xf32, #tpu.memory_space<vmem>>, vector<192x5xf32>
    %cst_50 = arith.constant dense<0.000000e+00> : vector<1x5xf32>
    %115 = tpu.matmul %113, %114, %cst_50 {dimension_numbers = #tpu.dot_dimension_numbers<[1], [0], [0], [1], [0, 0, 1, 1], [], []>} : vector<1x192xf32>, vector<192x5xf32>, vector<1x5xf32> -> vector<1x5xf32>
    %116 = arith.addf %88, %115 : vector<1x5xf32>
    %c0_51 = arith.constant 0 : index
    %c0_52 = arith.constant 0 : index
    %c0_53 = arith.constant 0 : index
    %117 = vector.load %arg6[%c0_51, %c0_52, %c0_53] : memref<1x16x192xbf16, #tpu.memory_space<vmem>>, vector<1x16x192xbf16>
    %118 = vector.shape_cast %117 : vector<1x16x192xbf16> to vector<16x192xbf16>
    %119 = arith.extf %118 : vector<16x192xbf16> to vector<16x192xf32>
    %c0_54 = arith.constant 0 : index
    %c576 = arith.constant 576 : index
    %120 = vector.load %arg10[%c0_54, %c576] : memref<1x1280xf32, #tpu.memory_space<vmem>>, vector<1x192xf32>
    %121 = vector.broadcast %120 : vector<1x192xf32> to vector<16x192xf32>
    %122 = arith.mulf %119, %121 : vector<16x192xf32>
    %cst_55 = arith.constant dense<0.000000e+00> : vector<16xf32>
    %123 = vector.multi_reduction <add>, %122, %cst_55 [1] : vector<16x192xf32> to vector<16xf32>
    %124 = vector.shape_cast %123 : vector<16xf32> to vector<16x1xf32>
    %125 = vector.extract_strided_slice %3 {offsets = [0, 4], sizes = [1, 1], strides = [1, 1]} : vector<1x7xf32> to vector<1x1xf32>
    %126 = vector.broadcast %125 : vector<1x1xf32> to vector<16x1xf32>
    %127 = arith.addf %124, %126 : vector<16x1xf32>
    %cst_56 = arith.constant dense<0xFF800000> : vector<1xf32>
    %128 = vector.multi_reduction <maximumf>, %127, %cst_56 [0] : vector<16x1xf32> to vector<1xf32>
    %129 = vector.shape_cast %128 : vector<1xf32> to vector<1x1xf32>
    %130 = vector.broadcast %129 : vector<1x1xf32> to vector<16x1xf32>
    %131 = arith.subf %127, %130 : vector<16x1xf32>
    %132 = math.exp %131 : vector<16x1xf32>
    %cst_57 = arith.constant dense<0.000000e+00> : vector<1xf32>
    %133 = vector.multi_reduction <add>, %132, %cst_57 [0] : vector<16x1xf32> to vector<1xf32>
    %134 = vector.shape_cast %133 : vector<1xf32> to vector<1x1xf32>
    %135 = vector.broadcast %132 : vector<16x1xf32> to vector<16x192xf32>
    %136 = arith.mulf %135, %119 : vector<16x192xf32>
    %cst_58 = arith.constant dense<0.000000e+00> : vector<192xf32>
    %137 = vector.multi_reduction <add>, %136, %cst_58 [0] : vector<16x192xf32> to vector<192xf32>
    %138 = vector.shape_cast %137 : vector<192xf32> to vector<1x192xf32>
    %139 = tpu.reciprocal %134 {approx = true} : vector<1x1xf32> -> vector<1x1xf32>
    %140 = vector.broadcast %139 : vector<1x1xf32> to vector<1x192xf32>
    %141 = arith.mulf %138, %140 : vector<1x192xf32>
    %c576_59 = arith.constant 576 : index
    %c0_60 = arith.constant 0 : index
    %142 = vector.load %arg11[%c576_59, %c0_60] : memref<1280x5xf32, #tpu.memory_space<vmem>>, vector<192x5xf32>
    %cst_61 = arith.constant dense<0.000000e+00> : vector<1x5xf32>
    %143 = tpu.matmul %141, %142, %cst_61 {dimension_numbers = #tpu.dot_dimension_numbers<[1], [0], [0], [1], [0, 0, 1, 1], [], []>} : vector<1x192xf32>, vector<192x5xf32>, vector<1x5xf32> -> vector<1x5xf32>
    %144 = arith.addf %116, %143 : vector<1x5xf32>
    %c0_62 = arith.constant 0 : index
    %c0_63 = arith.constant 0 : index
    %c0_64 = arith.constant 0 : index
    %145 = vector.load %arg7[%c0_62, %c0_63, %c0_64] : memref<1x16x192xbf16, #tpu.memory_space<vmem>>, vector<1x16x192xbf16>
    %146 = vector.shape_cast %145 : vector<1x16x192xbf16> to vector<16x192xbf16>
    %147 = arith.extf %146 : vector<16x192xbf16> to vector<16x192xf32>
    %c0_65 = arith.constant 0 : index
    %c768 = arith.constant 768 : index
    %148 = vector.load %arg10[%c0_65, %c768] : memref<1x1280xf32, #tpu.memory_space<vmem>>, vector<1x192xf32>
    %149 = vector.broadcast %148 : vector<1x192xf32> to vector<16x192xf32>
    %150 = arith.mulf %147, %149 : vector<16x192xf32>
    %cst_66 = arith.constant dense<0.000000e+00> : vector<16xf32>
    %151 = vector.multi_reduction <add>, %150, %cst_66 [1] : vector<16x192xf32> to vector<16xf32>
    %152 = vector.shape_cast %151 : vector<16xf32> to vector<16x1xf32>
    %153 = vector.extract_strided_slice %3 {offsets = [0, 5], sizes = [1, 1], strides = [1, 1]} : vector<1x7xf32> to vector<1x1xf32>
    %154 = vector.broadcast %153 : vector<1x1xf32> to vector<16x1xf32>
    %155 = arith.addf %152, %154 : vector<16x1xf32>
    %cst_67 = arith.constant dense<0xFF800000> : vector<1xf32>
    %156 = vector.multi_reduction <maximumf>, %155, %cst_67 [0] : vector<16x1xf32> to vector<1xf32>
    %157 = vector.shape_cast %156 : vector<1xf32> to vector<1x1xf32>
    %158 = vector.broadcast %157 : vector<1x1xf32> to vector<16x1xf32>
    %159 = arith.subf %155, %158 : vector<16x1xf32>
    %160 = math.exp %159 : vector<16x1xf32>
    %cst_68 = arith.constant dense<0.000000e+00> : vector<1xf32>
    %161 = vector.multi_reduction <add>, %160, %cst_68 [0] : vector<16x1xf32> to vector<1xf32>
    %162 = vector.shape_cast %161 : vector<1xf32> to vector<1x1xf32>
    %163 = vector.broadcast %160 : vector<16x1xf32> to vector<16x192xf32>
    %164 = arith.mulf %163, %147 : vector<16x192xf32>
    %cst_69 = arith.constant dense<0.000000e+00> : vector<192xf32>
    %165 = vector.multi_reduction <add>, %164, %cst_69 [0] : vector<16x192xf32> to vector<192xf32>
    %166 = vector.shape_cast %165 : vector<192xf32> to vector<1x192xf32>
    %167 = tpu.reciprocal %162 {approx = true} : vector<1x1xf32> -> vector<1x1xf32>
    %168 = vector.broadcast %167 : vector<1x1xf32> to vector<1x192xf32>
    %169 = arith.mulf %166, %168 : vector<1x192xf32>
    %c768_70 = arith.constant 768 : index
    %c0_71 = arith.constant 0 : index
    %170 = vector.load %arg11[%c768_70, %c0_71] : memref<1280x5xf32, #tpu.memory_space<vmem>>, vector<192x5xf32>
    %cst_72 = arith.constant dense<0.000000e+00> : vector<1x5xf32>
    %171 = tpu.matmul %169, %170, %cst_72 {dimension_numbers = #tpu.dot_dimension_numbers<[1], [0], [0], [1], [0, 0, 1, 1], [], []>} : vector<1x192xf32>, vector<192x5xf32>, vector<1x5xf32> -> vector<1x5xf32>
    %172 = arith.addf %144, %171 : vector<1x5xf32>
    %c0_73 = arith.constant 0 : index
    %c0_74 = arith.constant 0 : index
    %c0_75 = arith.constant 0 : index
    %173 = vector.load %arg8[%c0_73, %c0_74, %c0_75] : memref<1x16x320xbf16, #tpu.memory_space<vmem>>, vector<1x16x320xbf16>
    %174 = vector.shape_cast %173 : vector<1x16x320xbf16> to vector<16x320xbf16>
    %175 = arith.extf %174 : vector<16x320xbf16> to vector<16x320xf32>
    %c0_76 = arith.constant 0 : index
    %c960 = arith.constant 960 : index
    %176 = vector.load %arg10[%c0_76, %c960] : memref<1x1280xf32, #tpu.memory_space<vmem>>, vector<1x320xf32>
    %177 = vector.broadcast %176 : vector<1x320xf32> to vector<16x320xf32>
    %178 = arith.mulf %175, %177 : vector<16x320xf32>
    %cst_77 = arith.constant dense<0.000000e+00> : vector<16xf32>
    %179 = vector.multi_reduction <add>, %178, %cst_77 [1] : vector<16x320xf32> to vector<16xf32>
    %180 = vector.shape_cast %179 : vector<16xf32> to vector<16x1xf32>
    %181 = vector.extract_strided_slice %3 {offsets = [0, 6], sizes = [1, 1], strides = [1, 1]} : vector<1x7xf32> to vector<1x1xf32>
    %182 = vector.broadcast %181 : vector<1x1xf32> to vector<16x1xf32>
    %183 = arith.addf %180, %182 : vector<16x1xf32>
    %cst_78 = arith.constant dense<0xFF800000> : vector<1xf32>
    %184 = vector.multi_reduction <maximumf>, %183, %cst_78 [0] : vector<16x1xf32> to vector<1xf32>
    %185 = vector.shape_cast %184 : vector<1xf32> to vector<1x1xf32>
    %186 = vector.broadcast %185 : vector<1x1xf32> to vector<16x1xf32>
    %187 = arith.subf %183, %186 : vector<16x1xf32>
    %188 = math.exp %187 : vector<16x1xf32>
    %cst_79 = arith.constant dense<0.000000e+00> : vector<1xf32>
    %189 = vector.multi_reduction <add>, %188, %cst_79 [0] : vector<16x1xf32> to vector<1xf32>
    %190 = vector.shape_cast %189 : vector<1xf32> to vector<1x1xf32>
    %191 = vector.broadcast %188 : vector<16x1xf32> to vector<16x320xf32>
    %192 = arith.mulf %191, %175 : vector<16x320xf32>
    %cst_80 = arith.constant dense<0.000000e+00> : vector<320xf32>
    %193 = vector.multi_reduction <add>, %192, %cst_80 [0] : vector<16x320xf32> to vector<320xf32>
    %194 = vector.shape_cast %193 : vector<320xf32> to vector<1x320xf32>
    %195 = tpu.reciprocal %190 {approx = true} : vector<1x1xf32> -> vector<1x1xf32>
    %196 = vector.broadcast %195 : vector<1x1xf32> to vector<1x320xf32>
    %197 = arith.mulf %194, %196 : vector<1x320xf32>
    %c960_81 = arith.constant 960 : index
    %c0_82 = arith.constant 0 : index
    %198 = vector.load %arg11[%c960_81, %c0_82] : memref<1280x5xf32, #tpu.memory_space<vmem>>, vector<320x5xf32>
    %cst_83 = arith.constant dense<0.000000e+00> : vector<1x5xf32>
    %199 = tpu.matmul %197, %198, %cst_83 {dimension_numbers = #tpu.dot_dimension_numbers<[1], [0], [0], [1], [0, 0, 1, 1], [], []>} : vector<1x320xf32>, vector<320x5xf32>, vector<1x5xf32> -> vector<1x5xf32>
    %200 = arith.addf %172, %199 : vector<1x5xf32>
    %201 = arith.negf %200 : vector<1x5xf32>
    %202 = math.exp %201 : vector<1x5xf32>
    %cst_84 = arith.constant 1.000000e+00 : f32
    %203 = vector.broadcast %cst_84 : f32 to vector<1x5xf32>
    %204 = arith.addf %203, %202 : vector<1x5xf32>
    %205 = arith.divf %203, %204 : vector<1x5xf32>
    %206 = arith.mulf %200, %205 : vector<1x5xf32>
    %207 = vector.shape_cast %206 : vector<1x5xf32> to vector<1x1x5xf32>
    %c0_85 = arith.constant 0 : index
    %c0_86 = arith.constant 0 : index
    %c0_87 = arith.constant 0 : index
    %208 = vector.load %arg13[%c0_85, %c0_86, %c0_87] : memref<1x1x5xf32, #tpu.memory_space<vmem>>, vector<1x1x5xf32>
    tpu.vector_store %arg13[%c0_85, %c0_86, %c0_87], %207 {strides = array<i32>} : memref<1x1x5xf32, #tpu.memory_space<vmem>>, vector<1x1x5xf32>,
    return
  }
  func.func @transform_0(%arg0: i32) -> (i32, i32, i32) {
    %c0_i32 = arith.constant 0 : i32
    %c0_i32_0 = arith.constant 0 : i32
    %c0_i32_1 = arith.constant 0 : i32
    return %arg0, %c0_i32, %c0_i32_0 : i32, i32, i32
  }
  func.func @transform_1(%arg0: i32) -> (i32, i32, i32) {
    %c0_i32 = arith.constant 0 : i32
    %c0_i32_0 = arith.constant 0 : i32
    %c0_i32_1 = arith.constant 0 : i32
    return %arg0, %c0_i32, %c0_i32_0 : i32, i32, i32
  }
  func.func @transform_2(%arg0: i32) -> (i32, i32, i32) {
    %c0_i32 = arith.constant 0 : i32
    %c0_i32_0 = arith.constant 0 : i32
    %c0_i32_1 = arith.constant 0 : i32
    return %arg0, %c0_i32, %c0_i32_0 : i32, i32, i32
  }
  func.func @transform_3(%arg0: i32) -> (i32, i32, i32) {
    %c0_i32 = arith.constant 0 : i32
    %c0_i32_0 = arith.constant 0 : i32
    %c0_i32_1 = arith.constant 0 : i32
    return %arg0, %c0_i32, %c0_i32_0 : i32, i32, i32
  }
  func.func @transform_4(%arg0: i32) -> (i32, i32, i32) {
    %c0_i32 = arith.constant 0 : i32
    %c0_i32_0 = arith.constant 0 : i32
    %c0_i32_1 = arith.constant 0 : i32
    return %arg0, %c0_i32, %c0_i32_0 : i32, i32, i32
  }
  func.func @transform_5(%arg0: i32) -> (i32, i32, i32) {
    %c0_i32 = arith.constant 0 : i32
    %c0_i32_0 = arith.constant 0 : i32
    %c0_i32_1 = arith.constant 0 : i32
    return %arg0, %c0_i32, %c0_i32_0 : i32, i32, i32
  }
  func.func @transform_6(%arg0: i32) -> (i32, i32, i32) {
    %c0_i32 = arith.constant 0 : i32
    %c0_i32_0 = arith.constant 0 : i32
    %c0_i32_1 = arith.constant 0 : i32
    return %arg0, %c0_i32, %c0_i32_0 : i32, i32, i32
  }
  func.func @transform_7(%arg0: i32) -> (i32, i32, i32) {
    %c0_i32 = arith.constant 0 : i32
    %c0_i32_0 = arith.constant 0 : i32
    %c0_i32_1 = arith.constant 0 : i32
    return %arg0, %c0_i32, %c0_i32_0 : i32, i32, i32
  }
  func.func @transform_8(%arg0: i32) -> (i32, i32) {
    %c0_i32 = arith.constant 0 : i32
    %c0_i32_0 = arith.constant 0 : i32
    %c0_i32_1 = arith.constant 0 : i32
    return %c0_i32, %c0_i32_0 : i32, i32
  }
  func.func @transform_9(%arg0: i32) -> (i32, i32) {
    %c0_i32 = arith.constant 0 : i32
    %c0_i32_0 = arith.constant 0 : i32
    %c0_i32_1 = arith.constant 0 : i32
    return %c0_i32, %c0_i32_0 : i32, i32
  }
  func.func @transform_10(%arg0: i32) -> (i32, i32) {
    %c0_i32 = arith.constant 0 : i32
    %c0_i32_0 = arith.constant 0 : i32
    %c0_i32_1 = arith.constant 0 : i32
    return %c0_i32, %c0_i32_0 : i32, i32
  }
  func.func @transform_11(%arg0: i32) -> (i32, i32) {
    %c0_i32 = arith.constant 0 : i32
    %c0_i32_0 = arith.constant 0 : i32
    %c0_i32_1 = arith.constant 0 : i32
    return %c0_i32, %c0_i32_0 : i32, i32
  }
  func.func @transform_12(%arg0: i32) -> (i32, i32, i32) {
    %c0_i32 = arith.constant 0 : i32
    %c0_i32_0 = arith.constant 0 : i32
    %c0_i32_1 = arith.constant 0 : i32
    return %arg0, %c0_i32, %c0_i32_0 : i32, i32, i32
  }
}

</mosaic_0001>

<llo_original>
// kernel: efficientnet_b0_att_forward.1
$region0: #{efficientnet_b0_att_forward.1}
  #allocation0 [shape = 'u32[]', space=smem, size = 0x4, offset = 0x4, fixed_abs, tag = 'smem constant byte address 0x4 - core index']
  #allocation1 [shape = 'u32[144,128]{1,0:T(1,128)}', space=vmem, size = 0x12000, scoped, tag = 'internal scratch']
  %s0 = inlined_call_operand.vmem [shape: f32[2,1,1280], index: 0, kind: input, shape index: {}]
  %s1 = inlined_call_operand.vmem [shape: bf16[2,64,80], index: 1, kind: input, shape index: {}]
  %s2 = inlined_call_operand.vmem [shape: bf16[2,64,112], index: 2, kind: input, shape index: {}]
  %s3 = inlined_call_operand.vmem [shape: bf16[2,16,192], index: 3, kind: input, shape index: {}]
  %s4 = inlined_call_operand.vmem [shape: bf16[2,16,192], index: 4, kind: input, shape index: {}]
  %s5 = inlined_call_operand.vmem [shape: bf16[2,16,192], index: 5, kind: input, shape index: {}]
  %s6 = inlined_call_operand.vmem [shape: bf16[2,16,192], index: 6, kind: input, shape index: {}]
  %s7 = inlined_call_operand.vmem [shape: bf16[2,16,320], index: 7, kind: input, shape index: {}]
  %s8 = inlined_call_operand.vmem [shape: f32[1280,7], index: 8, kind: input, shape index: {}]
  %s9 = inlined_call_operand.vmem [shape: f32[1,1280], index: 9, kind: input, shape index: {}]
  %s10 = inlined_call_operand.vmem [shape: f32[1280,5], index: 10, kind: input, shape index: {}]
  %s11 = inlined_call_operand.vmem [shape: f32[1,5], index: 11, kind: input, shape index: {}]
  %s12 = inlined_call_operand.hbm [shape: f32[2,1,5], index: 12, kind: output, shape index: {}]
  %s13 = sld [smem:[#allocation0]]
  $region81: #{efficientnet_b0_att_forward.1} parent=0
    _
  %s15 = ssub.s32 1, %s13
  %s16 = scalar_select 0, %s15, %s13
  $region1: #{efficientnet_b0_att_forward.1} parent=0
    #allocation2 [shape = 'u8[1024]{0}', space=vmem, size = 0x400, scoped, tag = 'output window, operand 0']
    #allocation3 [shape = 's32[2]{0}', space=sflag, size = 0x8, scoped, tag = 'scoped memory for efficientnet_b0_att_forward.1']
    %17 = vsyncpa [#allocation3], 0
    %s18 = scalar_lea.sflag [#allocation3], 1
    %19 = vsyncpa %s18, 0
    loop: start=0, step=1, limit=4
    $region2: #{efficientnet_b0_att_forward.1} parent=1 // loop_pre_header
      _
    $region3: #{efficientnet_b0_att_forward.1} parent=1 // loop_header
      %s21 = sphi 0, %s25
      %p22 = scmp.ge.s32.totalorder %s21, 4
      %s31 = sphi 0, %s33
      %s34 = sphi 0, %s31
      %s35 = sphi 0, %s34
      %s51 = sphi 0, %s35
      %s57 = sphi 0, %s59
      %s60 = sphi 0, %s57
      %s61 = sphi 0, %s60
      %s77 = sphi 0, %s61
      %s83 = sphi 0, %s85
      %s86 = sphi 0, %s83
      %s87 = sphi 0, %s86
      %s103 = sphi 0, %s87
      %s109 = sphi 0, %s111
      %s112 = sphi 0, %s109
      %s113 = sphi 0, %s112
      %s129 = sphi 0, %s113
      %s135 = sphi 0, %s137
      %s138 = sphi 0, %s135
      %s139 = sphi 0, %s138
      %s155 = sphi 0, %s139
      %s161 = sphi 0, %s163
      %s164 = sphi 0, %s161
      %s165 = sphi 0, %s164
      %s181 = sphi 0, %s165
      %s187 = sphi 0, %s189
      %s190 = sphi 0, %s187
      %s191 = sphi 0, %s190
      %s207 = sphi 0, %s191
      %s213 = sphi 0, %s215
      %s216 = sphi 0, %s213
      %s217 = sphi 0, %s216
      %s233 = sphi 0, %s217
      %s237 = sphi 0, %s237
      %s239 = sphi 0, %s237
      %s240 = sphi 0, %s239
      %s254 = sphi 0, %s240
      %s258 = sphi 0, %s258
      %s260 = sphi 0, %s258
      %s261 = sphi 0, %s260
      %s275 = sphi 0, %s261
      %s279 = sphi 0, %s279
      %s281 = sphi 0, %s279
      %s282 = sphi 0, %s281
      %s296 = sphi 0, %s282
      %s300 = sphi 0, %s300
      %s302 = sphi 0, %s300
      %s303 = sphi 0, %s302
      %s317 = sphi 0, %s303
      %s323 = sphi 0, %s325
      %s326 = sphi 0, %s323
      %s327 = sphi 0, %s326
      %s343 = sphi 0, %s327
    $region4: #{efficientnet_b0_att_forward.1} parent=1 // loop_header_branch
      %24 = sbr.rel (%p22) target = $region8
    $region5: #{efficientnet_b0_att_forward.1} parent=1 // loop_body
      %s26 = ssub.s32 %s21, 1
      %s27 = ssub.s32 %s21, 2
      %s28 = sadd.s32 %s21, 1
      %s29 = ssub.s32 %s21, %s28
      %p30 = scmp.eq.s32.totalorder %s29, 0
      %s32 = sadd.s32 %s31, 1
      %s33 = scalar_select %p30, %s31, %s32
      %p36 = pneg %p30
      %p37 = scmp.eq.s32.totalorder %s21, 1
      %p38 = por %p36, %p37
      %p39 = scmp.ne.s32.totalorder %s31, %s34
      %p40 = scmp.eq.s32.totalorder %s21, 0
      %p41 = por %p39, %p40
      %p42 = scmp.ne.s32.totalorder %s31, %s34
      %p43 = scmp.eq.s32.totalorder %s26, 1
      %p44 = por %p42, %p43
      %p45 = scmp.ne.s32.totalorder %s34, %s35
      %p46 = scmp.eq.s32.totalorder %s26, 0
      %p47 = por %p45, %p46
      %p48 = scmp.ne.s32.totalorder %s34, %s35
      %p49 = scmp.eq.s32.totalorder %s27, 1
      %p50 = por %p48, %p49
      %p52 = scmp.ne.s32.totalorder %s35, %s51
      %p53 = scmp.eq.s32.totalorder %s27, 0
      %p54 = por %p52, %p53
      %s55 = ssub.s32 %s21, %s28
      %p56 = scmp.eq.s32.totalorder %s55, 0
      %s58 = sadd.s32 %s57, 1
      %s59 = scalar_select %p56, %s57, %s58
      %p62 = pneg %p56
      %p63 = scmp.eq.s32.totalorder %s21, 1
      %p64 = por %p62, %p63
      %p65 = scmp.ne.s32.totalorder %s57, %s60
      %p66 = scmp.eq.s32.totalorder %s21, 0
      %p67 = por %p65, %p66
      %p68 = scmp.ne.s32.totalorder %s57, %s60
      %p69 = scmp.eq.s32.totalorder %s26, 1
      %p70 = por %p68, %p69
      %p71 = scmp.ne.s32.totalorder %s60, %s61
      %p72 = scmp.eq.s32.totalorder %s26, 0
      %p73 = por %p71, %p72
      %p74 = scmp.ne.s32.totalorder %s60, %s61
      %p75 = scmp.eq.s32.totalorder %s27, 1
      %p76 = por %p74, %p75
      %p78 = scmp.ne.s32.totalorder %s61, %s77
      %p79 = scmp.eq.s32.totalorder %s27, 0
      %p80 = por %p78, %p79
      %s81 = ssub.s32 %s21, %s28
      %p82 = scmp.eq.s32.totalorder %s81, 0
      %s84 = sadd.s32 %s83, 1
      %s85 = scalar_select %p82, %s83, %s84
      %p88 = pneg %p82
      %p89 = scmp.eq.s32.totalorder %s21, 1
      %p90 = por %p88, %p89
      %p91 = scmp.ne.s32.totalorder %s83, %s86
      %p92 = scmp.eq.s32.totalorder %s21, 0
      %p93 = por %p91, %p92
      %p94 = scmp.ne.s32.totalorder %s83, %s86
      %p95 = scmp.eq.s32.totalorder %s26, 1
      %p96 = por %p94, %p95
      %p97 = scmp.ne.s32.totalorder %s86, %s87
      %p98 = scmp.eq.s32.totalorder %s26, 0
      %p99 = por %p97, %p98
      %p100 = scmp.ne.s32.totalorder %s86, %s87
      %p101 = scmp.eq.s32.totalorder %s27, 1
      %p102 = por %p100, %p101
      %p104 = scmp.ne.s32.totalorder %s87, %s103
      %p105 = scmp.eq.s32.totalorder %s27, 0
      %p106 = por %p104, %p105
      %s107 = ssub.s32 %s21, %s28
      %p108 = scmp.eq.s32.totalorder %s107, 0
      %s110 = sadd.s32 %s109, 1
      %s111 = scalar_select %p108, %s109, %s110
      %p114 = pneg %p108
      %p115 = scmp.eq.s32.totalorder %s21, 1
      %p116 = por %p114, %p115
      %p117 = scmp.ne.s32.totalorder %s109, %s112
      %p118 = scmp.eq.s32.totalorder %s21, 0
      %p119 = por %p117, %p118
      %p120 = scmp.ne.s32.totalorder %s109, %s112
      %p121 = scmp.eq.s32.totalorder %s26, 1
      %p122 = por %p120, %p121
      %p123 = scmp.ne.s32.totalorder %s112, %s113
      %p124 = scmp.eq.s32.totalorder %s26, 0
      %p125 = por %p123, %p124
      %p126 = scmp.ne.s32.totalorder %s112, %s113
      %p127 = scmp.eq.s32.totalorder %s27, 1
      %p128 = por %p126, %p127
      %p130 = scmp.ne.s32.totalorder %s113, %s129
      %p131 = scmp.eq.s32.totalorder %s27, 0
      %p132 = por %p130, %p131
      %s133 = ssub.s32 %s21, %s28
      %p134 = scmp.eq.s32.totalorder %s133, 0
      %s136 = sadd.s32 %s135, 1
      %s137 = scalar_select %p134, %s135, %s136
      %p140 = pneg %p134
      %p141 = scmp.eq.s32.totalorder %s21, 1
      %p142 = por %p140, %p141
      %p143 = scmp.ne.s32.totalorder %s135, %s138
      %p144 = scmp.eq.s32.totalorder %s21, 0
      %p145 = por %p143, %p144
      %p146 = scmp.ne.s32.totalorder %s135, %s138
      %p147 = scmp.eq.s32.totalorder %s26, 1
      %p148 = por %p146, %p147
      %p149 = scmp.ne.s32.totalorder %s138, %s139
      %p150 = scmp.eq.s32.totalorder %s26, 0
      %p151 = por %p149, %p150
      %p152 = scmp.ne.s32.totalorder %s138, %s139
      %p153 = scmp.eq.s32.totalorder %s27, 1
      %p154 = por %p152, %p153
      %p156 = scmp.ne.s32.totalorder %s139, %s155
      %p157 = scmp.eq.s32.totalorder %s27, 0
      %p158 = por %p156, %p157
      %s159 = ssub.s32 %s21, %s28
      %p160 = scmp.eq.s32.totalorder %s159, 0
      %s162 = sadd.s32 %s161, 1
      %s163 = scalar_select %p160, %s161, %s162
      %p166 = pneg %p160
      %p167 = scmp.eq.s32.totalorder %s21, 1
      %p168 = por %p166, %p167
      %p169 = scmp.ne.s32.totalorder %s161, %s164
      %p170 = scmp.eq.s32.totalorder %s21, 0
      %p171 = por %p169, %p170
      %p172 = scmp.ne.s32.totalorder %s161, %s164
      %p173 = scmp.eq.s32.totalorder %s26, 1
      %p174 = por %p172, %p173
      %p175 = scmp.ne.s32.totalorder %s164, %s165
      %p176 = scmp.eq.s32.totalorder %s26, 0
      %p177 = por %p175, %p176
      %p178 = scmp.ne.s32.totalorder %s164, %s165
      %p179 = scmp.eq.s32.totalorder %s27, 1
      %p180 = por %p178, %p179
      %p182 = scmp.ne.s32.totalorder %s165, %s181
      %p183 = scmp.eq.s32.totalorder %s27, 0
      %p184 = por %p182, %p183
      %s185 = ssub.s32 %s21, %s28
      %p186 = scmp.eq.s32.totalorder %s185, 0
      %s188 = sadd.s32 %s187, 1
      %s189 = scalar_select %p186, %s187, %s188
      %p192 = pneg %p186
      %p193 = scmp.eq.s32.totalorder %s21, 1
      %p194 = por %p192, %p193
      %p195 = scmp.ne.s32.totalorder %s187, %s190
      %p196 = scmp.eq.s32.totalorder %s21, 0
      %p197 = por %p195, %p196
      %p198 = scmp.ne.s32.totalorder %s187, %s190
      %p199 = scmp.eq.s32.totalorder %s26, 1
      %p200 = por %p198, %p199
      %p201 = scmp.ne.s32.totalorder %s190, %s191
      %p202 = scmp.eq.s32.totalorder %s26, 0
      %p203 = por %p201, %p202
      %p204 = scmp.ne.s32.totalorder %s190, %s191
      %p205 = scmp.eq.s32.totalorder %s27, 1
      %p206 = por %p204, %p205
      %p208 = scmp.ne.s32.totalorder %s191, %s207
      %p209 = scmp.eq.s32.totalorder %s27, 0
      %p210 = por %p208, %p209
      %s211 = ssub.s32 %s21, %s28
      %p212 = scmp.eq.s32.totalorder %s211, 0
      %s214 = sadd.s32 %s213, 1
      %s215 = scalar_select %p212, %s213, %s214
      %p218 = pneg %p212
      %p219 = scmp.eq.s32.totalorder %s21, 1
      %p220 = por %p218, %p219
      %p221 = scmp.ne.s32.totalorder %s213, %s216
      %p222 = scmp.eq.s32.totalorder %s21, 0
      %p223 = por %p221, %p222
      %p224 = scmp.ne.s32.totalorder %s213, %s216
      %p225 = scmp.eq.s32.totalorder %s26, 1
      %p226 = por %p224, %p225
      %p227 = scmp.ne.s32.totalorder %s216, %s217
      %p228 = scmp.eq.s32.totalorder %s26, 0
      %p229 = por %p227, %p228
      %p230 = scmp.ne.s32.totalorder %s216, %s217
      %p231 = scmp.eq.s32.totalorder %s27, 1
      %p232 = por %p230, %p231
      %p234 = scmp.ne.s32.totalorder %s217, %s233
      %p235 = scmp.eq.s32.totalorder %s27, 0
      %p236 = por %p234, %p235
      %s238 = sadd.s32 %s237, 1
      %p241 = scmp.eq.s32.totalorder %s21, 1
      %p242 = scmp.ne.s32.totalorder %s237, %s239
      %p243 = scmp.eq.s32.totalorder %s21, 0
      %p244 = por %p242, %p243
      %p245 = scmp.ne.s32.totalorder %s237, %s239
      %p246 = scmp.eq.s32.totalorder %s26, 1
      %p247 = por %p245, %p246
      %p248 = scmp.ne.s32.totalorder %s239, %s240
      %p249 = scmp.eq.s32.totalorder %s26, 0
      %p250 = por %p248, %p249
      %p251 = scmp.ne.s32.totalorder %s239, %s240
      %p252 = scmp.eq.s32.totalorder %s27, 1
      %p253 = por %p251, %p252
      %p255 = scmp.ne.s32.totalorder %s240, %s254
      %p256 = scmp.eq.s32.totalorder %s27, 0
      %p257 = por %p255, %p256
      %s259 = sadd.s32 %s258, 1
      %p262 = scmp.eq.s32.totalorder %s21, 1
      %p263 = scmp.ne.s32.totalorder %s258, %s260
      %p264 = scmp.eq.s32.totalorder %s21, 0
      %p265 = por %p263, %p264
      %p266 = scmp.ne.s32.totalorder %s258, %s260
      %p267 = scmp.eq.s32.totalorder %s26, 1
      %p268 = por %p266, %p267
      %p269 = scmp.ne.s32.totalorder %s260, %s261
      %p270 = scmp.eq.s32.totalorder %s26, 0
      %p271 = por %p269, %p270
      %p272 = scmp.ne.s32.totalorder %s260, %s261
      %p273 = scmp.eq.s32.totalorder %s27, 1
      %p274 = por %p272, %p273
      %p276 = scmp.ne.s32.totalorder %s261, %s275
      %p277 = scmp.eq.s32.totalorder %s27, 0
      %p278 = por %p276, %p277
      %s280 = sadd.s32 %s279, 1
      %p283 = scmp.eq.s32.totalorder %s21, 1
      %p284 = scmp.ne.s32.totalorder %s279, %s281
      %p285 = scmp.eq.s32.totalorder %s21, 0
      %p286 = por %p284, %p285
      %p287 = scmp.ne.s32.totalorder %s279, %s281
      %p288 = scmp.eq.s32.totalorder %s26, 1
      %p289 = por %p287, %p288
      %p290 = scmp.ne.s32.totalorder %s281, %s282
      %p291 = scmp.eq.s32.totalorder %s26, 0
      %p292 = por %p290, %p291
      %p293 = scmp.ne.s32.totalorder %s281, %s282
      %p294 = scmp.eq.s32.totalorder %s27, 1
      %p295 = por %p293, %p294
      %p297 = scmp.ne.s32.totalorder %s282, %s296
      %p298 = scmp.eq.s32.totalorder %s27, 0
      %p299 = por %p297, %p298
      %s301 = sadd.s32 %s300, 1
      %p304 = scmp.eq.s32.totalorder %s21, 1
      %p305 = scmp.ne.s32.totalorder %s300, %s302
      %p306 = scmp.eq.s32.totalorder %s21, 0
      %p307 = por %p305, %p306
      %p308 = scmp.ne.s32.totalorder %s300, %s302
      %p309 = scmp.eq.s32.totalorder %s26, 1
      %p310 = por %p308, %p309
      %p311 = scmp.ne.s32.totalorder %s302, %s303
      %p312 = scmp.eq.s32.totalorder %s26, 0
      %p313 = por %p311, %p312
      %p314 = scmp.ne.s32.totalorder %s302, %s303
      %p315 = scmp.eq.s32.totalorder %s27, 1
      %p316 = por %p314, %p315
      %p318 = scmp.ne.s32.totalorder %s303, %s317
      %p319 = scmp.eq.s32.totalorder %s27, 0
      %p320 = por %p318, %p319
      %s321 = ssub.s32 %s21, %s28
      %p322 = scmp.eq.s32.totalorder %s321, 0
      %s324 = sadd.s32 %s323, 1
      %s325 = scalar_select %p322, %s323, %s324
      %p328 = pneg %p322
      %p329 = scmp.eq.s32.totalorder %s21, 1
      %p330 = por %p328, %p329
      %p331 = scmp.ne.s32.totalorder %s323, %s326
      %p332 = scmp.eq.s32.totalorder %s21, 0
      %p333 = por %p331, %p332
      %p334 = scmp.ne.s32.totalorder %s323, %s326
      %p335 = scmp.eq.s32.totalorder %s26, 1
      %p336 = por %p334, %p335
      %p337 = scmp.ne.s32.totalorder %s326, %s327
      %p338 = scmp.eq.s32.totalorder %s26, 0
      %p339 = por %p337, %p338
      %p340 = scmp.ne.s32.totalorder %s326, %s327
      %p341 = scmp.eq.s32.totalorder %s27, 1
      %p342 = por %p340, %p341
      %p344 = scmp.ne.s32.totalorder %s327, %s343
      %p345 = scmp.eq.s32.totalorder %s27, 0
      %p346 = por %p344, %p345
      %p347 = scmp.le.s32.totalorder 1, %s21
      %p348 = scmp.lt.s32.totalorder %s21, 3
      %p349 = pnand %p347, %p348
      %p350 = pneg %p349
      // Predicated region
      $region9: #{efficientnet_b0_att_forward.1} parent=5 // pred_check
        _
      $region10: #{efficientnet_b0_att_forward.1} parent=5 // pred_check_branch
        %352 = sbr.rel (%p349) target = $region12
      $region11: #{efficientnet_b0_att_forward.1} parent=5 // pred_region
        %s353 = ssub.s32 %s21, 1
        // Predicated region
        $region13: #{efficientnet_b0_att_forward.1} parent=11 // pred_check
          %p354 = pneg %p250
        $region14: #{efficientnet_b0_att_forward.1} parent=11 // pred_check_branch
          %356 = sbr.rel (%p354) target = $region16
        $region15: #{efficientnet_b0_att_forward.1} parent=11 // pred_region
          _
        $region16: #{efficientnet_b0_att_forward.1} parent=11 // pred_fallthru
          _
        // Predicated region
        $region17: #{efficientnet_b0_att_forward.1} parent=11 // pred_check
          %p357 = pneg %p271
        $region18: #{efficientnet_b0_att_forward.1} parent=11 // pred_check_branch
          %359 = sbr.rel (%p357) target = $region20
        $region19: #{efficientnet_b0_att_forward.1} parent=11 // pred_region
          _
        $region20: #{efficientnet_b0_att_forward.1} parent=11 // pred_fallthru
          _
        // Predicated region
        $region21: #{efficientnet_b0_att_forward.1} parent=11 // pred_check
          %p360 = pneg %p292
        $region22: #{efficientnet_b0_att_forward.1} parent=11 // pred_check_branch
          %362 = sbr.rel (%p360) target = $region24
        $region23: #{efficientnet_b0_att_forward.1} parent=11 // pred_region
          _
        $region24: #{efficientnet_b0_att_forward.1} parent=11 // pred_fallthru
          _
        // Predicated region
        $region25: #{efficientnet_b0_att_forward.1} parent=11 // pred_check
          %p363 = pneg %p313
        $region26: #{efficientnet_b0_att_forward.1} parent=11 // pred_check_branch
          %365 = sbr.rel (%p363) target = $region28
        $region27: #{efficientnet_b0_att_forward.1} parent=11 // pred_region
          _
        $region28: #{efficientnet_b0_att_forward.1} parent=11 // pred_fallthru
          _
      $region12: #{efficientnet_b0_att_forward.1} parent=5 // pred_fallthru
        _
      %p366 = scmp.lt.s32.totalorder %s21, 2
      // Predicated region
      $region29: #{efficientnet_b0_att_forward.1} parent=5 // pred_check
        %p367 = pneg %p366
      $region30: #{efficientnet_b0_att_forward.1} parent=5 // pred_check_branch
        %369 = sbr.rel (%p367) target = $region32
      $region31: #{efficientnet_b0_att_forward.1} parent=5 // pred_region
        // Predicated region
        $region33: #{efficientnet_b0_att_forward.1} parent=31 // pred_check
          %p370 = pneg %p41
        $region34: #{efficientnet_b0_att_forward.1} parent=31 // pred_check_branch
          %372 = sbr.rel (%p370) target = $region36
        $region35: #{efficientnet_b0_att_forward.1} parent=31 // pred_region
          %p373 = scmp.lt.s32.totalorder %s21, 1
          %s374 = scalar_select %p373, %s21, 1
          %s375 = smul.addr %s374, 10
          %s376 = scalar_lea.vmem %s0, %s375
        $region36: #{efficientnet_b0_att_forward.1} parent=31 // pred_fallthru
          _
        // Predicated region
        $region37: #{efficientnet_b0_att_forward.1} parent=31 // pred_check
          %p377 = pneg %p67
        $region38: #{efficientnet_b0_att_forward.1} parent=31 // pred_check_branch
          %379 = sbr.rel (%p377) target = $region40
        $region39: #{efficientnet_b0_att_forward.1} parent=31 // pred_region
          %p380 = scmp.lt.s32.totalorder %s21, 1
          %s381 = scalar_select %p380, %s21, 1
          %s382 = smul.addr %s381, 8
          %s383 = smul.addr %s382, 4
          %s384 = scalar_lea.vmem %s1, %s383
        $region40: #{efficientnet_b0_att_forward.1} parent=31 // pred_fallthru
          _
        // Predicated region
        $region41: #{efficientnet_b0_att_forward.1} parent=31 // pred_check
          %p385 = pneg %p93
        $region42: #{efficientnet_b0_att_forward.1} parent=31 // pred_check_branch
          %387 = sbr.rel (%p385) target = $region44
        $region43: #{efficientnet_b0_att_forward.1} parent=31 // pred_region
          %p388 = scmp.lt.s32.totalorder %s21, 1
          %s389 = scalar_select %p388, %s21, 1
          %s390 = smul.addr %s389, 8
          %s391 = smul.addr %s390, 4
          %s392 = scalar_lea.vmem %s2, %s391
        $region44: #{efficientnet_b0_att_forward.1} parent=31 // pred_fallthru
          _
        // Predicated region
        $region45: #{efficientnet_b0_att_forward.1} parent=31 // pred_check
          %p393 = pneg %p119
        $region46: #{efficientnet_b0_att_forward.1} parent=31 // pred_check_branch
          %395 = sbr.rel (%p393) target = $region48
        $region47: #{efficientnet_b0_att_forward.1} parent=31 // pred_region
          %p396 = scmp.lt.s32.totalorder %s21, 1
          %s397 = scalar_select %p396, %s21, 1
          %s398 = smul.addr %s397, 4
          %s399 = smul.addr %s398, 4
          %s400 = scalar_lea.vmem %s3, %s399
        $region48: #{efficientnet_b0_att_forward.1} parent=31 // pred_fallthru
          _
        // Predicated region
        $region49: #{efficientnet_b0_att_forward.1} parent=31 // pred_check
          %p401 = pneg %p145
        $region50: #{efficientnet_b0_att_forward.1} parent=31 // pred_check_branch
          %403 = sbr.rel (%p401) target = $region52
        $region51: #{efficientnet_b0_att_forward.1} parent=31 // pred_region
          %p404 = scmp.lt.s32.totalorder %s21, 1
          %s405 = scalar_select %p404, %s21, 1
          %s406 = smul.addr %s405, 4
          %s407 = smul.addr %s406, 4
          %s408 = scalar_lea.vmem %s4, %s407
        $region52: #{efficientnet_b0_att_forward.1} parent=31 // pred_fallthru
          _
        // Predicated region
        $region53: #{efficientnet_b0_att_forward.1} parent=31 // pred_check
          %p409 = pneg %p171
        $region54: #{efficientnet_b0_att_forward.1} parent=31 // pred_check_branch
          %411 = sbr.rel (%p409) target = $region56
        $region55: #{efficientnet_b0_att_forward.1} parent=31 // pred_region
          %p412 = scmp.lt.s32.totalorder %s21, 1
          %s413 = scalar_select %p412, %s21, 1
          %s414 = smul.addr %s413, 4
          %s415 = smul.addr %s414, 4
          %s416 = scalar_lea.vmem %s5, %s415
        $region56: #{efficientnet_b0_att_forward.1} parent=31 // pred_fallthru
          _
        // Predicated region
        $region57: #{efficientnet_b0_att_forward.1} parent=31 // pred_check
          %p417 = pneg %p197
        $region58: #{efficientnet_b0_att_forward.1} parent=31 // pred_check_branch
          %419 = sbr.rel (%p417) target = $region60
        $region59: #{efficientnet_b0_att_forward.1} parent=31 // pred_region
          %p420 = scmp.lt.s32.totalorder %s21, 1
          %s421 = scalar_select %p420, %s21, 1
          %s422 = smul.addr %s421, 4
          %s423 = smul.addr %s422, 4
          %s424 = scalar_lea.vmem %s6, %s423
        $region60: #{efficientnet_b0_att_forward.1} parent=31 // pred_fallthru
          _
        // Predicated region
        $region61: #{efficientnet_b0_att_forward.1} parent=31 // pred_check
          %p425 = pneg %p223
        $region62: #{efficientnet_b0_att_forward.1} parent=31 // pred_check_branch
          %427 = sbr.rel (%p425) target = $region64
        $region63: #{efficientnet_b0_att_forward.1} parent=31 // pred_region
          %p428 = scmp.lt.s32.totalorder %s21, 1
          %s429 = scalar_select %p428, %s21, 1
          %s430 = smul.addr %s429, 6
          %s431 = smul.addr %s430, 4
          %s432 = scalar_lea.vmem %s7, %s431
        $region64: #{efficientnet_b0_att_forward.1} parent=31 // pred_fallthru
          _
      $region32: #{efficientnet_b0_att_forward.1} parent=5 // pred_fallthru
        _
      %p433 = scmp.le.s32.totalorder 1, %s21
      %p434 = scmp.lt.s32.totalorder %s21, 3
      %p435 = pnand %p433, %p434
      %p436 = pneg %p435
      // Predicated region
      $region65: #{efficientnet_b0_att_forward.1} parent=5 // pred_check
        _
      $region66: #{efficientnet_b0_att_forward.1} parent=5 // pred_check_branch
        %438 = sbr.rel (%p435) target = $region68
      $region67: #{efficientnet_b0_att_forward.1} parent=5 // pred_region
        %s439 = ssub.s32 %s21, 1
        %p440 = scmp.lt.s32.totalorder %s26, 1
        %s441 = scalar_select %p440, %s26, 1
        %s442 = smul.addr %s441, 10
        %s443 = scalar_lea.vmem %s0, %s442
        %p444 = pneg %p47
        %p445 = pneg %p44
        %p446 = scmp.lt.s32.totalorder %s26, 1
        %s447 = scalar_select %p446, %s26, 1
        %s448 = smul.addr %s447, 8
        %s449 = smul.addr %s448, 4
        %s450 = scalar_lea.vmem %s1, %s449
        %p451 = pneg %p73
        %p452 = pneg %p70
        %p453 = scmp.lt.s32.totalorder %s26, 1
        %s454 = scalar_select %p453, %s26, 1
        %s455 = smul.addr %s454, 8
        %s456 = smul.addr %s455, 4
        %s457 = scalar_lea.vmem %s2, %s456
        %p458 = pneg %p99
        %p459 = pneg %p96
        %p460 = scmp.lt.s32.totalorder %s26, 1
        %s461 = scalar_select %p460, %s26, 1
        %s462 = smul.addr %s461, 4
        %s463 = smul.addr %s462, 4
        %s464 = scalar_lea.vmem %s3, %s463
        %p465 = pneg %p125
        %p466 = pneg %p122
        %p467 = scmp.lt.s32.totalorder %s26, 1
        %s468 = scalar_select %p467, %s26, 1
        %s469 = smul.addr %s468, 4
        %s470 = smul.addr %s469, 4
        %s471 = scalar_lea.vmem %s4, %s470
        %p472 = pneg %p151
        %p473 = pneg %p148
        %p474 = scmp.lt.s32.totalorder %s26, 1
        %s475 = scalar_select %p474, %s26, 1
        %s476 = smul.addr %s475, 4
        %s477 = smul.addr %s476, 4
        %s478 = scalar_lea.vmem %s5, %s477
        %p479 = pneg %p177
        %p480 = pneg %p174
        %p481 = scmp.lt.s32.totalorder %s26, 1
        %s482 = scalar_select %p481, %s26, 1
        %s483 = smul.addr %s482, 4
        %s484 = smul.addr %s483, 4
        %s485 = scalar_lea.vmem %s6, %s484
        %p486 = pneg %p203
        %p487 = pneg %p200
        %p488 = scmp.lt.s32.totalorder %s26, 1
        %s489 = scalar_select %p488, %s26, 1
        %s490 = smul.addr %s489, 6
        %s491 = smul.addr %s490, 4
        %s492 = scalar_lea.vmem %s7, %s491
        %p493 = pneg %p229
        %p494 = pneg %p226
        %p495 = pneg %p250
        %p496 = pneg %p247
        %p497 = pneg %p271
        %p498 = pneg %p268
        %p499 = pneg %p292
        %p500 = pneg %p289
        %p501 = pneg %p313
        %p502 = pneg %p310
        %p503 = pneg %p339
        %p504 = pneg %p336
        %s505 = sand.u32 %s326, 1
        %s506 = scalar_lea.sflag [#allocation3], %s505
        %s507 = sand.u32 %s326, 1
        %s508 = scalar_lea.vmem [#allocation2], %s507
        %p509 = scmp.lt.s32.totalorder %s26, 1
        %s510 = scalar_select %p509, %s26, 1
        %s511 = smul.addr %s510, 10
        %s512 = scalar_lea.vmem %s0, %s511
        %p513 = scmp.lt.s32.totalorder %s26, 1
        %s514 = scalar_select %p513, %s26, 1
        %s515 = smul.addr %s514, 8
        %s516 = smul.addr %s515, 4
        %s517 = scalar_lea.vmem %s1, %s516
        %p518 = scmp.lt.s32.totalorder %s26, 1
        %s519 = scalar_select %p518, %s26, 1
        %s520 = smul.addr %s519, 8
        %s521 = smul.addr %s520, 4
        %s522 = scalar_lea.vmem %s2, %s521
        %p523 = scmp.lt.s32.totalorder %s26, 1
        %s524 = scalar_select %p523, %s26, 1
        %s525 = smul.addr %s524, 4
        %s526 = smul.addr %s525, 4
        %s527 = scalar_lea.vmem %s3, %s526
        %p528 = scmp.lt.s32.totalorder %s26, 1
        %s529 = scalar_select %p528, %s26, 1
        %s530 = smul.addr %s529, 4
        %s531 = smul.addr %s530, 4
        %s532 = scalar_lea.vmem %s4, %s531
        %p533 = scmp.lt.s32.totalorder %s26, 1
        %s534 = scalar_select %p533, %s26, 1
        %s535 = smul.addr %s534, 4
        %s536 = smul.addr %s535, 4
        %s537 = scalar_lea.vmem %s5, %s536
        %p538 = scmp.lt.s32.totalorder %s26, 1
        %s539 = scalar_select %p538, %s26, 1
        %s540 = smul.addr %s539, 4
        %s541 = smul.addr %s540, 4
        %s542 = scalar_lea.vmem %s6, %s541
        %p543 = scmp.lt.s32.totalorder %s26, 1
        %s544 = scalar_select %p543, %s26, 1
        %s545 = smul.addr %s544, 6
        %s546 = smul.addr %s545, 4
        %s547 = scalar_lea.vmem %s7, %s546
        %v548 = vld [vmem:[%s512] sm:$0xff]
        %v549 = vld [vmem:[%s512 + $0x8] sm:$0x3]
        %v550 = vld [vmem:[%s8] sm:$0xff]
        %v551 = vld [vmem:[%s8 + $0x8] sm:$0xff]
        %v552 = vld [vmem:[%s8 + $0x10] sm:$0xff]
        %v553 = vld [vmem:[%s8 + $0x18] sm:$0xff]
        %v554 = vld [vmem:[%s8 + $0x20] sm:$0xff]
        %v555 = vld [vmem:[%s8 + $0x28] sm:$0xff]
        %v556 = vld [vmem:[%s8 + $0x30] sm:$0xff]
        %v557 = vld [vmem:[%s8 + $0x38] sm:$0xff]
        %v558 = vld [vmem:[%s8 + $0x40] sm:$0xff]
        %v559 = vld [vmem:[%s8 + $0x48] sm:$0xff]
        %v560 = vld [vmem:[%s8 + $0x50] sm:$0xff]
        %v561 = vld [vmem:[%s8 + $0x58] sm:$0xff]
        %v562 = vld [vmem:[%s8 + $0x60] sm:$0xff]
        %v563 = vld [vmem:[%s8 + $0x68] sm:$0xff]
        %v564 = vld [vmem:[%s8 + $0x70] sm:$0xff]
        %v565 = vld [vmem:[%s8 + $0x78] sm:$0xff]
        %v566 = vld [vmem:[%s8 + $0x80] sm:$0xff]
        %v567 = vld [vmem:[%s8 + $0x88] sm:$0xff]
        %v568 = vld [vmem:[%s8 + $0x90] sm:$0xff]
        %v569 = vld [vmem:[%s8 + $0x98] sm:$0xff]
        %v570 = vld [vmem:[%s8 + $0xa0] sm:$0xff]
        %v571 = vld [vmem:[%s8 + $0xa8] sm:$0xff]
        %v572 = vld [vmem:[%s8 + $0xb0] sm:$0xff]
        %v573 = vld [vmem:[%s8 + $0xb8] sm:$0xff]
        %v574 = vld [vmem:[%s8 + $0xc0] sm:$0xff]
        %v575 = vld [vmem:[%s8 + $0xc8] sm:$0xff]
        %v576 = vld [vmem:[%s8 + $0xd0] sm:$0xff]
        %v577 = vld [vmem:[%s8 + $0xd8] sm:$0xff]
        %v578 = vld [vmem:[%s8 + $0xe0] sm:$0xff]
        %v579 = vld [vmem:[%s8 + $0xe8] sm:$0xff]
        %v580 = vld [vmem:[%s8 + $0xf0] sm:$0xff]
        %v581 = vld [vmem:[%s8 + $0xf8] sm:$0xff]
        %v582 = vld [vmem:[%s8 + $0x100] sm:$0xff]
        %v583 = vld [vmem:[%s8 + $0x108] sm:$0xff]
        %v584 = vld [vmem:[%s8 + $0x110] sm:$0xff]
        %v585 = vld [vmem:[%s8 + $0x118] sm:$0xff]
        %v586 = vld [vmem:[%s8 + $0x120] sm:$0xff]
        %v587 = vld [vmem:[%s8 + $0x128] sm:$0xff]
        %v588 = vld [vmem:[%s8 + $0x130] sm:$0xff]
        %v589 = vld [vmem:[%s8 + $0x138] sm:$0xff]
        %v590 = vld [vmem:[%s8 + $0x140] sm:$0xff]
        %v591 = vld [vmem:[%s8 + $0x148] sm:$0xff]
        %v592 = vld [vmem:[%s8 + $0x150] sm:$0xff]
        %v593 = vld [vmem:[%s8 + $0x158] sm:$0xff]
        %v594 = vld [vmem:[%s8 + $0x160] sm:$0xff]
        %v595 = vld [vmem:[%s8 + $0x168] sm:$0xff]
        %v596 = vld [vmem:[%s8 + $0x170] sm:$0xff]
        %v597 = vld [vmem:[%s8 + $0x178] sm:$0xff]
        %v598 = vld [vmem:[%s8 + $0x180] sm:$0xff]
        %v599 = vld [vmem:[%s8 + $0x188] sm:$0xff]
        %v600 = vld [vmem:[%s8 + $0x190] sm:$0xff]
        %v601 = vld [vmem:[%s8 + $0x198] sm:$0xff]
        %v602 = vld [vmem:[%s8 + $0x1a0] sm:$0xff]
        %v603 = vld [vmem:[%s8 + $0x1a8] sm:$0xff]
        %v604 = vld [vmem:[%s8 + $0x1b0] sm:$0xff]
        %v605 = vld [vmem:[%s8 + $0x1b8] sm:$0xff]
        %v606 = vld [vmem:[%s8 + $0x1c0] sm:$0xff]
        %v607 = vld [vmem:[%s8 + $0x1c8] sm:$0xff]
        %v608 = vld [vmem:[%s8 + $0x1d0] sm:$0xff]
        %v609 = vld [vmem:[%s8 + $0x1d8] sm:$0xff]
        %v610 = vld [vmem:[%s8 + $0x1e0] sm:$0xff]
        %v611 = vld [vmem:[%s8 + $0x1e8] sm:$0xff]
        %v612 = vld [vmem:[%s8 + $0x1f0] sm:$0xff]
        %v613 = vld [vmem:[%s8 + $0x1f8] sm:$0xff]
        %v614 = vld [vmem:[%s8 + $0x200] sm:$0xff]
        %v615 = vld [vmem:[%s8 + $0x208] sm:$0xff]
        %v616 = vld [vmem:[%s8 + $0x210] sm:$0xff]
        %v617 = vld [vmem:[%s8 + $0x218] sm:$0xff]
        %v618 = vld [vmem:[%s8 + $0x220] sm:$0xff]
        %v619 = vld [vmem:[%s8 + $0x228] sm:$0xff]
        %v620 = vld [vmem:[%s8 + $0x230] sm:$0xff]
        %v621 = vld [vmem:[%s8 + $0x238] sm:$0xff]
        %v622 = vld [vmem:[%s8 + $0x240] sm:$0xff]
        %v623 = vld [vmem:[%s8 + $0x248] sm:$0xff]
        %v624 = vld [vmem:[%s8 + $0x250] sm:$0xff]
        %v625 = vld [vmem:[%s8 + $0x258] sm:$0xff]
        %v626 = vld [vmem:[%s8 + $0x260] sm:$0xff]
        %v627 = vld [vmem:[%s8 + $0x268] sm:$0xff]
        %v628 = vld [vmem:[%s8 + $0x270] sm:$0xff]
        %v629 = vld [vmem:[%s8 + $0x278] sm:$0xff]
        %v630 = vld [vmem:[%s8 + $0x280] sm:$0xff]
        %v631 = vld [vmem:[%s8 + $0x288] sm:$0xff]
        %v632 = vld [vmem:[%s8 + $0x290] sm:$0xff]
        %v633 = vld [vmem:[%s8 + $0x298] sm:$0xff]
        %v634 = vld [vmem:[%s8 + $0x2a0] sm:$0xff]
        %v635 = vld [vmem:[%s8 + $0x2a8] sm:$0xff]
        %v636 = vld [vmem:[%s8 + $0x2b0] sm:$0xff]
        %v637 = vld [vmem:[%s8 + $0x2b8] sm:$0xff]
        %v638 = vld [vmem:[%s8 + $0x2c0] sm:$0xff]
        %v639 = vld [vmem:[%s8 + $0x2c8] sm:$0xff]
        %v640 = vld [vmem:[%s8 + $0x2d0] sm:$0xff]
        %v641 = vld [vmem:[%s8 + $0x2d8] sm:$0xff]
        %v642 = vld [vmem:[%s8 + $0x2e0] sm:$0xff]
        %v643 = vld [vmem:[%s8 + $0x2e8] sm:$0xff]
        %v644 = vld [vmem:[%s8 + $0x2f0] sm:$0xff]
        %v645 = vld [vmem:[%s8 + $0x2f8] sm:$0xff]
        %v646 = vld [vmem:[%s8 + $0x300] sm:$0xff]
        %v647 = vld [vmem:[%s8 + $0x308] sm:$0xff]
        %v648 = vld [vmem:[%s8 + $0x310] sm:$0xff]
        %v649 = vld [vmem:[%s8 + $0x318] sm:$0xff]
        %v650 = vld [vmem:[%s8 + $0x320] sm:$0xff]
        %v651 = vld [vmem:[%s8 + $0x328] sm:$0xff]
        %v652 = vld [vmem:[%s8 + $0x330] sm:$0xff]
        %v653 = vld [vmem:[%s8 + $0x338] sm:$0xff]
        %v654 = vld [vmem:[%s8 + $0x340] sm:$0xff]
        %v655 = vld [vmem:[%s8 + $0x348] sm:$0xff]
        %v656 = vld [vmem:[%s8 + $0x350] sm:$0xff]
        %v657 = vld [vmem:[%s8 + $0x358] sm:$0xff]
        %v658 = vld [vmem:[%s8 + $0x360] sm:$0xff]
        %v659 = vld [vmem:[%s8 + $0x368] sm:$0xff]
        %v660 = vld [vmem:[%s8 + $0x370] sm:$0xff]
        %v661 = vld [vmem:[%s8 + $0x378] sm:$0xff]
        %v662 = vld [vmem:[%s8 + $0x380] sm:$0xff]
        %v663 = vld [vmem:[%s8 + $0x388] sm:$0xff]
        %v664 = vld [vmem:[%s8 + $0x390] sm:$0xff]
        %v665 = vld [vmem:[%s8 + $0x398] sm:$0xff]
        %v666 = vld [vmem:[%s8 + $0x3a0] sm:$0xff]
        %v667 = vld [vmem:[%s8 + $0x3a8] sm:$0xff]
        %v668 = vld [vmem:[%s8 + $0x3b0] sm:$0xff]
        %v669 = vld [vmem:[%s8 + $0x3b8] sm:$0xff]
        %v670 = vld [vmem:[%s8 + $0x3c0] sm:$0xff]
        %v671 = vld [vmem:[%s8 + $0x3c8] sm:$0xff]
        %v672 = vld [vmem:[%s8 + $0x3d0] sm:$0xff]
        %v673 = vld [vmem:[%s8 + $0x3d8] sm:$0xff]
        %v674 = vld [vmem:[%s8 + $0x3e0] sm:$0xff]
        %v675 = vld [vmem:[%s8 + $0x3e8] sm:$0xff]
        %v676 = vld [vmem:[%s8 + $0x3f0] sm:$0xff]
        %v677 = vld [vmem:[%s8 + $0x3f8] sm:$0xff]
        %v678 = vld [vmem:[%s8 + $0x400] sm:$0xff]
        %v679 = vld [vmem:[%s8 + $0x408] sm:$0xff]
        %v680 = vld [vmem:[%s8 + $0x410] sm:$0xff]
        %v681 = vld [vmem:[%s8 + $0x418] sm:$0xff]
        %v682 = vld [vmem:[%s8 + $0x420] sm:$0xff]
        %v683 = vld [vmem:[%s8 + $0x428] sm:$0xff]
        %v684 = vld [vmem:[%s8 + $0x430] sm:$0xff]
        %v685 = vld [vmem:[%s8 + $0x438] sm:$0xff]
        %v686 = vld [vmem:[%s8 + $0x440] sm:$0xff]
        %v687 = vld [vmem:[%s8 + $0x448] sm:$0xff]
        %v688 = vld [vmem:[%s8 + $0x450] sm:$0xff]
        %v689 = vld [vmem:[%s8 + $0x458] sm:$0xff]
        %v690 = vld [vmem:[%s8 + $0x460] sm:$0xff]
        %v691 = vld [vmem:[%s8 + $0x468] sm:$0xff]
        %v692 = vld [vmem:[%s8 + $0x470] sm:$0xff]
        %v693 = vld [vmem:[%s8 + $0x478] sm:$0xff]
        %v694 = vld [vmem:[%s8 + $0x480] sm:$0xff]
        %v695 = vld [vmem:[%s8 + $0x488] sm:$0xff]
        %v696 = vld [vmem:[%s8 + $0x490] sm:$0xff]
        %v697 = vld [vmem:[%s8 + $0x498] sm:$0xff]
        %v698 = vld [vmem:[%s8 + $0x4a0] sm:$0xff]
        %v699 = vld [vmem:[%s8 + $0x4a8] sm:$0xff]
        %v700 = vld [vmem:[%s8 + $0x4b0] sm:$0xff]
        %v701 = vld [vmem:[%s8 + $0x4b8] sm:$0xff]
        %v702 = vld [vmem:[%s8 + $0x4c0] sm:$0xff]
        %v703 = vld [vmem:[%s8 + $0x4c8] sm:$0xff]
        %v704 = vld [vmem:[%s8 + $0x4d0] sm:$0xff]
        %v705 = vld [vmem:[%s8 + $0x4d8] sm:$0xff]
        %v706 = vld [vmem:[%s8 + $0x4e0] sm:$0xff]
        %v707 = vld [vmem:[%s8 + $0x4e8] sm:$0xff]
        %v708 = vld [vmem:[%s8 + $0x4f0] sm:$0xff]
        %v709 = vld [vmem:[%s8 + $0x4f8] sm:$0xff]
        %v712 = vlaneseq
        %v713 = vshrl.u32 %v712, 7
        %v714 = vsub.s32 0, %v713
        %v715 = vrot.slane %v548, %v714
        %v716 = vlaneseq
        %v717 = vshrl.u32 %v716, 7
        %v718 = vsub.s32 1, %v717
        %v719 = vrot.slane %v548, %v718
        %v720 = vlaneseq
        %v721 = vshrl.u32 %v720, 7
        %v722 = vsub.s32 2, %v721
        %v723 = vrot.slane %v548, %v722
        %v724 = vlaneseq
        %v725 = vshrl.u32 %v724, 7
        %v726 = vsub.s32 3, %v725
        %v727 = vrot.slane %v548, %v726
        %v728 = vlaneseq
        %v729 = vshrl.u32 %v728, 7
        %v730 = vsub.s32 4, %v729
        %v731 = vrot.slane %v548, %v730
        %v732 = vlaneseq
        %v733 = vshrl.u32 %v732, 7
        %v734 = vsub.s32 5, %v733
        %v735 = vrot.slane %v548, %v734
        %v736 = vlaneseq
        %v737 = vshrl.u32 %v736, 7
        %v738 = vsub.s32 6, %v737
        %v739 = vrot.slane %v548, %v738
        %v740 = vlaneseq
        %v741 = vshrl.u32 %v740, 7
        %v742 = vsub.s32 7, %v741
        %v743 = vrot.slane %v548, %v742
        %v744 = vlaneseq
        %v745 = vshrl.u32 %v744, 7
        %v746 = vsub.s32 0, %v745
        %v747 = vrot.slane %v549, %v746
        %v748 = vlaneseq
        %v749 = vshrl.u32 %v748, 7
        %v750 = vsub.s32 1, %v749
        %v751 = vrot.slane %v549, %v750
        %762 = vmatprep.subr.mxu0 0.0
        %763 = vmatpush1.msra.mxu0 %v550
        %764 = vmatprep.subr.mxu0 0.0
        %765 = vmatpush1.msra.mxu0 %v551
        %766 = vmatprep.subr.mxu0 0.0
        %767 = vmatpush1.msra.mxu0 %v552
        %768 = vmatprep.subr.mxu0 0.0
        %769 = vmatpush1.msra.mxu0 %v553
        %770 = vmatprep.subr.mxu0 0.0
        %771 = vmatpush1.msra.mxu0 %v554
        %772 = vmatprep.subr.mxu0 0.0
        %773 = vmatpush1.msra.mxu0 %v555
        %774 = vmatprep.subr.mxu0 0.0
        %775 = vmatpush1.msra.mxu0 %v556
        %776 = vmatprep.subr.mxu0 0.0
        %777 = vmatpush1.msra.mxu0 %v557
        %778 = vmatprep.subr.mxu0 0.0
        %779 = vmatpush1.msra.mxu0 %v558
        %780 = vmatprep.subr.mxu0 0.0
        %781 = vmatpush1.msra.mxu0 %v559
        %782 = vmatprep.subr.mxu0 0.0
        %783 = vmatpush1.msra.mxu0 %v560
        %784 = vmatprep.subr.mxu0 0.0
        %785 = vmatpush1.msra.mxu0 %v561
        %786 = vmatprep.subr.mxu0 0.0
        %787 = vmatpush1.msra.mxu0 %v562
        %788 = vmatprep.subr.mxu0 0.0
        %789 = vmatpush1.msra.mxu0 %v563
        %790 = vmatprep.subr.mxu0 0.0
        %791 = vmatpush1.msra.mxu0 %v564
        %792 = vmatprep.subr.mxu0 0.0
        %793 = vmatpush1.msra.mxu0 %v565
        %794 = vmatprep.subr.mxu0 0.0
        %795 = vmatpush1.msra.mxu0 %v566
        %796 = vmatprep.subr.mxu0 0.0
        %797 = vmatpush1.msra.mxu0 %v567
        %798 = vmatprep.subr.mxu0 0.0
        %799 = vmatpush1.msra.mxu0 %v568
        %800 = vmatprep.subr.mxu0 0.0
        %801 = vmatpush1.msra.mxu0 %v569
        %802 = vmatprep.subr.mxu0 0.0
        %803 = vmatpush1.msra.mxu0 %v570
        %804 = vmatprep.subr.mxu0 0.0
        %805 = vmatpush1.msra.mxu0 %v571
        %806 = vmatprep.subr.mxu0 0.0
        %807 = vmatpush1.msra.mxu0 %v572
        %808 = vmatprep.subr.mxu0 0.0
        %809 = vmatpush1.msra.mxu0 %v573
        %810 = vmatprep.subr.mxu0 0.0
        %811 = vmatpush1.msra.mxu0 %v574
        %812 = vmatprep.subr.mxu0 0.0
        %813 = vmatpush1.msra.mxu0 %v575
        %814 = vmatprep.subr.mxu0 0.0
        %815 = vmatpush1.msra.mxu0 %v576
        %816 = vmatprep.subr.mxu0 0.0
        %817 = vmatpush1.msra.mxu0 %v577
        %818 = vmatprep.subr.mxu0 0.0
        %819 = vmatpush1.msra.mxu0 %v578
        %820 = vmatprep.subr.mxu0 0.0
        %821 = vmatpush1.msra.mxu0 %v579
        %822 = vmatprep.subr.mxu0 0.0
        %823 = vmatpush1.msra.mxu0 %v580
        %824 = vmatprep.subr.mxu0 0.0
        %825 = vmatpush1.msra.mxu0 %v581
        %826 = vmatprep.mubr.f32.mxu0 %v719
        %827 = vmatmul.mubr.f32.gmra.mrb[0].mxu0 %v715
        %v828 = vpop.f32.mrb[0].mxu0
        %v829 = vadd.f32 0.0, %v828
        %v830 = vpop.f32.mrb[0].mxu0
        %831 = vdwg.mxu0
        %832 = vmatprep.subr.mxu0 0.0
        %833 = vmatpush1.msra.mxu0 %v582
        %834 = vmatprep.subr.mxu0 0.0
        %835 = vmatpush1.msra.mxu0 %v583
        %836 = vmatprep.subr.mxu0 0.0
        %837 = vmatpush1.msra.mxu0 %v584
        %838 = vmatprep.subr.mxu0 0.0
        %839 = vmatpush1.msra.mxu0 %v585
        %840 = vmatprep.subr.mxu0 0.0
        %841 = vmatpush1.msra.mxu0 %v586
        %842 = vmatprep.subr.mxu0 0.0
        %843 = vmatpush1.msra.mxu0 %v587
        %844 = vmatprep.subr.mxu0 0.0
        %845 = vmatpush1.msra.mxu0 %v588
        %846 = vmatprep.subr.mxu0 0.0
        %847 = vmatpush1.msra.mxu0 %v589
        %848 = vmatprep.subr.mxu0 0.0
        %849 = vmatpush1.msra.mxu0 %v590
        %850 = vmatprep.subr.mxu0 0.0
        %851 = vmatpush1.msra.mxu0 %v591
        %852 = vmatprep.subr.mxu0 0.0
        %853 = vmatpush1.msra.mxu0 %v592
        %854 = vmatprep.subr.mxu0 0.0
        %855 = vmatpush1.msra.mxu0 %v593
        %856 = vmatprep.subr.mxu0 0.0
        %857 = vmatpush1.msra.mxu0 %v594
        %858 = vmatprep.subr.mxu0 0.0
        %859 = vmatpush1.msra.mxu0 %v595
        %860 = vmatprep.subr.mxu0 0.0
        %861 = vmatpush1.msra.mxu0 %v596
        %862 = vmatprep.subr.mxu0 0.0
        %863 = vmatpush1.msra.mxu0 %v597
        %864 = vmatprep.subr.mxu0 0.0
        %865 = vmatpush1.msra.mxu0 %v598
        %866 = vmatprep.subr.mxu0 0.0
        %867 = vmatpush1.msra.mxu0 %v599
        %868 = vmatprep.subr.mxu0 0.0
        %869 = vmatpush1.msra.mxu0 %v600
        %870 = vmatprep.subr.mxu0 0.0
        %871 = vmatpush1.msra.mxu0 %v601
        %872 = vmatprep.subr.mxu0 0.0
        %873 = vmatpush1.msra.mxu0 %v602
        %874 = vmatprep.subr.mxu0 0.0
        %875 = vmatpush1.msra.mxu0 %v603
        %876 = vmatprep.subr.mxu0 0.0
        %877 = vmatpush1.msra.mxu0 %v604
        %878 = vmatprep.subr.mxu0 0.0
        %879 = vmatpush1.msra.mxu0 %v605
        %880 = vmatprep.subr.mxu0 0.0
        %881 = vmatpush1.msra.mxu0 %v606
        %882 = vmatprep.subr.mxu0 0.0
        %883 = vmatpush1.msra.mxu0 %v607
        %884 = vmatprep.subr.mxu0 0.0
        %885 = vmatpush1.msra.mxu0 %v608
        %886 = vmatprep.subr.mxu0 0.0
        %887 = vmatpush1.msra.mxu0 %v609
        %888 = vmatprep.subr.mxu0 0.0
        %889 = vmatpush1.msra.mxu0 %v610
        %890 = vmatprep.subr.mxu0 0.0
        %891 = vmatpush1.msra.mxu0 %v611
        %892 = vmatprep.subr.mxu0 0.0
        %893 = vmatpush1.msra.mxu0 %v612
        %894 = vmatprep.subr.mxu0 0.0
        %895 = vmatpush1.msra.mxu0 %v613
        %896 = vmatprep.mubr.f32.mxu0 %v727
        %897 = vmatmul.mubr.f32.gmra.mrb[0].mxu0 %v723
        %v898 = vpop.f32.mrb[0].mxu0
        %v899 = vadd.f32 %v829, %v898
        %v900 = vpop.f32.mrb[0].mxu0
        %901 = vdwg.mxu0
        %902 = vmatprep.subr.mxu0 0.0
        %903 = vmatpush1.msra.mxu0 %v614
        %904 = vmatprep.subr.mxu0 0.0
        %905 = vmatpush1.msra.mxu0 %v615
        %906 = vmatprep.subr.mxu0 0.0
        %907 = vmatpush1.msra.mxu0 %v616
        %908 = vmatprep.subr.mxu0 0.0
        %909 = vmatpush1.msra.mxu0 %v617
        %910 = vmatprep.subr.mxu0 0.0
        %911 = vmatpush1.msra.mxu0 %v618
        %912 = vmatprep.subr.mxu0 0.0
        %913 = vmatpush1.msra.mxu0 %v619
        %914 = vmatprep.subr.mxu0 0.0
        %915 = vmatpush1.msra.mxu0 %v620
        %916 = vmatprep.subr.mxu0 0.0
        %917 = vmatpush1.msra.mxu0 %v621
        %918 = vmatprep.subr.mxu0 0.0
        %919 = vmatpush1.msra.mxu0 %v622
        %920 = vmatprep.subr.mxu0 0.0
        %921 = vmatpush1.msra.mxu0 %v623
        %922 = vmatprep.subr.mxu0 0.0
        %923 = vmatpush1.msra.mxu0 %v624
        %924 = vmatprep.subr.mxu0 0.0
        %925 = vmatpush1.msra.mxu0 %v625
        %926 = vmatprep.subr.mxu0 0.0
        %927 = vmatpush1.msra.mxu0 %v626
        %928 = vmatprep.subr.mxu0 0.0
        %929 = vmatpush1.msra.mxu0 %v627
        %930 = vmatprep.subr.mxu0 0.0
        %931 = vmatpush1.msra.mxu0 %v628
        %932 = vmatprep.subr.mxu0 0.0
        %933 = vmatpush1.msra.mxu0 %v629
        %934 = vmatprep.subr.mxu0 0.0
        %935 = vmatpush1.msra.mxu0 %v630
        %936 = vmatprep.subr.mxu0 0.0
        %937 = vmatpush1.msra.mxu0 %v631
        %938 = vmatprep.subr.mxu0 0.0
        %939 = vmatpush1.msra.mxu0 %v632
        %940 = vmatprep.subr.mxu0 0.0
        %941 = vmatpush1.msra.mxu0 %v633
        %942 = vmatprep.subr.mxu0 0.0
        %943 = vmatpush1.msra.mxu0 %v634
        %944 = vmatprep.subr.mxu0 0.0
        %945 = vmatpush1.msra.mxu0 %v635
        %946 = vmatprep.subr.mxu0 0.0
        %947 = vmatpush1.msra.mxu0 %v636
        %948 = vmatprep.subr.mxu0 0.0
        %949 = vmatpush1.msra.mxu0 %v637
        %950 = vmatprep.subr.mxu0 0.0
        %951 = vmatpush1.msra.mxu0 %v638
        %952 = vmatprep.subr.mxu0 0.0
        %953 = vmatpush1.msra.mxu0 %v639
        %954 = vmatprep.subr.mxu0 0.0
        %955 = vmatpush1.msra.mxu0 %v640
        %956 = vmatprep.subr.mxu0 0.0
        %957 = vmatpush1.msra.mxu0 %v641
        %958 = vmatprep.subr.mxu0 0.0
        %959 = vmatpush1.msra.mxu0 %v642
        %960 = vmatprep.subr.mxu0 0.0
        %961 = vmatpush1.msra.mxu0 %v643
        %962 = vmatprep.subr.mxu0 0.0
        %963 = vmatpush1.msra.mxu0 %v644
        %964 = vmatprep.subr.mxu0 0.0
        %965 = vmatpush1.msra.mxu0 %v645
        %966 = vmatprep.mubr.f32.mxu0 %v735
        %967 = vmatmul.mubr.f32.gmra.mrb[0].mxu0 %v731
        %v968 = vpop.f32.mrb[0].mxu0
        %v969 = vadd.f32 %v899, %v968
        %v970 = vpop.f32.mrb[0].mxu0
        %971 = vdwg.mxu0
        %972 = vmatprep.subr.mxu0 0.0
        %973 = vmatpush1.msra.mxu0 %v646
        %974 = vmatprep.subr.mxu0 0.0
        %975 = vmatpush1.msra.mxu0 %v647
        %976 = vmatprep.subr.mxu0 0.0
        %977 = vmatpush1.msra.mxu0 %v648
        %978 = vmatprep.subr.mxu0 0.0
        %979 = vmatpush1.msra.mxu0 %v649
        %980 = vmatprep.subr.mxu0 0.0
        %981 = vmatpush1.msra.mxu0 %v650
        %982 = vmatprep.subr.mxu0 0.0
        %983 = vmatpush1.msra.mxu0 %v651
        %984 = vmatprep.subr.mxu0 0.0
        %985 = vmatpush1.msra.mxu0 %v652
        %986 = vmatprep.subr.mxu0 0.0
        %987 = vmatpush1.msra.mxu0 %v653
        %988 = vmatprep.subr.mxu0 0.0
        %989 = vmatpush1.msra.mxu0 %v654
        %990 = vmatprep.subr.mxu0 0.0
        %991 = vmatpush1.msra.mxu0 %v655
        %992 = vmatprep.subr.mxu0 0.0
        %993 = vmatpush1.msra.mxu0 %v656
        %994 = vmatprep.subr.mxu0 0.0
        %995 = vmatpush1.msra.mxu0 %v657
        %996 = vmatprep.subr.mxu0 0.0
        %997 = vmatpush1.msra.mxu0 %v658
        %998 = vmatprep.subr.mxu0 0.0
        %999 = vmatpush1.msra.mxu0 %v659
        %1000 = vmatprep.subr.mxu0 0.0
        %1001 = vmatpush1.msra.mxu0 %v660
        %1002 = vmatprep.subr.mxu0 0.0
        %1003 = vmatpush1.msra.mxu0 %v661
        %1004 = vmatprep.subr.mxu0 0.0
        %1005 = vmatpush1.msra.mxu0 %v662
        %1006 = vmatprep.subr.mxu0 0.0
        %1007 = vmatpush1.msra.mxu0 %v663
        %1008 = vmatprep.subr.mxu0 0.0
        %1009 = vmatpush1.msra.mxu0 %v664
        %1010 = vmatprep.subr.mxu0 0.0
        %1011 = vmatpush1.msra.mxu0 %v665
        %1012 = vmatprep.subr.mxu0 0.0
        %1013 = vmatpush1.msra.mxu0 %v666
        %1014 = vmatprep.subr.mxu0 0.0
        %1015 = vmatpush1.msra.mxu0 %v667
        %1016 = vmatprep.subr.mxu0 0.0
        %1017 = vmatpush1.msra.mxu0 %v668
        %1018 = vmatprep.subr.mxu0 0.0
        %1019 = vmatpush1.msra.mxu0 %v669
        %1020 = vmatprep.subr.mxu0 0.0
        %1021 = vmatpush1.msra.mxu0 %v670
        %1022 = vmatprep.subr.mxu0 0.0
        %1023 = vmatpush1.msra.mxu0 %v671
        %1024 = vmatprep.subr.mxu0 0.0
        %1025 = vmatpush1.msra.mxu0 %v672
        %1026 = vmatprep.subr.mxu0 0.0
        %1027 = vmatpush1.msra.mxu0 %v673
        %1028 = vmatprep.subr.mxu0 0.0
        %1029 = vmatpush1.msra.mxu0 %v674
        %1030 = vmatprep.subr.mxu0 0.0
        %1031 = vmatpush1.msra.mxu0 %v675
        %1032 = vmatprep.subr.mxu0 0.0
        %1033 = vmatpush1.msra.mxu0 %v676
        %1034 = vmatprep.subr.mxu0 0.0
        %1035 = vmatpush1.msra.mxu0 %v677
        %1036 = vmatprep.mubr.f32.mxu0 %v743
        %1037 = vmatmul.mubr.f32.gmra.mrb[0].mxu0 %v739
        %v1038 = vpop.f32.mrb[0].mxu0
        %v1039 = vadd.f32 %v969, %v1038
        %v1040 = vpop.f32.mrb[0].mxu0
        %1041 = vdwg.mxu0
        %1042 = vmatprep.subr.mxu0 0.0
        %1043 = vmatpush1.msra.mxu0 %v678
        %1044 = vmatprep.subr.mxu0 0.0
        %1045 = vmatpush1.msra.mxu0 %v679
        %1046 = vmatprep.subr.mxu0 0.0
        %1047 = vmatpush1.msra.mxu0 %v680
        %1048 = vmatprep.subr.mxu0 0.0
        %1049 = vmatpush1.msra.mxu0 %v681
        %1050 = vmatprep.subr.mxu0 0.0
        %1051 = vmatpush1.msra.mxu0 %v682
        %1052 = vmatprep.subr.mxu0 0.0
        %1053 = vmatpush1.msra.mxu0 %v683
        %1054 = vmatprep.subr.mxu0 0.0
        %1055 = vmatpush1.msra.mxu0 %v684
        %1056 = vmatprep.subr.mxu0 0.0
        %1057 = vmatpush1.msra.mxu0 %v685
        %1058 = vmatprep.subr.mxu0 0.0
        %1059 = vmatpush1.msra.mxu0 %v686
        %1060 = vmatprep.subr.mxu0 0.0
        %1061 = vmatpush1.msra.mxu0 %v687
        %1062 = vmatprep.subr.mxu0 0.0
        %1063 = vmatpush1.msra.mxu0 %v688
        %1064 = vmatprep.subr.mxu0 0.0
        %1065 = vmatpush1.msra.mxu0 %v689
        %1066 = vmatprep.subr.mxu0 0.0
        %1067 = vmatpush1.msra.mxu0 %v690
        %1068 = vmatprep.subr.mxu0 0.0
        %1069 = vmatpush1.msra.mxu0 %v691
        %1070 = vmatprep.subr.mxu0 0.0
        %1071 = vmatpush1.msra.mxu0 %v692
        %1072 = vmatprep.subr.mxu0 0.0
        %1073 = vmatpush1.msra.mxu0 %v693
        %1074 = vmatprep.subr.mxu0 0.0
        %1075 = vmatpush1.msra.mxu0 %v694
        %1076 = vmatprep.subr.mxu0 0.0
        %1077 = vmatpush1.msra.mxu0 %v695
        %1078 = vmatprep.subr.mxu0 0.0
        %1079 = vmatpush1.msra.mxu0 %v696
        %1080 = vmatprep.subr.mxu0 0.0
        %1081 = vmatpush1.msra.mxu0 %v697
        %1082 = vmatprep.subr.mxu0 0.0
        %1083 = vmatpush1.msra.mxu0 %v698
        %1084 = vmatprep.subr.mxu0 0.0
        %1085 = vmatpush1.msra.mxu0 %v699
        %1086 = vmatprep.subr.mxu0 0.0
        %1087 = vmatpush1.msra.mxu0 %v700
        %1088 = vmatprep.subr.mxu0 0.0
        %1089 = vmatpush1.msra.mxu0 %v701
        %1090 = vmatprep.subr.mxu0 0.0
        %1091 = vmatpush1.msra.mxu0 %v702
        %1092 = vmatprep.subr.mxu0 0.0
        %1093 = vmatpush1.msra.mxu0 %v703
        %1094 = vmatprep.subr.mxu0 0.0
        %1095 = vmatpush1.msra.mxu0 %v704
        %1096 = vmatprep.subr.mxu0 0.0
        %1097 = vmatpush1.msra.mxu0 %v705
        %1098 = vmatprep.subr.mxu0 0.0
        %1099 = vmatpush1.msra.mxu0 %v706
        %1100 = vmatprep.subr.mxu0 0.0
        %1101 = vmatpush1.msra.mxu0 %v707
        %1102 = vmatprep.subr.mxu0 0.0
        %1103 = vmatpush1.msra.mxu0 %v708
        %1104 = vmatprep.subr.mxu0 0.0
        %1105 = vmatpush1.msra.mxu0 %v709
        %1106 = vmatprep.mubr.f32.mxu0 %v751
        %1107 = vmatmul.mubr.f32.gmra.mrb[0].mxu0 %v747
        %v1108 = vpop.f32.mrb[0].mxu0
        %v1109 = vadd.f32 %v1039, %v1108
        %v1110 = vpop.f32.mrb[0].mxu0
        %1111 = vdwg.mxu0
        %v1112 = vld [vmem:[%s11] sm:$0x1]
        %v1113 = vld [vmem:[%s517] sm:$0xf]
        %v1114 = vld [vmem:[%s517 + $0x4] sm:$0xf]
        %v1115 = vld [vmem:[%s517 + $0x8] sm:$0xf]
        %v1116 = vld [vmem:[%s517 + $0xc] sm:$0xf]
        %v1117 = vld [vmem:[%s517 + $0x10] sm:$0xf]
        %v1118 = vld [vmem:[%s517 + $0x14] sm:$0xf]
        %v1119 = vld [vmem:[%s517 + $0x18] sm:$0xf]
        %v1120 = vld [vmem:[%s517 + $0x1c] sm:$0xf]
        %v1121 = vunpack.c.l.bf16 %v1113
        %v1122 = vunpack.c.l.bf16 %v1114
        %v1123 = vunpack.c.l.bf16 %v1115
        %v1124 = vunpack.c.l.bf16 %v1116
        %v1125 = vunpack.c.l.bf16 %v1117
        %v1126 = vunpack.c.l.bf16 %v1118
        %v1127 = vunpack.c.l.bf16 %v1119
        %v1128 = vunpack.c.l.bf16 %v1120
        %v1129 = vld [vmem:[%s9] sm:$0x1]
        %v1131 = vlaneseq
        %v1132 = vshrl.u32 %v1131, 7
        %v1133 = vsub.s32 0, %v1132
        %v1134 = vrot.slane %v1129, %v1133
        %v1136 = vmul.f32 %v1121, %v1134
        %v1137 = vmul.f32 %v1122, %v1134
        %v1138 = vmul.f32 %v1123, %v1134
        %v1139 = vmul.f32 %v1124, %v1134
        %v1140 = vmul.f32 %v1125, %v1134
        %v1141 = vmul.f32 %v1126, %v1134
        %v1142 = vmul.f32 %v1127, %v1134
        %v1143 = vmul.f32 %v1128, %v1134
        %vm1144 = vcmask 654336
        %v1145 = vsel %vm1144, %v1136, 0.0
        %1146 = vadd.xlane.f32.xlu0 %v1145
        %v1147 = vpop.xlane.xlu0 %1146
        %v1148 = vsel %vm1144, %v1137, 0.0
        %1149 = vadd.xlane.f32.xlu0 %v1148
        %v1150 = vpop.xlane.xlu0 %1149
        %v1151 = vsel %vm1144, %v1138, 0.0
        %1152 = vadd.xlane.f32.xlu0 %v1151
        %v1153 = vpop.xlane.xlu0 %1152
        %v1154 = vsel %vm1144, %v1139, 0.0
        %1155 = vadd.xlane.f32.xlu0 %v1154
        %v1156 = vpop.xlane.xlu0 %1155
        %v1157 = vsel %vm1144, %v1140, 0.0
        %1158 = vadd.xlane.f32.xlu0 %v1157
        %v1159 = vpop.xlane.xlu0 %1158
        %v1160 = vsel %vm1144, %v1141, 0.0
        %1161 = vadd.xlane.f32.xlu0 %v1160
        %v1162 = vpop.xlane.xlu0 %1161
        %v1163 = vsel %vm1144, %v1142, 0.0
        %1164 = vadd.xlane.f32.xlu0 %v1163
        %v1165 = vpop.xlane.xlu0 %1164
        %v1166 = vsel %vm1144, %v1143, 0.0
        %1167 = vadd.xlane.f32.xlu0 %v1166
        %v1168 = vpop.xlane.xlu0 %1167
        %v1169 = vlaneseq
        %v1170 = vshrl.u32 %v1169, 7
        %v1171 = vsub.s32 0, %v1170
        %v1172 = vrot.slane %v1109, %v1171
        %v1173 = vadd.f32 %v1147, %v1172
        %v1174 = vadd.f32 %v1150, %v1172
        %v1175 = vadd.f32 %v1153, %v1172
        %v1176 = vadd.f32 %v1156, %v1172
        %v1177 = vadd.f32 %v1159, %v1172
        %v1178 = vadd.f32 %v1162, %v1172
        %v1179 = vadd.f32 %v1165, %v1172
        %v1180 = vadd.f32 %v1168, %v1172
        %vm1181 = vcmask 7168
        %v1182 = vsel %vm1181, %v1173, -inf
        %v1183 = vsel %vm1181, %v1174, -inf
        %v1184 = vsel %vm1181, %v1175, -inf
        %v1185 = vsel %vm1181, %v1176, -inf
        %v1186 = vsel %vm1181, %v1177, -inf
        %v1187 = vmax.f32 %v1182, %v1186
        %v1188 = vsel %vm1181, %v1178, -inf
        %v1189 = vmax.f32 %v1183, %v1188
        %v1190 = vsel %vm1181, %v1179, -inf
        %v1191 = vmax.f32 %v1184, %v1190
        %v1192 = vsel %vm1181, %v1180, -inf
        %v1193 = vmax.f32 %v1185, %v1192
        %v1194 = vmax.f32 %v1187, %v1189
        %v1195 = vmax.f32 %v1191, %v1193
        %v1196 = vmax.f32 %v1194, %v1195
        %v1197 = vrot.slane %v1196, 4
        %v1198 = vmax.f32 %v1196, %v1197
        %v1199 = vrot.slane %v1198, 2
        %v1200 = vmax.f32 %v1198, %v1199
        %v1201 = vrot.slane %v1200, 1
        %v1202 = vmax.f32 %v1200, %v1201
        %v1203 = vsub.f32 %v1173, %v1202
        %v1204 = vsub.f32 %v1174, %v1202
        %v1205 = vsub.f32 %v1175, %v1202
        %v1206 = vsub.f32 %v1176, %v1202
        %v1207 = vsub.f32 %v1177, %v1202
        %v1208 = vsub.f32 %v1178, %v1202
        %v1209 = vsub.f32 %v1179, %v1202
        %v1210 = vsub.f32 %v1180, %v1202
        %v1211 = vmul.f32 %v1203, 1.442695
        %v1212 = vpow.pop %v1211
        %v1213 = vmul.f32 %v1204, 1.442695
        %v1214 = vpow.pop %v1213
        %v1215 = vmul.f32 %v1205, 1.442695
        %v1216 = vpow.pop %v1215
        %v1217 = vmul.f32 %v1206, 1.442695
        %v1218 = vpow.pop %v1217
        %v1219 = vmul.f32 %v1207, 1.442695
        %v1220 = vpow.pop %v1219
        %v1221 = vmul.f32 %v1208, 1.442695
        %v1222 = vpow.pop %v1221
        %v1223 = vmul.f32 %v1209, 1.442695
        %v1224 = vpow.pop %v1223
        %v1225 = vmul.f32 %v1210, 1.442695
        %v1226 = vpow.pop %v1225
        %v1227 = vsel %vm1181, %v1212, 0.0
        %v1228 = vsel %vm1181, %v1214, 0.0
        %v1229 = vadd.f32 %v1227, %v1228
        %v1230 = vsel %vm1181, %v1216, 0.0
        %v1231 = vadd.f32 %v1229, %v1230
        %v1232 = vsel %vm1181, %v1218, 0.0
        %v1233 = vadd.f32 %v1231, %v1232
        %v1234 = vsel %vm1181, %v1220, 0.0
        %v1235 = vadd.f32 %v1233, %v1234
        %v1236 = vsel %vm1181, %v1222, 0.0
        %v1237 = vadd.f32 %v1235, %v1236
        %v1238 = vsel %vm1181, %v1224, 0.0
        %v1239 = vadd.f32 %v1237, %v1238
        %v1240 = vsel %vm1181, %v1226, 0.0
        %v1241 = vadd.f32 %v1239, %v1240
        %v1242 = vrot.slane %v1241, 4
        %v1243 = vadd.f32 %v1241, %v1242
        %v1244 = vrot.slane %v1243, 2
        %v1245 = vadd.f32 %v1243, %v1244
        %v1246 = vrot.slane %v1245, 1
        %v1247 = vadd.f32 %v1245, %v1246
        %1249 = vset.pattern.permute.xlu0 0
        %1250 = vperm.xlu0 %1249, %v1212
        %v1251 = vpop.permute.xlu0 %1250
        %1254 = vset.pattern.permute.xlu0 0
        %1255 = vperm.xlu0 %1254, %v1214
        %v1256 = vpop.permute.xlu0 %1255
        %1259 = vset.pattern.permute.xlu0 0
        %1260 = vperm.xlu0 %1259, %v1216
        %v1261 = vpop.permute.xlu0 %1260
        %1264 = vset.pattern.permute.xlu0 0
        %1265 = vperm.xlu0 %1264, %v1218
        %v1266 = vpop.permute.xlu0 %1265
        %1269 = vset.pattern.permute.xlu0 0
        %1270 = vperm.xlu0 %1269, %v1220
        %v1271 = vpop.permute.xlu0 %1270
        %1274 = vset.pattern.permute.xlu0 0
        %1275 = vperm.xlu0 %1274, %v1222
        %v1276 = vpop.permute.xlu0 %1275
        %1279 = vset.pattern.permute.xlu0 0
        %1280 = vperm.xlu0 %1279, %v1224
        %v1281 = vpop.permute.xlu0 %1280
        %1284 = vset.pattern.permute.xlu0 0
        %1285 = vperm.xlu0 %1284, %v1226
        %v1286 = vpop.permute.xlu0 %1285
        %v1288 = vmul.f32 %v1251, %v1121
        %v1289 = vmul.f32 %v1256, %v1122
        %v1290 = vmul.f32 %v1261, %v1123
        %v1291 = vmul.f32 %v1266, %v1124
        %v1292 = vmul.f32 %v1271, %v1125
        %v1293 = vmul.f32 %v1276, %v1126
        %v1294 = vmul.f32 %v1281, %v1127
        %v1295 = vmul.f32 %v1286, %v1128
        %v1296 = vsel %vm1144, %v1288, 0.0
        %v1297 = vsel %vm1144, %v1289, 0.0
        %v1298 = vadd.f32 %v1296, %v1297
        %v1299 = vsel %vm1144, %v1290, 0.0
        %v1300 = vadd.f32 %v1298, %v1299
        %v1301 = vsel %vm1144, %v1291, 0.0
        %v1302 = vadd.f32 %v1300, %v1301
        %v1303 = vsel %vm1144, %v1292, 0.0
        %v1304 = vadd.f32 %v1302, %v1303
        %v1305 = vsel %vm1144, %v1293, 0.0
        %v1306 = vadd.f32 %v1304, %v1305
        %v1307 = vsel %vm1144, %v1294, 0.0
        %v1308 = vadd.f32 %v1306, %v1307
        %v1309 = vsel %vm1144, %v1295, 0.0
        %v1310 = vadd.f32 %v1308, %v1309
        %v1311 = vrot.slane %v1310, 4
        %v1312 = vadd.f32 %v1310, %v1311
        %v1313 = vrot.slane %v1312, 2
        %v1314 = vadd.f32 %v1312, %v1313
        %v1315 = vrot.slane %v1314, 1
        %v1316 = vadd.f32 %v1314, %v1315
        %v1317 = vrcp.pop %v1247
        %1319 = vset.pattern.permute.xlu0 0
        %1320 = vperm.xlu0 %1319, %v1317
        %v1321 = vpop.permute.xlu0 %1320
        %v1323 = vmul.f32 %v1316, %v1321
        %v1324 = vld [vmem:[%s10] sm:$0xff]
        %v1325 = vld [vmem:[%s10 + $0x8] sm:$0xff]
        %v1326 = vld [vmem:[%s10 + $0x10] sm:$0xff]
        %v1327 = vld [vmem:[%s10 + $0x18] sm:$0xff]
        %v1328 = vld [vmem:[%s10 + $0x20] sm:$0xff]
        %v1329 = vld [vmem:[%s10 + $0x28] sm:$0xff]
        %v1330 = vld [vmem:[%s10 + $0x30] sm:$0xff]
        %v1331 = vld [vmem:[%s10 + $0x38] sm:$0xff]
        %v1332 = vld [vmem:[%s10 + $0x40] sm:$0xff]
        %v1333 = vld [vmem:[%s10 + $0x48] sm:$0xff]
        %v1335 = vsel %vm1144, %v1323, 0
        %1337 = vmatprep.subr.mxu0 0.0
        %1338 = vmatpush1.msra.mxu0 %v1324
        %1339 = vmatprep.subr.mxu0 0.0
        %1340 = vmatpush1.msra.mxu0 %v1325
        %1341 = vmatprep.subr.mxu0 0.0
        %1342 = vmatpush1.msra.mxu0 %v1326
        %1343 = vmatprep.subr.mxu0 0.0
        %1344 = vmatpush1.msra.mxu0 %v1327
        %1345 = vmatprep.subr.mxu0 0.0
        %1346 = vmatpush1.msra.mxu0 %v1328
        %1347 = vmatprep.subr.mxu0 0.0
        %1348 = vmatpush1.msra.mxu0 %v1329
        %1349 = vmatprep.subr.mxu0 0.0
        %1350 = vmatpush1.msra.mxu0 %v1330
        %1351 = vmatprep.subr.mxu0 0.0
        %1352 = vmatpush1.msra.mxu0 %v1331
        %1353 = vmatprep.subr.mxu0 0.0
        %1354 = vmatpush1.msra.mxu0 %v1332
        %1355 = vmatprep.subr.mxu0 0.0
        %1356 = vmatpush1.msra.mxu0 %v1333
        %1357 = vmatprep.subr.mxu0 0.0
        %1358 = vmatpush1.msra.mxu0 0.0
        %1359 = vmatprep.subr.mxu0 0.0
        %1360 = vmatpush1.msra.mxu0 0.0
        %1361 = vmatprep.subr.mxu0 0.0
        %1362 = vmatpush1.msra.mxu0 0.0
        %1363 = vmatprep.subr.mxu0 0.0
        %1364 = vmatpush1.msra.mxu0 0.0
        %1365 = vmatprep.subr.mxu0 0.0
        %1366 = vmatpush1.msra.mxu0 0.0
        %1367 = vmatprep.subr.mxu0 0.0
        %1368 = vmatpush1.msra.mxu0 0.0
        %1369 = vmatprep.subr.mxu0 0.0
        %1370 = vmatpush1.msra.mxu0 0.0
        %1371 = vmatprep.subr.mxu0 0.0
        %1372 = vmatpush1.msra.mxu0 0.0
        %1373 = vmatprep.subr.mxu0 0.0
        %1374 = vmatpush1.msra.mxu0 0.0
        %1375 = vmatprep.subr.mxu0 0.0
        %1376 = vmatpush1.msra.mxu0 0.0
        %1377 = vmatprep.subr.mxu0 0.0
        %1378 = vmatpush1.msra.mxu0 0.0
        %1379 = vmatprep.subr.mxu0 0.0
        %1380 = vmatpush1.msra.mxu0 0.0
        %1381 = vmatprep.subr.mxu0 0.0
        %1382 = vmatpush1.msra.mxu0 0.0
        %1383 = vmatprep.subr.mxu0 0.0
        %1384 = vmatpush1.msra.mxu0 0.0
        %1385 = vmatprep.subr.mxu0 0.0
        %1386 = vmatpush1.msra.mxu0 0.0
        %1387 = vmatprep.subr.mxu0 0.0
        %1388 = vmatpush1.msra.mxu0 0.0
        %1389 = vmatprep.subr.mxu0 0.0
        %1390 = vmatpush1.msra.mxu0 0.0
        %1391 = vmatprep.subr.mxu0 0.0
        %1392 = vmatpush1.msra.mxu0 0.0
        %1393 = vmatprep.subr.mxu0 0.0
        %1394 = vmatpush1.msra.mxu0 0.0
        %1395 = vmatprep.subr.mxu0 0.0
        %1396 = vmatpush1.msra.mxu0 0.0
        %1397 = vmatprep.subr.mxu0 0.0
        %1398 = vmatpush1.msra.mxu0 0.0
        %1399 = vmatprep.subr.mxu0 0.0
        %1400 = vmatpush1.msra.mxu0 0.0
        %1401 = vmatprep.mubr.f32.mxu0 0.0
        %1402 = vmatmul.mubr.f32.gmra.mrb[0].mxu0 %v1335
        %v1403 = vpop.f32.mrb[0].mxu0
        %v1404 = vadd.f32 0.0, %v1403
        %v1405 = vpop.f32.mrb[0].mxu0
        %1406 = vdwg.mxu0
        %v1407 = vadd.f32 %v1112, %v1404
        %v1408 = vld [vmem:[%s522] sm:$0xf]
        %v1409 = vld [vmem:[%s522 + $0x4] sm:$0xf]
        %v1410 = vld [vmem:[%s522 + $0x8] sm:$0xf]
        %v1411 = vld [vmem:[%s522 + $0xc] sm:$0xf]
        %v1412 = vld [vmem:[%s522 + $0x10] sm:$0xf]
        %v1413 = vld [vmem:[%s522 + $0x14] sm:$0xf]
        %v1414 = vld [vmem:[%s522 + $0x18] sm:$0xf]
        %v1415 = vld [vmem:[%s522 + $0x1c] sm:$0xf]
        %v1416 = vunpack.c.l.bf16 %v1408
        %v1417 = vunpack.c.l.bf16 %v1409
        %v1418 = vunpack.c.l.bf16 %v1410
        %v1419 = vunpack.c.l.bf16 %v1411
        %v1420 = vunpack.c.l.bf16 %v1412
        %v1421 = vunpack.c.l.bf16 %v1413
        %v1422 = vunpack.c.l.bf16 %v1414
        %v1423 = vunpack.c.l.bf16 %v1415
        %v1424 = vld [vmem:[%s9] sm:$0x3]
        %v1426 = vlaneseq
        %v1427 = vshrl.u32 %v1426, 7
        %v1428 = vsub.s32 0, %v1427
        %v1429 = vrot.slane %v1424, %v1428
        %v1430 = vlaneseq
        %v1431 = vshrl.u32 %v1430, 7
        %v1432 = vsub.s32 1, %v1431
        %v1433 = vrot.slane %v1424, %v1432
        %1434 = vrot.lane.b32.xlu0 %v1429, 48
        %v1435 = vpop.permute.xlu0 %1434
        %1436 = vrot.lane.b32.xlu0 %v1433, 48
        %v1437 = vpop.permute.xlu0 %1436
        %vm1438 = vcmask 392192
        %v1439 = vsel %vm1438, %v1435, %v1437
        %v1441 = vmul.f32 %v1416, %v1439
        %v1442 = vmul.f32 %v1417, %v1439
        %v1443 = vmul.f32 %v1418, %v1439
        %v1444 = vmul.f32 %v1419, %v1439
        %v1445 = vmul.f32 %v1420, %v1439
        %v1446 = vmul.f32 %v1421, %v1439
        %v1447 = vmul.f32 %v1422, %v1439
        %v1448 = vmul.f32 %v1423, %v1439
        %vm1449 = vcmask 916480
        %v1450 = vsel %vm1449, %v1441, 0.0
        %1451 = vadd.xlane.f32.xlu0 %v1450
        %v1452 = vpop.xlane.xlu0 %1451
        %v1453 = vsel %vm1449, %v1442, 0.0
        %1454 = vadd.xlane.f32.xlu0 %v1453
        %v1455 = vpop.xlane.xlu0 %1454
        %v1456 = vsel %vm1449, %v1443, 0.0
        %1457 = vadd.xlane.f32.xlu0 %v1456
        %v1458 = vpop.xlane.xlu0 %1457
        %v1459 = vsel %vm1449, %v1444, 0.0
        %1460 = vadd.xlane.f32.xlu0 %v1459
        %v1461 = vpop.xlane.xlu0 %1460
        %v1462 = vsel %vm1449, %v1445, 0.0
        %1463 = vadd.xlane.f32.xlu0 %v1462
        %v1464 = vpop.xlane.xlu0 %1463
        %v1465 = vsel %vm1449, %v1446, 0.0
        %1466 = vadd.xlane.f32.xlu0 %v1465
        %v1467 = vpop.xlane.xlu0 %1466
        %v1468 = vsel %vm1449, %v1447, 0.0
        %1469 = vadd.xlane.f32.xlu0 %v1468
        %v1470 = vpop.xlane.xlu0 %1469
        %v1471 = vsel %vm1449, %v1448, 0.0
        %1472 = vadd.xlane.f32.xlu0 %v1471
        %v1473 = vpop.xlane.xlu0 %1472
        %v1474 = vadd.f32 %v1452, %v1172
        %v1475 = vadd.f32 %v1455, %v1172
        %v1476 = vadd.f32 %v1458, %v1172
        %v1477 = vadd.f32 %v1461, %v1172
        %v1478 = vadd.f32 %v1464, %v1172
        %v1479 = vadd.f32 %v1467, %v1172
        %v1480 = vadd.f32 %v1470, %v1172
        %v1481 = vadd.f32 %v1473, %v1172
        %vm1482 = vcmask 15368
        %v1483 = vsel %vm1482, %v1474, -inf
        %v1484 = vsel %vm1482, %v1475, -inf
        %v1485 = vsel %vm1482, %v1476, -inf
        %v1486 = vsel %vm1482, %v1477, -inf
        %v1487 = vsel %vm1482, %v1478, -inf
        %v1488 = vmax.f32 %v1483, %v1487
        %v1489 = vsel %vm1482, %v1479, -inf
        %v1490 = vmax.f32 %v1484, %v1489
        %v1491 = vsel %vm1482, %v1480, -inf
        %v1492 = vmax.f32 %v1485, %v1491
        %v1493 = vsel %vm1482, %v1481, -inf
        %v1494 = vmax.f32 %v1486, %v1493
        %v1495 = vmax.f32 %v1488, %v1490
        %v1496 = vmax.f32 %v1492, %v1494
        %v1497 = vmax.f32 %v1495, %v1496
        %v1498 = vrot.slane %v1497, 4
        %v1499 = vmax.f32 %v1497, %v1498
        %v1500 = vrot.slane %v1499, 2
        %v1501 = vmax.f32 %v1499, %v1500
        %v1502 = vrot.slane %v1501, 1
        %v1503 = vmax.f32 %v1501, %v1502
        %v1504 = vsub.f32 %v1474, %v1503
        %v1505 = vsub.f32 %v1475, %v1503
        %v1506 = vsub.f32 %v1476, %v1503
        %v1507 = vsub.f32 %v1477, %v1503
        %v1508 = vsub.f32 %v1478, %v1503
        %v1509 = vsub.f32 %v1479, %v1503
        %v1510 = vsub.f32 %v1480, %v1503
        %v1511 = vsub.f32 %v1481, %v1503
        %v1512 = vmul.f32 %v1504, 1.442695
        %v1513 = vpow.pop %v1512
        %v1514 = vmul.f32 %v1505, 1.442695
        %v1515 = vpow.pop %v1514
        %v1516 = vmul.f32 %v1506, 1.442695
        %v1517 = vpow.pop %v1516
        %v1518 = vmul.f32 %v1507, 1.442695
        %v1519 = vpow.pop %v1518
        %v1520 = vmul.f32 %v1508, 1.442695
        %v1521 = vpow.pop %v1520
        %v1522 = vmul.f32 %v1509, 1.442695
        %v1523 = vpow.pop %v1522
        %v1524 = vmul.f32 %v1510, 1.442695
        %v1525 = vpow.pop %v1524
        %v1526 = vmul.f32 %v1511, 1.442695
        %v1527 = vpow.pop %v1526
        %v1528 = vsel %vm1482, %v1513, 0.0
        %v1529 = vsel %vm1482, %v1515, 0.0
        %v1530 = vadd.f32 %v1528, %v1529
        %v1531 = vsel %vm1482, %v1517, 0.0
        %v1532 = vadd.f32 %v1530, %v1531
        %v1533 = vsel %vm1482, %v1519, 0.0
        %v1534 = vadd.f32 %v1532, %v1533
        %v1535 = vsel %vm1482, %v1521, 0.0
        %v1536 = vadd.f32 %v1534, %v1535
        %v1537 = vsel %vm1482, %v1523, 0.0
        %v1538 = vadd.f32 %v1536, %v1537
        %v1539 = vsel %vm1482, %v1525, 0.0
        %v1540 = vadd.f32 %v1538, %v1539
        %v1541 = vsel %vm1482, %v1527, 0.0
        %v1542 = vadd.f32 %v1540, %v1541
        %v1543 = vrot.slane %v1542, 4
        %v1544 = vadd.f32 %v1542, %v1543
        %v1545 = vrot.slane %v1544, 2
        %v1546 = vadd.f32 %v1544, %v1545
        %v1547 = vrot.slane %v1546, 1
        %v1548 = vadd.f32 %v1546, %v1547
        %1550 = vset.pattern.permute.xlu0 1
        %1551 = vperm.xlu0 %1550, %v1513
        %v1552 = vpop.permute.xlu0 %1551
        %1555 = vset.pattern.permute.xlu0 1
        %1556 = vperm.xlu0 %1555, %v1515
        %v1557 = vpop.permute.xlu0 %1556
        %1560 = vset.pattern.permute.xlu0 1
        %1561 = vperm.xlu0 %1560, %v1517
        %v1562 = vpop.permute.xlu0 %1561
        %1565 = vset.pattern.permute.xlu0 1
        %1566 = vperm.xlu0 %1565, %v1519
        %v1567 = vpop.permute.xlu0 %1566
        %1570 = vset.pattern.permute.xlu0 1
        %1571 = vperm.xlu0 %1570, %v1521
        %v1572 = vpop.permute.xlu0 %1571
        %1575 = vset.pattern.permute.xlu0 1
        %1576 = vperm.xlu0 %1575, %v1523
        %v1577 = vpop.permute.xlu0 %1576
        %1580 = vset.pattern.permute.xlu0 1
        %1581 = vperm.xlu0 %1580, %v1525
        %v1582 = vpop.permute.xlu0 %1581
        %1585 = vset.pattern.permute.xlu0 1
        %1586 = vperm.xlu0 %1585, %v1527
        %v1587 = vpop.permute.xlu0 %1586
        %v1589 = vmul.f32 %v1552, %v1416
        %v1590 = vmul.f32 %v1557, %v1417
        %v1591 = vmul.f32 %v1562, %v1418
        %v1592 = vmul.f32 %v1567, %v1419
        %v1593 = vmul.f32 %v1572, %v1420
        %v1594 = vmul.f32 %v1577, %v1421
        %v1595 = vmul.f32 %v1582, %v1422
        %v1596 = vmul.f32 %v1587, %v1423
        %v1597 = vsel %vm1449, %v1589, 0.0
        %v1598 = vsel %vm1449, %v1590, 0.0
        %v1599 = vadd.f32 %v1597, %v1598
        %v1600 = vsel %vm1449, %v1591, 0.0
        %v1601 = vadd.f32 %v1599, %v1600
        %v1602 = vsel %vm1449, %v1592, 0.0
        %v1603 = vadd.f32 %v1601, %v1602
        %v1604 = vsel %vm1449, %v1593, 0.0
        %v1605 = vadd.f32 %v1603, %v1604
        %v1606 = vsel %vm1449, %v1594, 0.0
        %v1607 = vadd.f32 %v1605, %v1606
        %v1608 = vsel %vm1449, %v1595, 0.0
        %v1609 = vadd.f32 %v1607, %v1608
        %v1610 = vsel %vm1449, %v1596, 0.0
        %v1611 = vadd.f32 %v1609, %v1610
        %v1612 = vrot.slane %v1611, 4
        %v1613 = vadd.f32 %v1611, %v1612
        %v1614 = vrot.slane %v1613, 2
        %v1615 = vadd.f32 %v1613, %v1614
        %v1616 = vrot.slane %v1615, 1
        %v1617 = vadd.f32 %v1615, %v1616
        %v1618 = vrcp.pop %v1548
        %1620 = vset.pattern.permute.xlu0 1
        %1621 = vperm.xlu0 %1620, %v1618
        %v1622 = vpop.permute.xlu0 %1621
        %v1624 = vmul.f32 %v1617, %v1622
        %v1625 = vld [vmem:[%s10 + $0x50] sm:$0xff]
        %v1626 = vld [vmem:[%s10 + $0x58] sm:$0xff]
        %v1627 = vld [vmem:[%s10 + $0x60] sm:$0xff]
        %v1628 = vld [vmem:[%s10 + $0x68] sm:$0xff]
        %v1629 = vld [vmem:[%s10 + $0x70] sm:$0xff]
        %v1630 = vld [vmem:[%s10 + $0x78] sm:$0xff]
        %v1631 = vld [vmem:[%s10 + $0x80] sm:$0xff]
        %v1632 = vld [vmem:[%s10 + $0x88] sm:$0xff]
        %v1633 = vld [vmem:[%s10 + $0x90] sm:$0xff]
        %v1634 = vld [vmem:[%s10 + $0x98] sm:$0xff]
        %v1635 = vld [vmem:[%s10 + $0xa0] sm:$0xff]
        %v1636 = vld [vmem:[%s10 + $0xa8] sm:$0xff]
        %v1637 = vld [vmem:[%s10 + $0xb0] sm:$0xff]
        %v1638 = vld [vmem:[%s10 + $0xb8] sm:$0xff]
        %v1640 = vsel %vm1449, %v1624, 0
        %1642 = vmatprep.subr.mxu0 0.0
        %1643 = vmatpush1.msra.mxu0 %v1625
        %1644 = vmatprep.subr.mxu0 0.0
        %1645 = vmatpush1.msra.mxu0 %v1626
        %1646 = vmatprep.subr.mxu0 0.0
        %1647 = vmatpush1.msra.mxu0 %v1627
        %1648 = vmatprep.subr.mxu0 0.0
        %1649 = vmatpush1.msra.mxu0 %v1628
        %1650 = vmatprep.subr.mxu0 0.0
        %1651 = vmatpush1.msra.mxu0 %v1629
        %1652 = vmatprep.subr.mxu0 0.0
        %1653 = vmatpush1.msra.mxu0 %v1630
        %1654 = vmatprep.subr.mxu0 0.0
        %1655 = vmatpush1.msra.mxu0 %v1631
        %1656 = vmatprep.subr.mxu0 0.0
        %1657 = vmatpush1.msra.mxu0 %v1632
        %1658 = vmatprep.subr.mxu0 0.0
        %1659 = vmatpush1.msra.mxu0 %v1633
        %1660 = vmatprep.subr.mxu0 0.0
        %1661 = vmatpush1.msra.mxu0 %v1634
        %1662 = vmatprep.subr.mxu0 0.0
        %1663 = vmatpush1.msra.mxu0 %v1635
        %1664 = vmatprep.subr.mxu0 0.0
        %1665 = vmatpush1.msra.mxu0 %v1636
        %1666 = vmatprep.subr.mxu0 0.0
        %1667 = vmatpush1.msra.mxu0 %v1637
        %1668 = vmatprep.subr.mxu0 0.0
        %1669 = vmatpush1.msra.mxu0 %v1638
        %1670 = vmatprep.subr.mxu0 0.0
        %1671 = vmatpush1.msra.mxu0 0.0
        %1672 = vmatprep.subr.mxu0 0.0
        %1673 = vmatpush1.msra.mxu0 0.0
        %1674 = vmatprep.subr.mxu0 0.0
        %1675 = vmatpush1.msra.mxu0 0.0
        %1676 = vmatprep.subr.mxu0 0.0
        %1677 = vmatpush1.msra.mxu0 0.0
        %1678 = vmatprep.subr.mxu0 0.0
        %1679 = vmatpush1.msra.mxu0 0.0
        %1680 = vmatprep.subr.mxu0 0.0
        %1681 = vmatpush1.msra.mxu0 0.0
        %1682 = vmatprep.subr.mxu0 0.0
        %1683 = vmatpush1.msra.mxu0 0.0
        %1684 = vmatprep.subr.mxu0 0.0
        %1685 = vmatpush1.msra.mxu0 0.0
        %1686 = vmatprep.subr.mxu0 0.0
        %1687 = vmatpush1.msra.mxu0 0.0
        %1688 = vmatprep.subr.mxu0 0.0
        %1689 = vmatpush1.msra.mxu0 0.0
        %1690 = vmatprep.subr.mxu0 0.0
        %1691 = vmatpush1.msra.mxu0 0.0
        %1692 = vmatprep.subr.mxu0 0.0
        %1693 = vmatpush1.msra.mxu0 0.0
        %1694 = vmatprep.subr.mxu0 0.0
        %1695 = vmatpush1.msra.mxu0 0.0
        %1696 = vmatprep.subr.mxu0 0.0
        %1697 = vmatpush1.msra.mxu0 0.0
        %1698 = vmatprep.subr.mxu0 0.0
        %1699 = vmatpush1.msra.mxu0 0.0
        %1700 = vmatprep.subr.mxu0 0.0
        %1701 = vmatpush1.msra.mxu0 0.0
        %1702 = vmatprep.subr.mxu0 0.0
        %1703 = vmatpush1.msra.mxu0 0.0
        %1704 = vmatprep.subr.mxu0 0.0
        %1705 = vmatpush1.msra.mxu0 0.0
        %1706 = vmatprep.mubr.f32.mxu0 0.0
        %1707 = vmatmul.mubr.f32.gmra.mrb[0].mxu0 %v1640
        %v1708 = vpop.f32.mrb[0].mxu0
        %v1709 = vadd.f32 0.0, %v1708
        %v1710 = vpop.f32.mrb[0].mxu0
        %1711 = vdwg.mxu0
        %v1712 = vadd.f32 %v1407, %v1709
        %v1713 = vld [vmem:[%s527] sm:$0xff]
        %v1714 = vld [vmem:[%s527 + $0x8] sm:$0xff]
        %v1715 = vunpack.c.l.bf16 %v1713
        %v1716 = vunpack.c.h.bf16 %v1713
        %v1717 = vunpack.c.l.bf16 %v1714
        %v1718 = vunpack.c.h.bf16 %v1714
        %v1719 = vld [vmem:[%s9 + $0x1] sm:$0x3]
        %v1721 = vlaneseq
        %v1722 = vshrl.u32 %v1721, 7
        %v1723 = vsub.s32 0, %v1722
        %v1724 = vrot.slane %v1719, %v1723
        %v1725 = vlaneseq
        %v1726 = vshrl.u32 %v1725, 7
        %v1727 = vsub.s32 1, %v1726
        %v1728 = vrot.slane %v1719, %v1727
        %1729 = vrot.lane.b32.xlu0 %v1724, 64
        %v1730 = vpop.permute.xlu0 %1729
        %1731 = vrot.lane.b32.xlu0 %v1728, 64
        %v1732 = vpop.permute.xlu0 %1731
        %vm1733 = vcmask 523264
        %v1734 = vsel %vm1733, %v1730, %v1732
        %v1737 = vmul.f32 %v1715, %v1734
        %v1738 = vmul.f32 %v1716, %v1732
        %v1739 = vmul.f32 %v1717, %v1734
        %v1740 = vmul.f32 %v1718, %v1732
        %v1741 = vsel %vm1733, %v1738, 0.0
        %v1742 = vadd.f32 %v1737, %v1741
        %1743 = vadd.xlane.f32.xlu0 %v1742
        %v1744 = vpop.xlane.xlu0 %1743
        %v1745 = vsel %vm1733, %v1740, 0.0
        %v1746 = vadd.f32 %v1739, %v1745
        %1747 = vadd.xlane.f32.xlu0 %v1746
        %v1748 = vpop.xlane.xlu0 %1747
        %v1749 = vadd.f32 %v1744, %v1172
        %v1750 = vadd.f32 %v1748, %v1172
        %vm1751 = vcmask 23568
        %v1752 = vsel %vm1751, %v1749, -inf
        %v1753 = vsel %vm1751, %v1750, -inf
        %v1754 = vmax.f32 %v1752, %v1753
        %v1755 = vrot.slane %v1754, 4
        %v1756 = vmax.f32 %v1754, %v1755
        %v1757 = vrot.slane %v1756, 2
        %v1758 = vmax.f32 %v1756, %v1757
        %v1759 = vrot.slane %v1758, 1
        %v1760 = vmax.f32 %v1758, %v1759
        %v1761 = vsub.f32 %v1749, %v1760
        %v1762 = vsub.f32 %v1750, %v1760
        %v1763 = vmul.f32 %v1761, 1.442695
        %v1764 = vpow.pop %v1763
        %v1765 = vmul.f32 %v1762, 1.442695
        %v1766 = vpow.pop %v1765
        %v1767 = vsel %vm1751, %v1764, 0.0
        %v1768 = vsel %vm1751, %v1766, 0.0
        %v1769 = vadd.f32 %v1767, %v1768
        %v1770 = vrot.slane %v1769, 4
        %v1771 = vadd.f32 %v1769, %v1770
        %v1772 = vrot.slane %v1771, 2
        %v1773 = vadd.f32 %v1771, %v1772
        %v1774 = vrot.slane %v1773, 1
        %v1775 = vadd.f32 %v1773, %v1774
        %1777 = vset.pattern.permute.xlu0 2
        %1778 = vperm.xlu0 %1777, %v1764
        %v1779 = vpop.permute.xlu0 %1778
        %1782 = vset.pattern.permute.xlu0 2
        %1783 = vperm.xlu0 %1782, %v1766
        %v1784 = vpop.permute.xlu0 %1783
        %v1786 = vmul.f32 %v1779, %v1715
        %v1787 = vmul.f32 %v1779, %v1716
        %v1788 = vmul.f32 %v1784, %v1717
        %v1789 = vmul.f32 %v1784, %v1718
        %v1790 = vadd.f32 %v1786, %v1788
        %v1791 = vrot.slane %v1790, 4
        %v1792 = vadd.f32 %v1790, %v1791
        %v1793 = vrot.slane %v1792, 2
        %v1794 = vadd.f32 %v1792, %v1793
        %v1795 = vrot.slane %v1794, 1
        %v1796 = vadd.f32 %v1794, %v1795
        %v1797 = vsel %vm1733, %v1787, 0.0
        %v1798 = vsel %vm1733, %v1789, 0.0
        %v1799 = vadd.f32 %v1797, %v1798
        %v1800 = vrot.slane %v1799, 4
        %v1801 = vadd.f32 %v1799, %v1800
        %v1802 = vrot.slane %v1801, 2
        %v1803 = vadd.f32 %v1801, %v1802
        %v1804 = vrot.slane %v1803, 1
        %v1805 = vadd.f32 %v1803, %v1804
        %v1806 = vrcp.pop %v1775
        %1808 = vset.pattern.permute.xlu0 2
        %1809 = vperm.xlu0 %1808, %v1806
        %v1810 = vpop.permute.xlu0 %1809
        %v1812 = vmul.f32 %v1796, %v1810
        %v1813 = vmul.f32 %v1805, %v1810
        %v1814 = vld [vmem:[%s10 + $0xc0] sm:$0xff]
        %v1815 = vld [vmem:[%s10 + $0xc8] sm:$0xff]
        %v1816 = vld [vmem:[%s10 + $0xd0] sm:$0xff]
        %v1817 = vld [vmem:[%s10 + $0xd8] sm:$0xff]
        %v1818 = vld [vmem:[%s10 + $0xe0] sm:$0xff]
        %v1819 = vld [vmem:[%s10 + $0xe8] sm:$0xff]
        %v1820 = vld [vmem:[%s10 + $0xf0] sm:$0xff]
        %v1821 = vld [vmem:[%s10 + $0xf8] sm:$0xff]
        %v1822 = vld [vmem:[%s10 + $0x100] sm:$0xff]
        %v1823 = vld [vmem:[%s10 + $0x108] sm:$0xff]
        %v1824 = vld [vmem:[%s10 + $0x110] sm:$0xff]
        %v1825 = vld [vmem:[%s10 + $0x118] sm:$0xff]
        %v1826 = vld [vmem:[%s10 + $0x120] sm:$0xff]
        %v1827 = vld [vmem:[%s10 + $0x128] sm:$0xff]
        %v1828 = vld [vmem:[%s10 + $0x130] sm:$0xff]
        %v1829 = vld [vmem:[%s10 + $0x138] sm:$0xff]
        %v1830 = vld [vmem:[%s10 + $0x140] sm:$0xff]
        %v1831 = vld [vmem:[%s10 + $0x148] sm:$0xff]
        %v1832 = vld [vmem:[%s10 + $0x150] sm:$0xff]
        %v1833 = vld [vmem:[%s10 + $0x158] sm:$0xff]
        %v1834 = vld [vmem:[%s10 + $0x160] sm:$0xff]
        %v1835 = vld [vmem:[%s10 + $0x168] sm:$0xff]
        %v1836 = vld [vmem:[%s10 + $0x170] sm:$0xff]
        %v1837 = vld [vmem:[%s10 + $0x178] sm:$0xff]
        %v1839 = vsel %vm1733, %v1813, 0
        %1841 = vmatprep.subr.mxu0 0.0
        %1842 = vmatpush1.msra.mxu0 %v1814
        %1843 = vmatprep.subr.mxu0 0.0
        %1844 = vmatpush1.msra.mxu0 %v1815
        %1845 = vmatprep.subr.mxu0 0.0
        %1846 = vmatpush1.msra.mxu0 %v1816
        %1847 = vmatprep.subr.mxu0 0.0
        %1848 = vmatpush1.msra.mxu0 %v1817
        %1849 = vmatprep.subr.mxu0 0.0
        %1850 = vmatpush1.msra.mxu0 %v1818
        %1851 = vmatprep.subr.mxu0 0.0
        %1852 = vmatpush1.msra.mxu0 %v1819
        %1853 = vmatprep.subr.mxu0 0.0
        %1854 = vmatpush1.msra.mxu0 %v1820
        %1855 = vmatprep.subr.mxu0 0.0
        %1856 = vmatpush1.msra.mxu0 %v1821
        %1857 = vmatprep.subr.mxu0 0.0
        %1858 = vmatpush1.msra.mxu0 %v1822
        %1859 = vmatprep.subr.mxu0 0.0
        %1860 = vmatpush1.msra.mxu0 %v1823
        %1861 = vmatprep.subr.mxu0 0.0
        %1862 = vmatpush1.msra.mxu0 %v1824
        %1863 = vmatprep.subr.mxu0 0.0
        %1864 = vmatpush1.msra.mxu0 %v1825
        %1865 = vmatprep.subr.mxu0 0.0
        %1866 = vmatpush1.msra.mxu0 %v1826
        %1867 = vmatprep.subr.mxu0 0.0
        %1868 = vmatpush1.msra.mxu0 %v1827
        %1869 = vmatprep.subr.mxu0 0.0
        %1870 = vmatpush1.msra.mxu0 %v1828
        %1871 = vmatprep.subr.mxu0 0.0
        %1872 = vmatpush1.msra.mxu0 %v1829
        %1873 = vmatprep.subr.mxu0 0.0
        %1874 = vmatpush1.msra.mxu0 %v1830
        %1875 = vmatprep.subr.mxu0 0.0
        %1876 = vmatpush1.msra.mxu0 %v1831
        %1877 = vmatprep.subr.mxu0 0.0
        %1878 = vmatpush1.msra.mxu0 %v1832
        %1879 = vmatprep.subr.mxu0 0.0
        %1880 = vmatpush1.msra.mxu0 %v1833
        %1881 = vmatprep.subr.mxu0 0.0
        %1882 = vmatpush1.msra.mxu0 %v1834
        %1883 = vmatprep.subr.mxu0 0.0
        %1884 = vmatpush1.msra.mxu0 %v1835
        %1885 = vmatprep.subr.mxu0 0.0
        %1886 = vmatpush1.msra.mxu0 %v1836
        %1887 = vmatprep.subr.mxu0 0.0
        %1888 = vmatpush1.msra.mxu0 %v1837
        %1889 = vmatprep.subr.mxu0 0.0
        %1890 = vmatpush1.msra.mxu0 0.0
        %1891 = vmatprep.subr.mxu0 0.0
        %1892 = vmatpush1.msra.mxu0 0.0
        %1893 = vmatprep.subr.mxu0 0.0
        %1894 = vmatpush1.msra.mxu0 0.0
        %1895 = vmatprep.subr.mxu0 0.0
        %1896 = vmatpush1.msra.mxu0 0.0
        %1897 = vmatprep.subr.mxu0 0.0
        %1898 = vmatpush1.msra.mxu0 0.0
        %1899 = vmatprep.subr.mxu0 0.0
        %1900 = vmatpush1.msra.mxu0 0.0
        %1901 = vmatprep.subr.mxu0 0.0
        %1902 = vmatpush1.msra.mxu0 0.0
        %1903 = vmatprep.subr.mxu0 0.0
        %1904 = vmatpush1.msra.mxu0 0.0
        %1905 = vmatprep.mubr.f32.mxu0 %v1839
        %1906 = vmatmul.mubr.f32.gmra.mrb[0].mxu0 %v1812
        %v1907 = vpop.f32.mrb[0].mxu0
        %v1908 = vadd.f32 0.0, %v1907
        %v1909 = vpop.f32.mrb[0].mxu0
        %1910 = vdwg.mxu0
        %v1911 = vadd.f32 %v1712, %v1908
        %v1912 = vld [vmem:[%s532] sm:$0xff]
        %v1913 = vld [vmem:[%s532 + $0x8] sm:$0xff]
        %v1914 = vunpack.c.l.bf16 %v1912
        %v1915 = vunpack.c.h.bf16 %v1912
        %v1916 = vunpack.c.l.bf16 %v1913
        %v1917 = vunpack.c.h.bf16 %v1913
        %v1918 = vld [vmem:[%s9 + $0x3] sm:$0x3]
        %v1920 = vlaneseq
        %v1921 = vshrl.u32 %v1920, 7
        %v1922 = vsub.s32 0, %v1921
        %v1923 = vrot.slane %v1918, %v1922
        %v1924 = vlaneseq
        %v1925 = vshrl.u32 %v1924, 7
        %v1926 = vsub.s32 1, %v1925
        %v1927 = vrot.slane %v1918, %v1926
        %v1930 = vmul.f32 %v1914, %v1923
        %v1931 = vmul.f32 %v1915, %v1927
        %v1932 = vmul.f32 %v1916, %v1923
        %v1933 = vmul.f32 %v1917, %v1927
        %v1934 = vsel %vm1733, %v1931, 0.0
        %v1935 = vadd.f32 %v1930, %v1934
        %1936 = vadd.xlane.f32.xlu0 %v1935
        %v1937 = vpop.xlane.xlu0 %1936
        %v1938 = vsel %vm1733, %v1933, 0.0
        %v1939 = vadd.f32 %v1932, %v1938
        %1940 = vadd.xlane.f32.xlu0 %v1939
        %v1941 = vpop.xlane.xlu0 %1940
        %v1942 = vadd.f32 %v1937, %v1172
        %v1943 = vadd.f32 %v1941, %v1172
        %vm1944 = vcmask 31768
        %v1945 = vsel %vm1944, %v1942, -inf
        %v1946 = vsel %vm1944, %v1943, -inf
        %v1947 = vmax.f32 %v1945, %v1946
        %v1948 = vrot.slane %v1947, 4
        %v1949 = vmax.f32 %v1947, %v1948
        %v1950 = vrot.slane %v1949, 2
        %v1951 = vmax.f32 %v1949, %v1950
        %v1952 = vrot.slane %v1951, 1
        %v1953 = vmax.f32 %v1951, %v1952
        %v1954 = vsub.f32 %v1942, %v1953
        %v1955 = vsub.f32 %v1943, %v1953
        %v1956 = vmul.f32 %v1954, 1.442695
        %v1957 = vpow.pop %v1956
        %v1958 = vmul.f32 %v1955, 1.442695
        %v1959 = vpow.pop %v1958
        %v1960 = vsel %vm1944, %v1957, 0.0
        %v1961 = vsel %vm1944, %v1959, 0.0
        %v1962 = vadd.f32 %v1960, %v1961
        %v1963 = vrot.slane %v1962, 4
        %v1964 = vadd.f32 %v1962, %v1963
        %v1965 = vrot.slane %v1964, 2
        %v1966 = vadd.f32 %v1964, %v1965
        %v1967 = vrot.slane %v1966, 1
        %v1968 = vadd.f32 %v1966, %v1967
        %1970 = vset.pattern.permute.xlu0 3
        %1971 = vperm.xlu0 %1970, %v1957
        %v1972 = vpop.permute.xlu0 %1971
        %1975 = vset.pattern.permute.xlu0 3
        %1976 = vperm.xlu0 %1975, %v1959
        %v1977 = vpop.permute.xlu0 %1976
        %v1979 = vmul.f32 %v1972, %v1914
        %v1980 = vmul.f32 %v1972, %v1915
        %v1981 = vmul.f32 %v1977, %v1916
        %v1982 = vmul.f32 %v1977, %v1917
        %v1983 = vadd.f32 %v1979, %v1981
        %v1984 = vrot.slane %v1983, 4
        %v1985 = vadd.f32 %v1983, %v1984
        %v1986 = vrot.slane %v1985, 2
        %v1987 = vadd.f32 %v1985, %v1986
        %v1988 = vrot.slane %v1987, 1
        %v1989 = vadd.f32 %v1987, %v1988
        %v1990 = vsel %vm1733, %v1980, 0.0
        %v1991 = vsel %vm1733, %v1982, 0.0
        %v1992 = vadd.f32 %v1990, %v1991
        %v1993 = vrot.slane %v1992, 4
        %v1994 = vadd.f32 %v1992, %v1993
        %v1995 = vrot.slane %v1994, 2
        %v1996 = vadd.f32 %v1994, %v1995
        %v1997 = vrot.slane %v1996, 1
        %v1998 = vadd.f32 %v1996, %v1997
        %v1999 = vrcp.pop %v1968
        %2001 = vset.pattern.permute.xlu0 3
        %2002 = vperm.xlu0 %2001, %v1999
        %v2003 = vpop.permute.xlu0 %2002
        %v2005 = vmul.f32 %v1989, %v2003
        %v2006 = vmul.f32 %v1998, %v2003
        %v2007 = vld [vmem:[%s10 + $0x180] sm:$0xff]
        %v2008 = vld [vmem:[%s10 + $0x188] sm:$0xff]
        %v2009 = vld [vmem:[%s10 + $0x190] sm:$0xff]
        %v2010 = vld [vmem:[%s10 + $0x198] sm:$0xff]
        %v2011 = vld [vmem:[%s10 + $0x1a0] sm:$0xff]
        %v2012 = vld [vmem:[%s10 + $0x1a8] sm:$0xff]
        %v2013 = vld [vmem:[%s10 + $0x1b0] sm:$0xff]
        %v2014 = vld [vmem:[%s10 + $0x1b8] sm:$0xff]
        %v2015 = vld [vmem:[%s10 + $0x1c0] sm:$0xff]
        %v2016 = vld [vmem:[%s10 + $0x1c8] sm:$0xff]
        %v2017 = vld [vmem:[%s10 + $0x1d0] sm:$0xff]
        %v2018 = vld [vmem:[%s10 + $0x1d8] sm:$0xff]
        %v2019 = vld [vmem:[%s10 + $0x1e0] sm:$0xff]
        %v2020 = vld [vmem:[%s10 + $0x1e8] sm:$0xff]
        %v2021 = vld [vmem:[%s10 + $0x1f0] sm:$0xff]
        %v2022 = vld [vmem:[%s10 + $0x1f8] sm:$0xff]
        %v2023 = vld [vmem:[%s10 + $0x200] sm:$0xff]
        %v2024 = vld [vmem:[%s10 + $0x208] sm:$0xff]
        %v2025 = vld [vmem:[%s10 + $0x210] sm:$0xff]
        %v2026 = vld [vmem:[%s10 + $0x218] sm:$0xff]
        %v2027 = vld [vmem:[%s10 + $0x220] sm:$0xff]
        %v2028 = vld [vmem:[%s10 + $0x228] sm:$0xff]
        %v2029 = vld [vmem:[%s10 + $0x230] sm:$0xff]
        %v2030 = vld [vmem:[%s10 + $0x238] sm:$0xff]
        %v2032 = vsel %vm1733, %v2006, 0
        %2034 = vmatprep.subr.mxu0 0.0
        %2035 = vmatpush1.msra.mxu0 %v2007
        %2036 = vmatprep.subr.mxu0 0.0
        %2037 = vmatpush1.msra.mxu0 %v2008
        %2038 = vmatprep.subr.mxu0 0.0
        %2039 = vmatpush1.msra.mxu0 %v2009
        %2040 = vmatprep.subr.mxu0 0.0
        %2041 = vmatpush1.msra.mxu0 %v2010
        %2042 = vmatprep.subr.mxu0 0.0
        %2043 = vmatpush1.msra.mxu0 %v2011
        %2044 = vmatprep.subr.mxu0 0.0
        %2045 = vmatpush1.msra.mxu0 %v2012
        %2046 = vmatprep.subr.mxu0 0.0
        %2047 = vmatpush1.msra.mxu0 %v2013
        %2048 = vmatprep.subr.mxu0 0.0
        %2049 = vmatpush1.msra.mxu0 %v2014
        %2050 = vmatprep.subr.mxu0 0.0
        %2051 = vmatpush1.msra.mxu0 %v2015
        %2052 = vmatprep.subr.mxu0 0.0
        %2053 = vmatpush1.msra.mxu0 %v2016
        %2054 = vmatprep.subr.mxu0 0.0
        %2055 = vmatpush1.msra.mxu0 %v2017
        %2056 = vmatprep.subr.mxu0 0.0
        %2057 = vmatpush1.msra.mxu0 %v2018
        %2058 = vmatprep.subr.mxu0 0.0
        %2059 = vmatpush1.msra.mxu0 %v2019
        %2060 = vmatprep.subr.mxu0 0.0
        %2061 = vmatpush1.msra.mxu0 %v2020
        %2062 = vmatprep.subr.mxu0 0.0
        %2063 = vmatpush1.msra.mxu0 %v2021
        %2064 = vmatprep.subr.mxu0 0.0
        %2065 = vmatpush1.msra.mxu0 %v2022
        %2066 = vmatprep.subr.mxu0 0.0
        %2067 = vmatpush1.msra.mxu0 %v2023
        %2068 = vmatprep.subr.mxu0 0.0
        %2069 = vmatpush1.msra.mxu0 %v2024
        %2070 = vmatprep.subr.mxu0 0.0
        %2071 = vmatpush1.msra.mxu0 %v2025
        %2072 = vmatprep.subr.mxu0 0.0
        %2073 = vmatpush1.msra.mxu0 %v2026
        %2074 = vmatprep.subr.mxu0 0.0
        %2075 = vmatpush1.msra.mxu0 %v2027
        %2076 = vmatprep.subr.mxu0 0.0
        %2077 = vmatpush1.msra.mxu0 %v2028
        %2078 = vmatprep.subr.mxu0 0.0
        %2079 = vmatpush1.msra.mxu0 %v2029
        %2080 = vmatprep.subr.mxu0 0.0
        %2081 = vmatpush1.msra.mxu0 %v2030
        %2082 = vmatprep.subr.mxu0 0.0
        %2083 = vmatpush1.msra.mxu0 0.0
        %2084 = vmatprep.subr.mxu0 0.0
        %2085 = vmatpush1.msra.mxu0 0.0
        %2086 = vmatprep.subr.mxu0 0.0
        %2087 = vmatpush1.msra.mxu0 0.0
        %2088 = vmatprep.subr.mxu0 0.0
        %2089 = vmatpush1.msra.mxu0 0.0
        %2090 = vmatprep.subr.mxu0 0.0
        %2091 = vmatpush1.msra.mxu0 0.0
        %2092 = vmatprep.subr.mxu0 0.0
        %2093 = vmatpush1.msra.mxu0 0.0
        %2094 = vmatprep.subr.mxu0 0.0
        %2095 = vmatpush1.msra.mxu0 0.0
        %2096 = vmatprep.subr.mxu0 0.0
        %2097 = vmatpush1.msra.mxu0 0.0
        %2098 = vmatprep.mubr.f32.mxu0 %v2032
        %2099 = vmatmul.mubr.f32.gmra.mrb[0].mxu0 %v2005
        %v2100 = vpop.f32.mrb[0].mxu0
        %v2101 = vadd.f32 0.0, %v2100
        %v2102 = vpop.f32.mrb[0].mxu0
        %2103 = vdwg.mxu0
        %v2104 = vadd.f32 %v1911, %v2101
        %v2105 = vld [vmem:[%s537] sm:$0xff]
        %v2106 = vld [vmem:[%s537 + $0x8] sm:$0xff]
        %v2107 = vunpack.c.l.bf16 %v2105
        %v2108 = vunpack.c.h.bf16 %v2105
        %v2109 = vunpack.c.l.bf16 %v2106
        %v2110 = vunpack.c.h.bf16 %v2106
        %v2111 = vld [vmem:[%s9 + $0x4] sm:$0x3]
        %v2113 = vlaneseq
        %v2114 = vshrl.u32 %v2113, 7
        %v2115 = vsub.s32 0, %v2114
        %v2116 = vrot.slane %v2111, %v2115
        %v2117 = vlaneseq
        %v2118 = vshrl.u32 %v2117, 7
        %v2119 = vsub.s32 1, %v2118
        %v2120 = vrot.slane %v2111, %v2119
        %2121 = vrot.lane.b32.xlu0 %v2116, 64
        %v2122 = vpop.permute.xlu0 %2121
        %2123 = vrot.lane.b32.xlu0 %v2120, 64
        %v2124 = vpop.permute.xlu0 %2123
        %v2125 = vsel %vm1733, %v2122, %v2124
        %v2128 = vmul.f32 %v2107, %v2125
        %v2129 = vmul.f32 %v2108, %v2124
        %v2130 = vmul.f32 %v2109, %v2125
        %v2131 = vmul.f32 %v2110, %v2124
        %v2132 = vsel %vm1733, %v2129, 0.0
        %v2133 = vadd.f32 %v2128, %v2132
        %2134 = vadd.xlane.f32.xlu0 %v2133
        %v2135 = vpop.xlane.xlu0 %2134
        %v2136 = vsel %vm1733, %v2131, 0.0
        %v2137 = vadd.f32 %v2130, %v2136
        %2138 = vadd.xlane.f32.xlu0 %v2137
        %v2139 = vpop.xlane.xlu0 %2138
        %v2140 = vadd.f32 %v2135, %v1172
        %v2141 = vadd.f32 %v2139, %v1172
        %vm2142 = vcmask 39968
        %v2143 = vsel %vm2142, %v2140, -inf
        %v2144 = vsel %vm2142, %v2141, -inf
        %v2145 = vmax.f32 %v2143, %v2144
        %v2146 = vrot.slane %v2145, 4
        %v2147 = vmax.f32 %v2145, %v2146
        %v2148 = vrot.slane %v2147, 2
        %v2149 = vmax.f32 %v2147, %v2148
        %v2150 = vrot.slane %v2149, 1
        %v2151 = vmax.f32 %v2149, %v2150
        %v2152 = vsub.f32 %v2140, %v2151
        %v2153 = vsub.f32 %v2141, %v2151
        %v2154 = vmul.f32 %v2152, 1.442695
        %v2155 = vpow.pop %v2154
        %v2156 = vmul.f32 %v2153, 1.442695
        %v2157 = vpow.pop %v2156
        %v2158 = vsel %vm2142, %v2155, 0.0
        %v2159 = vsel %vm2142, %v2157, 0.0
        %v2160 = vadd.f32 %v2158, %v2159
        %v2161 = vrot.slane %v2160, 4
        %v2162 = vadd.f32 %v2160, %v2161
        %v2163 = vrot.slane %v2162, 2
        %v2164 = vadd.f32 %v2162, %v2163
        %v2165 = vrot.slane %v2164, 1
        %v2166 = vadd.f32 %v2164, %v2165
        %2168 = vset.pattern.permute.xlu0 4
        %2169 = vperm.xlu0 %2168, %v2155
        %v2170 = vpop.permute.xlu0 %2169
        %2173 = vset.pattern.permute.xlu0 4
        %2174 = vperm.xlu0 %2173, %v2157
        %v2175 = vpop.permute.xlu0 %2174
        %v2177 = vmul.f32 %v2170, %v2107
        %v2178 = vmul.f32 %v2170, %v2108
        %v2179 = vmul.f32 %v2175, %v2109
        %v2180 = vmul.f32 %v2175, %v2110
        %v2181 = vadd.f32 %v2177, %v2179
        %v2182 = vrot.slane %v2181, 4
        %v2183 = vadd.f32 %v2181, %v2182
        %v2184 = vrot.slane %v2183, 2
        %v2185 = vadd.f32 %v2183, %v2184
        %v2186 = vrot.slane %v2185, 1
        %v2187 = vadd.f32 %v2185, %v2186
        %v2188 = vsel %vm1733, %v2178, 0.0
        %v2189 = vsel %vm1733, %v2180, 0.0
        %v2190 = vadd.f32 %v2188, %v2189
        %v2191 = vrot.slane %v2190, 4
        %v2192 = vadd.f32 %v2190, %v2191
        %v2193 = vrot.slane %v2192, 2
        %v2194 = vadd.f32 %v2192, %v2193
        %v2195 = vrot.slane %v2194, 1
        %v2196 = vadd.f32 %v2194, %v2195
        %v2197 = vrcp.pop %v2166
        %2199 = vset.pattern.permute.xlu0 4
        %2200 = vperm.xlu0 %2199, %v2197
        %v2201 = vpop.permute.xlu0 %2200
        %v2203 = vmul.f32 %v2187, %v2201
        %v2204 = vmul.f32 %v2196, %v2201
        %v2205 = vld [vmem:[%s10 + $0x240] sm:$0xff]
        %v2206 = vld [vmem:[%s10 + $0x248] sm:$0xff]
        %v2207 = vld [vmem:[%s10 + $0x250] sm:$0xff]
        %v2208 = vld [vmem:[%s10 + $0x258] sm:$0xff]
        %v2209 = vld [vmem:[%s10 + $0x260] sm:$0xff]
        %v2210 = vld [vmem:[%s10 + $0x268] sm:$0xff]
        %v2211 = vld [vmem:[%s10 + $0x270] sm:$0xff]
        %v2212 = vld [vmem:[%s10 + $0x278] sm:$0xff]
        %v2213 = vld [vmem:[%s10 + $0x280] sm:$0xff]
        %v2214 = vld [vmem:[%s10 + $0x288] sm:$0xff]
        %v2215 = vld [vmem:[%s10 + $0x290] sm:$0xff]
        %v2216 = vld [vmem:[%s10 + $0x298] sm:$0xff]
        %v2217 = vld [vmem:[%s10 + $0x2a0] sm:$0xff]
        %v2218 = vld [vmem:[%s10 + $0x2a8] sm:$0xff]
        %v2219 = vld [vmem:[%s10 + $0x2b0] sm:$0xff]
        %v2220 = vld [vmem:[%s10 + $0x2b8] sm:$0xff]
        %v2221 = vld [vmem:[%s10 + $0x2c0] sm:$0xff]
        %v2222 = vld [vmem:[%s10 + $0x2c8] sm:$0xff]
        %v2223 = vld [vmem:[%s10 + $0x2d0] sm:$0xff]
        %v2224 = vld [vmem:[%s10 + $0x2d8] sm:$0xff]
        %v2225 = vld [vmem:[%s10 + $0x2e0] sm:$0xff]
        %v2226 = vld [vmem:[%s10 + $0x2e8] sm:$0xff]
        %v2227 = vld [vmem:[%s10 + $0x2f0] sm:$0xff]
        %v2228 = vld [vmem:[%s10 + $0x2f8] sm:$0xff]
        %v2230 = vsel %vm1733, %v2204, 0
        %2232 = vmatprep.subr.mxu0 0.0
        %2233 = vmatpush1.msra.mxu0 %v2205
        %2234 = vmatprep.subr.mxu0 0.0
        %2235 = vmatpush1.msra.mxu0 %v2206
        %2236 = vmatprep.subr.mxu0 0.0
        %2237 = vmatpush1.msra.mxu0 %v2207
        %2238 = vmatprep.subr.mxu0 0.0
        %2239 = vmatpush1.msra.mxu0 %v2208
        %2240 = vmatprep.subr.mxu0 0.0
        %2241 = vmatpush1.msra.mxu0 %v2209
        %2242 = vmatprep.subr.mxu0 0.0
        %2243 = vmatpush1.msra.mxu0 %v2210
        %2244 = vmatprep.subr.mxu0 0.0
        %2245 = vmatpush1.msra.mxu0 %v2211
        %2246 = vmatprep.subr.mxu0 0.0
        %2247 = vmatpush1.msra.mxu0 %v2212
        %2248 = vmatprep.subr.mxu0 0.0
        %2249 = vmatpush1.msra.mxu0 %v2213
        %2250 = vmatprep.subr.mxu0 0.0
        %2251 = vmatpush1.msra.mxu0 %v2214
        %2252 = vmatprep.subr.mxu0 0.0
        %2253 = vmatpush1.msra.mxu0 %v2215
        %2254 = vmatprep.subr.mxu0 0.0
        %2255 = vmatpush1.msra.mxu0 %v2216
        %2256 = vmatprep.subr.mxu0 0.0
        %2257 = vmatpush1.msra.mxu0 %v2217
        %2258 = vmatprep.subr.mxu0 0.0
        %2259 = vmatpush1.msra.mxu0 %v2218
        %2260 = vmatprep.subr.mxu0 0.0
        %2261 = vmatpush1.msra.mxu0 %v2219
        %2262 = vmatprep.subr.mxu0 0.0
        %2263 = vmatpush1.msra.mxu0 %v2220
        %2264 = vmatprep.subr.mxu0 0.0
        %2265 = vmatpush1.msra.mxu0 %v2221
        %2266 = vmatprep.subr.mxu0 0.0
        %2267 = vmatpush1.msra.mxu0 %v2222
        %2268 = vmatprep.subr.mxu0 0.0
        %2269 = vmatpush1.msra.mxu0 %v2223
        %2270 = vmatprep.subr.mxu0 0.0
        %2271 = vmatpush1.msra.mxu0 %v2224
        %2272 = vmatprep.subr.mxu0 0.0
        %2273 = vmatpush1.msra.mxu0 %v2225
        %2274 = vmatprep.subr.mxu0 0.0
        %2275 = vmatpush1.msra.mxu0 %v2226
        %2276 = vmatprep.subr.mxu0 0.0
        %2277 = vmatpush1.msra.mxu0 %v2227
        %2278 = vmatprep.subr.mxu0 0.0
        %2279 = vmatpush1.msra.mxu0 %v2228
        %2280 = vmatprep.subr.mxu0 0.0
        %2281 = vmatpush1.msra.mxu0 0.0
        %2282 = vmatprep.subr.mxu0 0.0
        %2283 = vmatpush1.msra.mxu0 0.0
        %2284 = vmatprep.subr.mxu0 0.0
        %2285 = vmatpush1.msra.mxu0 0.0
        %2286 = vmatprep.subr.mxu0 0.0
        %2287 = vmatpush1.msra.mxu0 0.0
        %2288 = vmatprep.subr.mxu0 0.0
        %2289 = vmatpush1.msra.mxu0 0.0
        %2290 = vmatprep.subr.mxu0 0.0
        %2291 = vmatpush1.msra.mxu0 0.0
        %2292 = vmatprep.subr.mxu0 0.0
        %2293 = vmatpush1.msra.mxu0 0.0
        %2294 = vmatprep.subr.mxu0 0.0
        %2295 = vmatpush1.msra.mxu0 0.0
        %2296 = vmatprep.mubr.f32.mxu0 %v2230
        %2297 = vmatmul.mubr.f32.gmra.mrb[0].mxu0 %v2203
        %v2298 = vpop.f32.mrb[0].mxu0
        %v2299 = vadd.f32 0.0, %v2298
        %v2300 = vpop.f32.mrb[0].mxu0
        %2301 = vdwg.mxu0
        %v2302 = vadd.f32 %v2104, %v2299
        %v2303 = vld [vmem:[%s542] sm:$0xff]
        %v2304 = vld [vmem:[%s542 + $0x8] sm:$0xff]
        %v2305 = vunpack.c.l.bf16 %v2303
        %v2306 = vunpack.c.h.bf16 %v2303
        %v2307 = vunpack.c.l.bf16 %v2304
        %v2308 = vunpack.c.h.bf16 %v2304
        %v2309 = vld [vmem:[%s9 + $0x6] sm:$0x3]
        %v2311 = vlaneseq
        %v2312 = vshrl.u32 %v2311, 7
        %v2313 = vsub.s32 0, %v2312
        %v2314 = vrot.slane %v2309, %v2313
        %v2315 = vlaneseq
        %v2316 = vshrl.u32 %v2315, 7
        %v2317 = vsub.s32 1, %v2316
        %v2318 = vrot.slane %v2309, %v2317
        %v2321 = vmul.f32 %v2305, %v2314
        %v2322 = vmul.f32 %v2306, %v2318
        %v2323 = vmul.f32 %v2307, %v2314
        %v2324 = vmul.f32 %v2308, %v2318
        %v2325 = vsel %vm1733, %v2322, 0.0
        %v2326 = vadd.f32 %v2321, %v2325
        %2327 = vadd.xlane.f32.xlu0 %v2326
        %v2328 = vpop.xlane.xlu0 %2327
        %v2329 = vsel %vm1733, %v2324, 0.0
        %v2330 = vadd.f32 %v2323, %v2329
        %2331 = vadd.xlane.f32.xlu0 %v2330
        %v2332 = vpop.xlane.xlu0 %2331
        %v2333 = vadd.f32 %v2328, %v1172
        %v2334 = vadd.f32 %v2332, %v1172
        %vm2335 = vcmask 48168
        %v2336 = vsel %vm2335, %v2333, -inf
        %v2337 = vsel %vm2335, %v2334, -inf
        %v2338 = vmax.f32 %v2336, %v2337
        %v2339 = vrot.slane %v2338, 4
        %v2340 = vmax.f32 %v2338, %v2339
        %v2341 = vrot.slane %v2340, 2
        %v2342 = vmax.f32 %v2340, %v2341
        %v2343 = vrot.slane %v2342, 1
        %v2344 = vmax.f32 %v2342, %v2343
        %v2345 = vsub.f32 %v2333, %v2344
        %v2346 = vsub.f32 %v2334, %v2344
        %v2347 = vmul.f32 %v2345, 1.442695
        %v2348 = vpow.pop %v2347
        %v2349 = vmul.f32 %v2346, 1.442695
        %v2350 = vpow.pop %v2349
        %v2351 = vsel %vm2335, %v2348, 0.0
        %v2352 = vsel %vm2335, %v2350, 0.0
        %v2353 = vadd.f32 %v2351, %v2352
        %v2354 = vrot.slane %v2353, 4
        %v2355 = vadd.f32 %v2353, %v2354
        %v2356 = vrot.slane %v2355, 2
        %v2357 = vadd.f32 %v2355, %v2356
        %v2358 = vrot.slane %v2357, 1
        %v2359 = vadd.f32 %v2357, %v2358
        %2361 = vset.pattern.permute.xlu0 5
        %2362 = vperm.xlu0 %2361, %v2348
        %v2363 = vpop.permute.xlu0 %2362
        %2366 = vset.pattern.permute.xlu0 5
        %2367 = vperm.xlu0 %2366, %v2350
        %v2368 = vpop.permute.xlu0 %2367
        %v2370 = vmul.f32 %v2363, %v2305
        %v2371 = vmul.f32 %v2363, %v2306
        %v2372 = vmul.f32 %v2368, %v2307
        %v2373 = vmul.f32 %v2368, %v2308
        %v2374 = vadd.f32 %v2370, %v2372
        %v2375 = vrot.slane %v2374, 4
        %v2376 = vadd.f32 %v2374, %v2375
        %v2377 = vrot.slane %v2376, 2
        %v2378 = vadd.f32 %v2376, %v2377
        %v2379 = vrot.slane %v2378, 1
        %v2380 = vadd.f32 %v2378, %v2379
        %v2381 = vsel %vm1733, %v2371, 0.0
        %v2382 = vsel %vm1733, %v2373, 0.0
        %v2383 = vadd.f32 %v2381, %v2382
        %v2384 = vrot.slane %v2383, 4
        %v2385 = vadd.f32 %v2383, %v2384
        %v2386 = vrot.slane %v2385, 2
        %v2387 = vadd.f32 %v2385, %v2386
        %v2388 = vrot.slane %v2387, 1
        %v2389 = vadd.f32 %v2387, %v2388
        %v2390 = vrcp.pop %v2359
        %2392 = vset.pattern.permute.xlu0 5
        %2393 = vperm.xlu0 %2392, %v2390
        %v2394 = vpop.permute.xlu0 %2393
        %v2396 = vmul.f32 %v2380, %v2394
        %v2397 = vmul.f32 %v2389, %v2394
        %v2398 = vld [vmem:[%s10 + $0x300] sm:$0xff]
        %v2399 = vld [vmem:[%s10 + $0x308] sm:$0xff]
        %v2400 = vld [vmem:[%s10 + $0x310] sm:$0xff]
        %v2401 = vld [vmem:[%s10 + $0x318] sm:$0xff]
        %v2402 = vld [vmem:[%s10 + $0x320] sm:$0xff]
        %v2403 = vld [vmem:[%s10 + $0x328] sm:$0xff]
        %v2404 = vld [vmem:[%s10 + $0x330] sm:$0xff]
        %v2405 = vld [vmem:[%s10 + $0x338] sm:$0xff]
        %v2406 = vld [vmem:[%s10 + $0x340] sm:$0xff]
        %v2407 = vld [vmem:[%s10 + $0x348] sm:$0xff]
        %v2408 = vld [vmem:[%s10 + $0x350] sm:$0xff]
        %v2409 = vld [vmem:[%s10 + $0x358] sm:$0xff]
        %v2410 = vld [vmem:[%s10 + $0x360] sm:$0xff]
        %v2411 = vld [vmem:[%s10 + $0x368] sm:$0xff]
        %v2412 = vld [vmem:[%s10 + $0x370] sm:$0xff]
        %v2413 = vld [vmem:[%s10 + $0x378] sm:$0xff]
        %v2414 = vld [vmem:[%s10 + $0x380] sm:$0xff]
        %v2415 = vld [vmem:[%s10 + $0x388] sm:$0xff]
        %v2416 = vld [vmem:[%s10 + $0x390] sm:$0xff]
        %v2417 = vld [vmem:[%s10 + $0x398] sm:$0xff]
        %v2418 = vld [vmem:[%s10 + $0x3a0] sm:$0xff]
        %v2419 = vld [vmem:[%s10 + $0x3a8] sm:$0xff]
        %v2420 = vld [vmem:[%s10 + $0x3b0] sm:$0xff]
        %v2421 = vld [vmem:[%s10 + $0x3b8] sm:$0xff]
        %v2423 = vsel %vm1733, %v2397, 0
        %2425 = vmatprep.subr.mxu0 0.0
        %2426 = vmatpush1.msra.mxu0 %v2398
        %2427 = vmatprep.subr.mxu0 0.0
        %2428 = vmatpush1.msra.mxu0 %v2399
        %2429 = vmatprep.subr.mxu0 0.0
        %2430 = vmatpush1.msra.mxu0 %v2400
        %2431 = vmatprep.subr.mxu0 0.0
        %2432 = vmatpush1.msra.mxu0 %v2401
        %2433 = vmatprep.subr.mxu0 0.0
        %2434 = vmatpush1.msra.mxu0 %v2402
        %2435 = vmatprep.subr.mxu0 0.0
        %2436 = vmatpush1.msra.mxu0 %v2403
        %2437 = vmatprep.subr.mxu0 0.0
        %2438 = vmatpush1.msra.mxu0 %v2404
        %2439 = vmatprep.subr.mxu0 0.0
        %2440 = vmatpush1.msra.mxu0 %v2405
        %2441 = vmatprep.subr.mxu0 0.0
        %2442 = vmatpush1.msra.mxu0 %v2406
        %2443 = vmatprep.subr.mxu0 0.0
        %2444 = vmatpush1.msra.mxu0 %v2407
        %2445 = vmatprep.subr.mxu0 0.0
        %2446 = vmatpush1.msra.mxu0 %v2408
        %2447 = vmatprep.subr.mxu0 0.0
        %2448 = vmatpush1.msra.mxu0 %v2409
        %2449 = vmatprep.subr.mxu0 0.0
        %2450 = vmatpush1.msra.mxu0 %v2410
        %2451 = vmatprep.subr.mxu0 0.0
        %2452 = vmatpush1.msra.mxu0 %v2411
        %2453 = vmatprep.subr.mxu0 0.0
        %2454 = vmatpush1.msra.mxu0 %v2412
        %2455 = vmatprep.subr.mxu0 0.0
        %2456 = vmatpush1.msra.mxu0 %v2413
        %2457 = vmatprep.subr.mxu0 0.0
        %2458 = vmatpush1.msra.mxu0 %v2414
        %2459 = vmatprep.subr.mxu0 0.0
        %2460 = vmatpush1.msra.mxu0 %v2415
        %2461 = vmatprep.subr.mxu0 0.0
        %2462 = vmatpush1.msra.mxu0 %v2416
        %2463 = vmatprep.subr.mxu0 0.0
        %2464 = vmatpush1.msra.mxu0 %v2417
        %2465 = vmatprep.subr.mxu0 0.0
        %2466 = vmatpush1.msra.mxu0 %v2418
        %2467 = vmatprep.subr.mxu0 0.0
        %2468 = vmatpush1.msra.mxu0 %v2419
        %2469 = vmatprep.subr.mxu0 0.0
        %2470 = vmatpush1.msra.mxu0 %v2420
        %2471 = vmatprep.subr.mxu0 0.0
        %2472 = vmatpush1.msra.mxu0 %v2421
        %2473 = vmatprep.subr.mxu0 0.0
        %2474 = vmatpush1.msra.mxu0 0.0
        %2475 = vmatprep.subr.mxu0 0.0
        %2476 = vmatpush1.msra.mxu0 0.0
        %2477 = vmatprep.subr.mxu0 0.0
        %2478 = vmatpush1.msra.mxu0 0.0
        %2479 = vmatprep.subr.mxu0 0.0
        %2480 = vmatpush1.msra.mxu0 0.0
        %2481 = vmatprep.subr.mxu0 0.0
        %2482 = vmatpush1.msra.mxu0 0.0
        %2483 = vmatprep.subr.mxu0 0.0
        %2484 = vmatpush1.msra.mxu0 0.0
        %2485 = vmatprep.subr.mxu0 0.0
        %2486 = vmatpush1.msra.mxu0 0.0
        %2487 = vmatprep.subr.mxu0 0.0
        %2488 = vmatpush1.msra.mxu0 0.0
        %2489 = vmatprep.mubr.f32.mxu0 %v2423
        %2490 = vmatmul.mubr.f32.gmra.mrb[0].mxu0 %v2396
        %v2491 = vpop.f32.mrb[0].mxu0
        %v2492 = vadd.f32 0.0, %v2491
        %v2493 = vpop.f32.mrb[0].mxu0
        %2494 = vdwg.mxu0
        %v2495 = vadd.f32 %v2302, %v2492
        %v2496 = vld [vmem:[%s547] sm:$0xff]
        %v2497 = vld [vmem:[%s547 + $0x8] sm:$0xf]
        %v2498 = vld [vmem:[%s547 + $0xc] sm:$0xff]
        %v2499 = vld [vmem:[%s547 + $0x14] sm:$0xf]
        %v2500 = vunpack.c.l.bf16 %v2496
        %v2501 = vunpack.c.h.bf16 %v2496
        %v2502 = vunpack.c.l.bf16 %v2497
        %v2503 = vunpack.c.l.bf16 %v2498
        %v2504 = vunpack.c.h.bf16 %v2498
        %v2505 = vunpack.c.l.bf16 %v2499
        %v2506 = vld [vmem:[%s9 + $0x7] sm:$0x7]
        %v2508 = vlaneseq
        %v2509 = vshrl.u32 %v2508, 7
        %v2510 = vsub.s32 0, %v2509
        %v2511 = vrot.slane %v2506, %v2510
        %v2512 = vlaneseq
        %v2513 = vshrl.u32 %v2512, 7
        %v2514 = vsub.s32 1, %v2513
        %v2515 = vrot.slane %v2506, %v2514
        %v2516 = vlaneseq
        %v2517 = vshrl.u32 %v2516, 7
        %v2518 = vsub.s32 2, %v2517
        %v2519 = vrot.slane %v2506, %v2518
        %2520 = vrot.lane.b32.xlu0 %v2511, 64
        %v2521 = vpop.permute.xlu0 %2520
        %2522 = vrot.lane.b32.xlu0 %v2515, 64
        %v2523 = vpop.permute.xlu0 %2522
        %2524 = vrot.lane.b32.xlu0 %v2519, 64
        %v2525 = vpop.permute.xlu0 %2524
        %v2526 = vsel %vm1733, %v2521, %v2523
        %v2527 = vsel %vm1733, %v2523, %v2525
        %v2531 = vmul.f32 %v2500, %v2526
        %v2532 = vmul.f32 %v2501, %v2527
        %v2533 = vmul.f32 %v2502, %v2525
        %v2534 = vmul.f32 %v2503, %v2526
        %v2535 = vmul.f32 %v2504, %v2527
        %v2536 = vmul.f32 %v2505, %v2525
        %v2537 = vadd.f32 %v2531, %v2532
        %v2538 = vsel %vm1733, %v2533, 0.0
        %v2539 = vadd.f32 %v2537, %v2538
        %2540 = vadd.xlane.f32.xlu0 %v2539
        %v2541 = vpop.xlane.xlu0 %2540
        %v2542 = vadd.f32 %v2534, %v2535
        %v2543 = vsel %vm1733, %v2536, 0.0
        %v2544 = vadd.f32 %v2542, %v2543
        %2545 = vadd.xlane.f32.xlu0 %v2544
        %v2546 = vpop.xlane.xlu0 %2545
        %v2547 = vadd.f32 %v2541, %v1172
        %v2548 = vadd.f32 %v2546, %v1172
        %vm2549 = vcmask 56368
        %v2550 = vsel %vm2549, %v2547, -inf
        %v2551 = vsel %vm2549, %v2548, -inf
        %v2552 = vmax.f32 %v2550, %v2551
        %v2553 = vrot.slane %v2552, 4
        %v2554 = vmax.f32 %v2552, %v2553
        %v2555 = vrot.slane %v2554, 2
        %v2556 = vmax.f32 %v2554, %v2555
        %v2557 = vrot.slane %v2556, 1
        %v2558 = vmax.f32 %v2556, %v2557
        %v2559 = vsub.f32 %v2547, %v2558
        %v2560 = vsub.f32 %v2548, %v2558
        %v2561 = vmul.f32 %v2559, 1.442695
        %v2562 = vpow.pop %v2561
        %v2563 = vmul.f32 %v2560, 1.442695
        %v2564 = vpow.pop %v2563
        %v2565 = vsel %vm2549, %v2562, 0.0
        %v2566 = vsel %vm2549, %v2564, 0.0
        %v2567 = vadd.f32 %v2565, %v2566
        %v2568 = vrot.slane %v2567, 4
        %v2569 = vadd.f32 %v2567, %v2568
        %v2570 = vrot.slane %v2569, 2
        %v2571 = vadd.f32 %v2569, %v2570
        %v2572 = vrot.slane %v2571, 1
        %v2573 = vadd.f32 %v2571, %v2572
        %2575 = vset.pattern.permute.xlu0 6
        %2576 = vperm.xlu0 %2575, %v2562
        %v2577 = vpop.permute.xlu0 %2576
        %2580 = vset.pattern.permute.xlu0 6
        %2581 = vperm.xlu0 %2580, %v2564
        %v2582 = vpop.permute.xlu0 %2581
        %v2584 = vmul.f32 %v2577, %v2500
        %v2585 = vmul.f32 %v2577, %v2501
        %v2586 = vmul.f32 %v2577, %v2502
        %v2587 = vmul.f32 %v2582, %v2503
        %v2588 = vmul.f32 %v2582, %v2504
        %v2589 = vmul.f32 %v2582, %v2505
        %v2590 = vadd.f32 %v2584, %v2587
        %v2591 = vrot.slane %v2590, 4
        %v2592 = vadd.f32 %v2590, %v2591
        %v2593 = vrot.slane %v2592, 2
        %v2594 = vadd.f32 %v2592, %v2593
        %v2595 = vrot.slane %v2594, 1
        %v2596 = vadd.f32 %v2594, %v2595
        %v2597 = vadd.f32 %v2585, %v2588
        %v2598 = vrot.slane %v2597, 4
        %v2599 = vadd.f32 %v2597, %v2598
        %v2600 = vrot.slane %v2599, 2
        %v2601 = vadd.f32 %v2599, %v2600
        %v2602 = vrot.slane %v2601, 1
        %v2603 = vadd.f32 %v2601, %v2602
        %v2604 = vsel %vm1733, %v2586, 0.0
        %v2605 = vsel %vm1733, %v2589, 0.0
        %v2606 = vadd.f32 %v2604, %v2605
        %v2607 = vrot.slane %v2606, 4
        %v2608 = vadd.f32 %v2606, %v2607
        %v2609 = vrot.slane %v2608, 2
        %v2610 = vadd.f32 %v2608, %v2609
        %v2611 = vrot.slane %v2610, 1
        %v2612 = vadd.f32 %v2610, %v2611
        %v2613 = vrcp.pop %v2573
        %2615 = vset.pattern.permute.xlu0 6
        %2616 = vperm.xlu0 %2615, %v2613
        %v2617 = vpop.permute.xlu0 %2616
        %v2619 = vmul.f32 %v2596, %v2617
        %v2620 = vmul.f32 %v2603, %v2617
        %v2621 = vmul.f32 %v2612, %v2617
        %v2622 = vld [vmem:[%s10 + $0x3c0] sm:$0xff]
        %v2623 = vld [vmem:[%s10 + $0x3c8] sm:$0xff]
        %v2624 = vld [vmem:[%s10 + $0x3d0] sm:$0xff]
        %v2625 = vld [vmem:[%s10 + $0x3d8] sm:$0xff]
        %v2626 = vld [vmem:[%s10 + $0x3e0] sm:$0xff]
        %v2627 = vld [vmem:[%s10 + $0x3e8] sm:$0xff]
        %v2628 = vld [vmem:[%s10 + $0x3f0] sm:$0xff]
        %v2629 = vld [vmem:[%s10 + $0x3f8] sm:$0xff]
        %v2630 = vld [vmem:[%s10 + $0x400] sm:$0xff]
        %v2631 = vld [vmem:[%s10 + $0x408] sm:$0xff]
        %v2632 = vld [vmem:[%s10 + $0x410] sm:$0xff]
        %v2633 = vld [vmem:[%s10 + $0x418] sm:$0xff]
        %v2634 = vld [vmem:[%s10 + $0x420] sm:$0xff]
        %v2635 = vld [vmem:[%s10 + $0x428] sm:$0xff]
        %v2636 = vld [vmem:[%s10 + $0x430] sm:$0xff]
        %v2637 = vld [vmem:[%s10 + $0x438] sm:$0xff]
        %v2638 = vld [vmem:[%s10 + $0x440] sm:$0xff]
        %v2639 = vld [vmem:[%s10 + $0x448] sm:$0xff]
        %v2640 = vld [vmem:[%s10 + $0x450] sm:$0xff]
        %v2641 = vld [vmem:[%s10 + $0x458] sm:$0xff]
        %v2642 = vld [vmem:[%s10 + $0x460] sm:$0xff]
        %v2643 = vld [vmem:[%s10 + $0x468] sm:$0xff]
        %v2644 = vld [vmem:[%s10 + $0x470] sm:$0xff]
        %v2645 = vld [vmem:[%s10 + $0x478] sm:$0xff]
        %v2646 = vld [vmem:[%s10 + $0x480] sm:$0xff]
        %v2647 = vld [vmem:[%s10 + $0x488] sm:$0xff]
        %v2648 = vld [vmem:[%s10 + $0x490] sm:$0xff]
        %v2649 = vld [vmem:[%s10 + $0x498] sm:$0xff]
        %v2650 = vld [vmem:[%s10 + $0x4a0] sm:$0xff]
        %v2651 = vld [vmem:[%s10 + $0x4a8] sm:$0xff]
        %v2652 = vld [vmem:[%s10 + $0x4b0] sm:$0xff]
        %v2653 = vld [vmem:[%s10 + $0x4b8] sm:$0xff]
        %v2654 = vld [vmem:[%s10 + $0x4c0] sm:$0xff]
        %v2655 = vld [vmem:[%s10 + $0x4c8] sm:$0xff]
        %v2656 = vld [vmem:[%s10 + $0x4d0] sm:$0xff]
        %v2657 = vld [vmem:[%s10 + $0x4d8] sm:$0xff]
        %v2658 = vld [vmem:[%s10 + $0x4e0] sm:$0xff]
        %v2659 = vld [vmem:[%s10 + $0x4e8] sm:$0xff]
        %v2660 = vld [vmem:[%s10 + $0x4f0] sm:$0xff]
        %v2661 = vld [vmem:[%s10 + $0x4f8] sm:$0xff]
        %v2663 = vsel %vm1733, %v2621, 0
        %2665 = vmatprep.subr.mxu0 0.0
        %2666 = vmatpush1.msra.mxu0 %v2622
        %2667 = vmatprep.subr.mxu0 0.0
        %2668 = vmatpush1.msra.mxu0 %v2623
        %2669 = vmatprep.subr.mxu0 0.0
        %2670 = vmatpush1.msra.mxu0 %v2624
        %2671 = vmatprep.subr.mxu0 0.0
        %2672 = vmatpush1.msra.mxu0 %v2625
        %2673 = vmatprep.subr.mxu0 0.0
        %2674 = vmatpush1.msra.mxu0 %v2626
        %2675 = vmatprep.subr.mxu0 0.0
        %2676 = vmatpush1.msra.mxu0 %v2627
        %2677 = vmatprep.subr.mxu0 0.0
        %2678 = vmatpush1.msra.mxu0 %v2628
        %2679 = vmatprep.subr.mxu0 0.0
        %2680 = vmatpush1.msra.mxu0 %v2629
        %2681 = vmatprep.subr.mxu0 0.0
        %2682 = vmatpush1.msra.mxu0 %v2630
        %2683 = vmatprep.subr.mxu0 0.0
        %2684 = vmatpush1.msra.mxu0 %v2631
        %2685 = vmatprep.subr.mxu0 0.0
        %2686 = vmatpush1.msra.mxu0 %v2632
        %2687 = vmatprep.subr.mxu0 0.0
        %2688 = vmatpush1.msra.mxu0 %v2633
        %2689 = vmatprep.subr.mxu0 0.0
        %2690 = vmatpush1.msra.mxu0 %v2634
        %2691 = vmatprep.subr.mxu0 0.0
        %2692 = vmatpush1.msra.mxu0 %v2635
        %2693 = vmatprep.subr.mxu0 0.0
        %2694 = vmatpush1.msra.mxu0 %v2636
        %2695 = vmatprep.subr.mxu0 0.0
        %2696 = vmatpush1.msra.mxu0 %v2637
        %2697 = vmatprep.subr.mxu0 0.0
        %2698 = vmatpush1.msra.mxu0 %v2638
        %2699 = vmatprep.subr.mxu0 0.0
        %2700 = vmatpush1.msra.mxu0 %v2639
        %2701 = vmatprep.subr.mxu0 0.0
        %2702 = vmatpush1.msra.mxu0 %v2640
        %2703 = vmatprep.subr.mxu0 0.0
        %2704 = vmatpush1.msra.mxu0 %v2641
        %2705 = vmatprep.subr.mxu0 0.0
        %2706 = vmatpush1.msra.mxu0 %v2642
        %2707 = vmatprep.subr.mxu0 0.0
        %2708 = vmatpush1.msra.mxu0 %v2643
        %2709 = vmatprep.subr.mxu0 0.0
        %2710 = vmatpush1.msra.mxu0 %v2644
        %2711 = vmatprep.subr.mxu0 0.0
        %2712 = vmatpush1.msra.mxu0 %v2645
        %2713 = vmatprep.subr.mxu0 0.0
        %2714 = vmatpush1.msra.mxu0 %v2646
        %2715 = vmatprep.subr.mxu0 0.0
        %2716 = vmatpush1.msra.mxu0 %v2647
        %2717 = vmatprep.subr.mxu0 0.0
        %2718 = vmatpush1.msra.mxu0 %v2648
        %2719 = vmatprep.subr.mxu0 0.0
        %2720 = vmatpush1.msra.mxu0 %v2649
        %2721 = vmatprep.subr.mxu0 0.0
        %2722 = vmatpush1.msra.mxu0 %v2650
        %2723 = vmatprep.subr.mxu0 0.0
        %2724 = vmatpush1.msra.mxu0 %v2651
        %2725 = vmatprep.subr.mxu0 0.0
        %2726 = vmatpush1.msra.mxu0 %v2652
        %2727 = vmatprep.subr.mxu0 0.0
        %2728 = vmatpush1.msra.mxu0 %v2653
        %2729 = vmatprep.mubr.f32.mxu0 %v2620
        %2730 = vmatmul.mubr.f32.gmra.mrb[0].mxu0 %v2619
        %v2731 = vpop.f32.mrb[0].mxu0
        %v2732 = vadd.f32 0.0, %v2731
        %v2733 = vpop.f32.mrb[0].mxu0
        %2734 = vdwg.mxu0
        %2735 = vmatprep.subr.mxu0 0.0
        %2736 = vmatpush1.msra.mxu0 %v2654
        %2737 = vmatprep.subr.mxu0 0.0
        %2738 = vmatpush1.msra.mxu0 %v2655
        %2739 = vmatprep.subr.mxu0 0.0
        %2740 = vmatpush1.msra.mxu0 %v2656
        %2741 = vmatprep.subr.mxu0 0.0
        %2742 = vmatpush1.msra.mxu0 %v2657
        %2743 = vmatprep.subr.mxu0 0.0
        %2744 = vmatpush1.msra.mxu0 %v2658
        %2745 = vmatprep.subr.mxu0 0.0
        %2746 = vmatpush1.msra.mxu0 %v2659
        %2747 = vmatprep.subr.mxu0 0.0
        %2748 = vmatpush1.msra.mxu0 %v2660
        %2749 = vmatprep.subr.mxu0 0.0
        %2750 = vmatpush1.msra.mxu0 %v2661
        %2751 = vmatprep.subr.mxu0 0.0
        %2752 = vmatpush1.msra.mxu0 0.0
        %2753 = vmatprep.subr.mxu0 0.0
        %2754 = vmatpush1.msra.mxu0 0.0
        %2755 = vmatprep.subr.mxu0 0.0
        %2756 = vmatpush1.msra.mxu0 0.0
        %2757 = vmatprep.subr.mxu0 0.0
        %2758 = vmatpush1.msra.mxu0 0.0
        %2759 = vmatprep.subr.mxu0 0.0
        %2760 = vmatpush1.msra.mxu0 0.0
        %2761 = vmatprep.subr.mxu0 0.0
        %2762 = vmatpush1.msra.mxu0 0.0
        %2763 = vmatprep.subr.mxu0 0.0
        %2764 = vmatpush1.msra.mxu0 0.0
        %2765 = vmatprep.subr.mxu0 0.0
        %2766 = vmatpush1.msra.mxu0 0.0
        %2767 = vmatprep.subr.mxu0 0.0
        %2768 = vmatpush1.msra.mxu0 0.0
        %2769 = vmatprep.subr.mxu0 0.0
        %2770 = vmatpush1.msra.mxu0 0.0
        %2771 = vmatprep.subr.mxu0 0.0
        %2772 = vmatpush1.msra.mxu0 0.0
        %2773 = vmatprep.subr.mxu0 0.0
        %2774 = vmatpush1.msra.mxu0 0.0
        %2775 = vmatprep.subr.mxu0 0.0
        %2776 = vmatpush1.msra.mxu0 0.0
        %2777 = vmatprep.subr.mxu0 0.0
        %2778 = vmatpush1.msra.mxu0 0.0
        %2779 = vmatprep.subr.mxu0 0.0
        %2780 = vmatpush1.msra.mxu0 0.0
        %2781 = vmatprep.subr.mxu0 0.0
        %2782 = vmatpush1.msra.mxu0 0.0
        %2783 = vmatprep.subr.mxu0 0.0
        %2784 = vmatpush1.msra.mxu0 0.0
        %2785 = vmatprep.subr.mxu0 0.0
        %2786 = vmatpush1.msra.mxu0 0.0
        %2787 = vmatprep.subr.mxu0 0.0
        %2788 = vmatpush1.msra.mxu0 0.0
        %2789 = vmatprep.subr.mxu0 0.0
        %2790 = vmatpush1.msra.mxu0 0.0
        %2791 = vmatprep.subr.mxu0 0.0
        %2792 = vmatpush1.msra.mxu0 0.0
        %2793 = vmatprep.subr.mxu0 0.0
        %2794 = vmatpush1.msra.mxu0 0.0
        %2795 = vmatprep.subr.mxu0 0.0
        %2796 = vmatpush1.msra.mxu0 0.0
        %2797 = vmatprep.subr.mxu0 0.0
        %2798 = vmatpush1.msra.mxu0 0.0
        %2799 = vmatprep.mubr.f32.mxu0 0.0
        %2800 = vmatmul.mubr.f32.gmra.mrb[0].mxu0 %v2663
        %v2801 = vpop.f32.mrb[0].mxu0
        %v2802 = vadd.f32 %v2732, %v2801
        %v2803 = vpop.f32.mrb[0].mxu0
        %2804 = vdwg.mxu0
        %v2805 = vadd.f32 %v2495, %v2802
        %v2806 = vxor.u32 %v2805, 2147483648
        %v2807 = vmul.f32 %v2806, 1.442695
        %v2808 = vpow.pop %v2807
        %v2809 = vadd.f32 %v2808, 1.0
        %v2810 = vrcp.pop %v2809
        %v2811 = vmul.f32 1.0, %v2810
        %v2812 = vmul.f32 %v2805, %v2811
        %vm2813 = vcmask 32768
        %2814 = vst.msk [vmem:[%s508] sm:$0x1] %vm2813, %v2812
        %s2815 = sand.u32 %s326, 1
        %s2816 = scalar_lea.sflag [#allocation3], %s2815
        %s2817 = sand.u32 %s326, 1
        %s2818 = scalar_lea.vmem [#allocation2], %s2817
        // Predicated region
        $region69: #{efficientnet_b0_att_forward.1} parent=67 // pred_check
          %p2819 = pneg %p336
        $region70: #{efficientnet_b0_att_forward.1} parent=67 // pred_check_branch
          %2821 = sbr.rel (%p2819) target = $region72
        $region71: #{efficientnet_b0_att_forward.1} parent=67 // pred_region
          %s2823 = ssub.s32 16, 16
          %2824 = vsyncadd %s2816, %s2823
          %s2825 = smul.addr %s26, 16
          %s2826 = scalar_lea.hbm %s12, %s2825
          %s2828 = sshll.u32 %s2818, 4
          %s2829 = int_to_ptr.vmem [resolvable:$true] %s2828
          %2831 = dma.vmem_to_hbm [thread:$0]  %s2829, 16, %s2826, %s2816
        $region72: #{efficientnet_b0_att_forward.1} parent=67 // pred_fallthru
          _
      $region68: #{efficientnet_b0_att_forward.1} parent=5 // pred_fallthru
        _
      %p2832 = scmp.le.s32.totalorder 2, %s21
      // Predicated region
      $region73: #{efficientnet_b0_att_forward.1} parent=5 // pred_check
        %p2833 = pneg %p2832
      $region74: #{efficientnet_b0_att_forward.1} parent=5 // pred_check_branch
        %2835 = sbr.rel (%p2833) target = $region76
      $region75: #{efficientnet_b0_att_forward.1} parent=5 // pred_region
        %s2836 = ssub.s32 %s21, 2
        // Predicated region
        $region77: #{efficientnet_b0_att_forward.1} parent=75 // pred_check
          %p2837 = pneg %p342
        $region78: #{efficientnet_b0_att_forward.1} parent=75 // pred_check_branch
          %2839 = sbr.rel (%p2837) target = $region80
        $region79: #{efficientnet_b0_att_forward.1} parent=75 // pred_region
          %s2840 = sand.u32 %s327, 1
          %s2841 = scalar_lea.sflag [#allocation3], %s2840
          %s2842 = sand.u32 %s327, 1
          %s2843 = scalar_lea.vmem [#allocation2], %s2842
          %2844 = dma.done %s2841, 16
        $region80: #{efficientnet_b0_att_forward.1} parent=75 // pred_fallthru
          _
      $region76: #{efficientnet_b0_att_forward.1} parent=5 // pred_fallthru
        _
    $region6: #{efficientnet_b0_att_forward.1} parent=1 // loop_footer
      %s25 = sadd.s32 1, %s21
    $region7: #{efficientnet_b0_att_forward.1} parent=1 // loop_footer_branch
      %20 = sbr.rel target = $region3
    $region8: #{efficientnet_b0_att_forward.1} parent=1 // loop_exit
      _
    %2845 = vsyncpa [#allocation3], 1
    %s2846 = scalar_lea.sflag [#allocation3], 1
    %2847 = vsyncpa %s2846, 1

</llo_original>
